<compile_context>
chip_gen: v5e
topology: v5e:2x2
jax: 0.10.0
libtpu: 0.0.40
codegen_flags: <defaults>
</compile_context>

<pallas_src>
import jax
import jax.numpy as jnp
from jax.experimental import pallas as pl
from jax.experimental.pallas import tpu as pltpu

INPUT_SIZE = 100
COND_SIZE = 10
NUM_CLASSES = 784          # -> (B, 1, 28, 28)
PADDED_IN = 128            # 110 -> 128 (aligned K for first matmul)
PADDED_OUT = 896           # 784 -> 7 * 128 (lane-dense output store)
EPS = 1e-5
NEG_SLOPE = 0.2

# Packed small-parameter layout (f32, every offset/size a multiple of 128 lanes):
#   b1, g2, be2, g3, be3, g4, be4, b5(padded)
_OFF = {}
_cur = 0
for _name, _n in (("b1", 128), ("g2", 256), ("be2", 256), ("g3", 512),
                  ("be3", 512), ("g4", 1024), ("be4", 1024), ("b5", PADDED_OUT)):
    _OFF[_name] = (_cur, _cur + _n)
    _cur += _n
P_TOTAL = _cur             # 4608 = 36 * 128


def _leaky(h):
    # valid for 0 < slope < 1
    return jnp.maximum(h, NEG_SLOPE * h)


def _batchnorm(h, gamma, beta):
    # PyTorch BatchNorm1d (training): biased variance over the batch axis.
    # One pass (sum, sum-of-squares); affine folded into a single FMA.
    inv_n = 1.0 / h.shape[0]
    mean = jnp.sum(h, axis=0, keepdims=True) * inv_n
    meansq = jnp.sum(h * h, axis=0, keepdims=True) * inv_n
    var = meansq - mean * mean
    scale = gamma * jax.lax.rsqrt(var + EPS)
    shift = beta - mean * scale
    return h * scale + shift


def _dot(a_f32, w_bf16):
    # bf16 x bf16 MXU matmul with f32 accumulation.
    return jnp.dot(a_f32.astype(jnp.bfloat16), w_bf16,
                   preferred_element_type=jnp.float32)


def generator_kernel(v_ref, w1_ref, w2_ref, w3_ref, w4_hbm, w5_hbm, p_ref,
                     out_ref, w4_vmem, w5_vmem, sem):
    # Kick off the two dominant weight DMAs immediately so they run under the
    # layer-1..3 compute; wait only right before each weight is consumed.
    cp4 = pltpu.make_async_copy(w4_hbm, w4_vmem, sem.at[0])
    cp5 = pltpu.make_async_copy(w5_hbm, w5_vmem, sem.at[1])
    cp4.start()
    cp5.start()

    def p(name):
        lo, hi = _OFF[name]
        return p_ref[:, lo:hi]

    v = v_ref[...]  # (B, 128) f32, zero-padded beyond col 110

    # Linear(110 -> 128) + LeakyReLU(0.2)   (K padded to 128, zero rows in w1)
    h = _leaky(_dot(v, w1_ref[...]) + p("b1"))

    # Linear(128 -> 256) + BN + LeakyReLU   (bias dropped: cancels in BN)
    h = _leaky(_batchnorm(_dot(h, w2_ref[...]), p("g2"), p("be2")))

    # Linear(256 -> 512) + BN + LeakyReLU
    h = _leaky(_batchnorm(_dot(h, w3_ref[...]), p("g3"), p("be3")))

    # Linear(512 -> 1024) + BN + LeakyReLU  (manually prefetched weight)
    cp4.wait()
    h = _leaky(_batchnorm(_dot(h, w4_vmem[...]), p("g4"), p("be4")))

    # Linear(1024 -> 784 padded to 896) + Tanh; padded cols are exactly tanh(0)=0.
    cp5.wait()
    out_ref[...] = jnp.tanh(_dot(h, w5_vmem[...]) + p("b5"))


def init_params(key):
    """Deterministic params mimicking PyTorch default Linear init (U[-k,k],
    k = 1/sqrt(fan_in)).  Weights stored as (in, out) in bf16; small params
    packed into one f32 (1, P_TOTAL) array.  w1 row-padded 110->128, w5/b5
    col-padded 784->896 with zeros.  b2/b3/b4 omitted (cancel in BatchNorm)."""
    dims = [(INPUT_SIZE + COND_SIZE, 128), (128, 256), (256, 512),
            (512, 1024), (1024, NUM_CLASSES)]
    ws, bs = [], []
    for idx, (fin, fout) in enumerate(dims):
        key, kw, kb = jax.random.split(key, 3)
        k = 1.0 / jnp.sqrt(jnp.float32(fin))
        w = jax.random.uniform(kw, (fin, fout), jnp.float32, -k, k)
        b = jax.random.uniform(kb, (1, fout), jnp.float32, -k, k)
        if idx == 0:                        # pad K: 110 -> 128 (zero rows)
            w = jnp.pad(w, ((0, PADDED_IN - fin), (0, 0)))
        if idx == len(dims) - 1:            # pad N: 784 -> 896 (zero cols)
            w = jnp.pad(w, ((0, 0), (0, PADDED_OUT - fout)))
            b = jnp.pad(b, ((0, 0), (0, PADDED_OUT - fout)))
        ws.append(w.astype(jnp.bfloat16))
        bs.append(b)

    packed = jnp.concatenate(
        [bs[0],                                                        # b1
         jnp.ones((1, 256), jnp.float32), jnp.zeros((1, 256), jnp.float32),   # g2, be2
         jnp.ones((1, 512), jnp.float32), jnp.zeros((1, 512), jnp.float32),   # g3, be3
         jnp.ones((1, 1024), jnp.float32), jnp.zeros((1, 1024), jnp.float32), # g4, be4
         bs[4]],                                                       # b5 (padded)
        axis=1)
    assert packed.shape == (1, P_TOTAL)
    return ws[0], ws[1], ws[2], ws[3], ws[4], packed


def _pad_and_concat(x, c):
    B = x.shape[0]
    x2 = x.reshape(B, -1).astype(jnp.float32)
    c2 = c.reshape(B, -1).astype(jnp.float32)
    pad = PADDED_IN - (x2.shape[1] + c2.shape[1])
    return jnp.concatenate([x2, c2, jnp.zeros((B, pad), jnp.float32)], axis=1)


@jax.jit
def generator_forward(x, c, w1, w2, w3, w4, w5, packed):
    B = x.shape[0]
    v = _pad_and_concat(x, c)  # (B, 128)

    in_specs = [
        pl.BlockSpec((B, PADDED_IN), lambda i: (0, 0)),     # v
        pl.BlockSpec(w1.shape, lambda i: (0, 0)),           # w1 (32 KiB, auto)
        pl.BlockSpec(w2.shape, lambda i: (0, 0)),           # w2 (64 KiB, auto)
        pl.BlockSpec(w3.shape, lambda i: (0, 0)),           # w3 (256 KiB, auto)
        pl.BlockSpec(memory_space=pl.ANY),                  # w4: manual overlapped DMA
        pl.BlockSpec(memory_space=pl.ANY),                  # w5: manual overlapped DMA
        pl.BlockSpec((1, P_TOTAL), lambda i: (0, 0)),       # packed small params
    ]

    out = pl.pallas_call(
        generator_kernel,
        out_shape=jax.ShapeDtypeStruct((B, PADDED_OUT), jnp.float32),
        grid=(1,),
        in_specs=in_specs,
        out_specs=pl.BlockSpec((B, PADDED_OUT), lambda i: (0, 0)),
        scratch_shapes=[
            pltpu.VMEM((512, 1024), jnp.bfloat16),          # w4 landing buffer
            pltpu.VMEM((1024, PADDED_OUT), jnp.bfloat16),   # w5 landing buffer
            pltpu.SemaphoreType.DMA((2,)),
        ],
        compiler_params=pltpu.CompilerParams(
            dimension_semantics=("arbitrary",),
            vmem_limit_bytes=16 << 20,   # real footprint < 4 MiB; safe on v7x (64 MiB)
        ),
    )(v, w1, w2, w3, w4, w5, packed)

    return out[:, :NUM_CLASSES].reshape(B, 1, 28, 28)


def reference_forward(x, c, w1, w2, w3, w4, w5, packed):
    """Pure-JAX mirror of the kernel math (same bf16 weights / f32 accumulation,
    same dropped pre-BN biases)."""
    B = x.shape[0]
    v = _pad_and_concat(x, c)

    def p(name):
        lo, hi = _OFF[name]
        return packed[:, lo:hi]

    h = _leaky(_dot(v, w1) + p("b1"))
    h = _leaky(_batchnorm(_dot(h, w2), p("g2"), p("be2")))
    h = _leaky(_batchnorm(_dot(h, w3), p("g3"), p("be3")))
    h = _leaky(_batchnorm(_dot(h, w4), p("g4"), p("be4")))
    y = jnp.tanh(_dot(h, w5) + p("b5"))
    return y[:, :NUM_CLASSES].reshape(B, 1, 28, 28)


if __name__ == "__main__":
    key = jax.random.PRNGKey(0)
    kx, kc, kp = jax.random.split(key, 3)

    B = 8
    x = jax.random.normal(kx, (B, INPUT_SIZE), jnp.float32)                    # noise z
    c = jax.nn.one_hot(jax.random.randint(kc, (B,), 0, COND_SIZE), COND_SIZE)  # one-hot cond

    params = init_params(kp)

    y = generator_forward(x, c, *params)
    y = jax.block_until_ready(y)

    y_ref = reference_forward(x, c, *params)
    assert y.shape == (B, 1, 28, 28)
    assert jnp.allclose(y, y_ref, atol=1e-2, rtol=1e-2), float(jnp.max(jnp.abs(y - y_ref)))

    print("KERNEL_OK")
</pallas_src>

<mosaic_0001>
module attributes {stable_mosaic.version = 11 : i64} {
  func.func @generator_kernel(%arg0: i32, %arg1: memref<8x128xf32, #tpu.memory_space<vmem>>, %arg2: memref<128x128xbf16, #tpu.memory_space<vmem>>, %arg3: memref<128x256xbf16, #tpu.memory_space<vmem>>, %arg4: memref<256x512xbf16, #tpu.memory_space<vmem>>, %arg5: memref<512x1024xbf16, #tpu.memory_space<any>>, %arg6: memref<1024x896xbf16, #tpu.memory_space<any>>, %arg7: memref<1x4608xf32, #tpu.memory_space<vmem>>, %arg8: memref<8x896xf32, #tpu.memory_space<vmem>>, %arg9: memref<512x1024xbf16, #tpu.memory_space<vmem>>, %arg10: memref<1024x896xbf16, #tpu.memory_space<vmem>>, %arg11: memref<2x!tpu.dma_semaphore, #tpu.memory_space<semaphore_mem>>) attributes {dimension_semantics = [#tpu.dimension_semantics<arbitrary>], iteration_bounds = array<i64: 1>, scalar_prefetch = 0 : i64, scratch_operands = 3 : i64, tpu.core_type = #tpu.core_type<tc>, window_params = [{pipeline_mode = #tpu.pipeline_mode<synchronous>, transform_indices = @transform_0, window_bounds = array<i64: 8, 128>}, {pipeline_mode = #tpu.pipeline_mode<synchronous>, transform_indices = @transform_1, window_bounds = array<i64: 128, 128>}, {pipeline_mode = #tpu.pipeline_mode<synchronous>, transform_indices = @transform_2, window_bounds = array<i64: 128, 256>}, {pipeline_mode = #tpu.pipeline_mode<synchronous>, transform_indices = @transform_3, window_bounds = array<i64: 256, 512>}, {}, {}, {pipeline_mode = #tpu.pipeline_mode<synchronous>, transform_indices = @transform_6, window_bounds = array<i64: 1, 4608>}, {pipeline_mode = #tpu.pipeline_mode<synchronous>, transform_indices = @transform_7, window_bounds = array<i64: 8, 896>}]} {
    %c0_i32 = arith.constant 0 : i32
    %0 = tpu.memref_slice %arg11[%c0_i32] : memref<2x!tpu.dma_semaphore, #tpu.memory_space<semaphore_mem>> -> memref<1x!tpu.dma_semaphore, #tpu.memory_space<semaphore_mem>>
    %1 = tpu.memref_squeeze %0 : memref<1x!tpu.dma_semaphore, #tpu.memory_space<semaphore_mem>> -> memref<!tpu.dma_semaphore, #tpu.memory_space<semaphore_mem>>
    tpu.enqueue_dma source(%arg5 : memref<512x1024xbf16, #tpu.memory_space<any>>) target(%arg9 : memref<512x1024xbf16, #tpu.memory_space<vmem>>) target_semaphore(%1 : memref<!tpu.dma_semaphore, #tpu.memory_space<semaphore_mem>>)
    %c1_i32 = arith.constant 1 : i32
    %2 = tpu.memref_slice %arg11[%c1_i32] : memref<2x!tpu.dma_semaphore, #tpu.memory_space<semaphore_mem>> -> memref<1x!tpu.dma_semaphore, #tpu.memory_space<semaphore_mem>>
    %3 = tpu.memref_squeeze %2 : memref<1x!tpu.dma_semaphore, #tpu.memory_space<semaphore_mem>> -> memref<!tpu.dma_semaphore, #tpu.memory_space<semaphore_mem>>
    tpu.enqueue_dma source(%arg6 : memref<1024x896xbf16, #tpu.memory_space<any>>) target(%arg10 : memref<1024x896xbf16, #tpu.memory_space<vmem>>) target_semaphore(%3 : memref<!tpu.dma_semaphore, #tpu.memory_space<semaphore_mem>>)
    %c0 = arith.constant 0 : index
    %c0_0 = arith.constant 0 : index
    %4 = vector.load %arg1[%c0, %c0_0] : memref<8x128xf32, #tpu.memory_space<vmem>>, vector<8x128xf32>
    %c0_1 = arith.constant 0 : index
    %c0_2 = arith.constant 0 : index
    %5 = vector.load %arg2[%c0_1, %c0_2] : memref<128x128xbf16, #tpu.memory_space<vmem>>, vector<128x128xbf16>
    %6 = arith.truncf %4 : vector<8x128xf32> to vector<8x128xbf16>
    %cst = arith.constant dense<0.000000e+00> : vector<8x128xf32>
    %7 = tpu.matmul %6, %5, %cst {dimension_numbers = #tpu.dot_dimension_numbers<[1], [0], [0], [1], [0, 0, 1, 1], [], []>} : vector<8x128xbf16>, vector<128x128xbf16>, vector<8x128xf32> -> vector<8x128xf32>
    %c0_3 = arith.constant 0 : index
    %c0_4 = arith.constant 0 : index
    %8 = vector.load %arg7[%c0_3, %c0_4] : memref<1x4608xf32, #tpu.memory_space<vmem>>, vector<1x128xf32>
    %9 = vector.broadcast %8 : vector<1x128xf32> to vector<8x128xf32>
    %10 = arith.addf %7, %9 : vector<8x128xf32>
    %cst_5 = arith.constant 2.000000e-01 : f32
    %11 = vector.broadcast %cst_5 : f32 to vector<8x128xf32>
    %12 = arith.mulf %11, %10 : vector<8x128xf32>
    %13 = arith.maximumf %10, %12 : vector<8x128xf32>
    %c0_6 = arith.constant 0 : index
    %c0_7 = arith.constant 0 : index
    %14 = vector.load %arg3[%c0_6, %c0_7] : memref<128x256xbf16, #tpu.memory_space<vmem>>, vector<128x256xbf16>
    %15 = arith.truncf %13 : vector<8x128xf32> to vector<8x128xbf16>
    %cst_8 = arith.constant dense<0.000000e+00> : vector<8x256xf32>
    %16 = tpu.matmul %15, %14, %cst_8 {dimension_numbers = #tpu.dot_dimension_numbers<[1], [0], [0], [1], [0, 0, 1, 1], [], []>} : vector<8x128xbf16>, vector<128x256xbf16>, vector<8x256xf32> -> vector<8x256xf32>
    %c0_9 = arith.constant 0 : index
    %c128 = arith.constant 128 : index
    %17 = vector.load %arg7[%c0_9, %c128] : memref<1x4608xf32, #tpu.memory_space<vmem>>, vector<1x256xf32>
    %c0_10 = arith.constant 0 : index
    %c384 = arith.constant 384 : index
    %18 = vector.load %arg7[%c0_10, %c384] : memref<1x4608xf32, #tpu.memory_space<vmem>>, vector<1x256xf32>
    %cst_11 = arith.constant dense<0.000000e+00> : vector<256xf32>
    %19 = vector.multi_reduction <add>, %16, %cst_11 [0] : vector<8x256xf32> to vector<256xf32>
    %20 = vector.shape_cast %19 : vector<256xf32> to vector<1x256xf32>
    %cst_12 = arith.constant 1.250000e-01 : f32
    %21 = vector.broadcast %cst_12 : f32 to vector<1x256xf32>
    %22 = arith.mulf %20, %21 : vector<1x256xf32>
    %23 = arith.mulf %16, %16 : vector<8x256xf32>
    %cst_13 = arith.constant dense<0.000000e+00> : vector<256xf32>
    %24 = vector.multi_reduction <add>, %23, %cst_13 [0] : vector<8x256xf32> to vector<256xf32>
    %25 = vector.shape_cast %24 : vector<256xf32> to vector<1x256xf32>
    %cst_14 = arith.constant 1.250000e-01 : f32
    %26 = vector.broadcast %cst_14 : f32 to vector<1x256xf32>
    %27 = arith.mulf %25, %26 : vector<1x256xf32>
    %28 = arith.mulf %22, %22 : vector<1x256xf32>
    %29 = arith.subf %27, %28 : vector<1x256xf32>
    %cst_15 = arith.constant 9.99999974E-6 : f32
    %30 = vector.broadcast %cst_15 : f32 to vector<1x256xf32>
    %31 = arith.addf %29, %30 : vector<1x256xf32>
    %32 = math.rsqrt %31 : vector<1x256xf32>
    %33 = arith.mulf %17, %32 : vector<1x256xf32>
    %34 = arith.mulf %22, %33 : vector<1x256xf32>
    %35 = arith.subf %18, %34 : vector<1x256xf32>
    %36 = vector.broadcast %33 : vector<1x256xf32> to vector<8x256xf32>
    %37 = arith.mulf %16, %36 : vector<8x256xf32>
    %38 = vector.broadcast %35 : vector<1x256xf32> to vector<8x256xf32>
    %39 = arith.addf %37, %38 : vector<8x256xf32>
    %cst_16 = arith.constant 2.000000e-01 : f32
    %40 = vector.broadcast %cst_16 : f32 to vector<8x256xf32>
    %41 = arith.mulf %40, %39 : vector<8x256xf32>
    %42 = arith.maximumf %39, %41 : vector<8x256xf32>
    %c0_17 = arith.constant 0 : index
    %c0_18 = arith.constant 0 : index
    %43 = vector.load %arg4[%c0_17, %c0_18] : memref<256x512xbf16, #tpu.memory_space<vmem>>, vector<256x512xbf16>
    %44 = arith.truncf %42 : vector<8x256xf32> to vector<8x256xbf16>
    %cst_19 = arith.constant dense<0.000000e+00> : vector<8x512xf32>
    %45 = tpu.matmul %44, %43, %cst_19 {dimension_numbers = #tpu.dot_dimension_numbers<[1], [0], [0], [1], [0, 0, 1, 1], [], []>} : vector<8x256xbf16>, vector<256x512xbf16>, vector<8x512xf32> -> vector<8x512xf32>
    %c0_20 = arith.constant 0 : index
    %c640 = arith.constant 640 : index
    %46 = vector.load %arg7[%c0_20, %c640] : memref<1x4608xf32, #tpu.memory_space<vmem>>, vector<1x512xf32>
    %c0_21 = arith.constant 0 : index
    %c1152 = arith.constant 1152 : index
    %47 = vector.load %arg7[%c0_21, %c1152] : memref<1x4608xf32, #tpu.memory_space<vmem>>, vector<1x512xf32>
    %cst_22 = arith.constant dense<0.000000e+00> : vector<512xf32>
    %48 = vector.multi_reduction <add>, %45, %cst_22 [0] : vector<8x512xf32> to vector<512xf32>
    %49 = vector.shape_cast %48 : vector<512xf32> to vector<1x512xf32>
    %cst_23 = arith.constant 1.250000e-01 : f32
    %50 = vector.broadcast %cst_23 : f32 to vector<1x512xf32>
    %51 = arith.mulf %49, %50 : vector<1x512xf32>
    %52 = arith.mulf %45, %45 : vector<8x512xf32>
    %cst_24 = arith.constant dense<0.000000e+00> : vector<512xf32>
    %53 = vector.multi_reduction <add>, %52, %cst_24 [0] : vector<8x512xf32> to vector<512xf32>
    %54 = vector.shape_cast %53 : vector<512xf32> to vector<1x512xf32>
    %cst_25 = arith.constant 1.250000e-01 : f32
    %55 = vector.broadcast %cst_25 : f32 to vector<1x512xf32>
    %56 = arith.mulf %54, %55 : vector<1x512xf32>
    %57 = arith.mulf %51, %51 : vector<1x512xf32>
    %58 = arith.subf %56, %57 : vector<1x512xf32>
    %cst_26 = arith.constant 9.99999974E-6 : f32
    %59 = vector.broadcast %cst_26 : f32 to vector<1x512xf32>
    %60 = arith.addf %58, %59 : vector<1x512xf32>
    %61 = math.rsqrt %60 : vector<1x512xf32>
    %62 = arith.mulf %46, %61 : vector<1x512xf32>
    %63 = arith.mulf %51, %62 : vector<1x512xf32>
    %64 = arith.subf %47, %63 : vector<1x512xf32>
    %65 = vector.broadcast %62 : vector<1x512xf32> to vector<8x512xf32>
    %66 = arith.mulf %45, %65 : vector<8x512xf32>
    %67 = vector.broadcast %64 : vector<1x512xf32> to vector<8x512xf32>
    %68 = arith.addf %66, %67 : vector<8x512xf32>
    %cst_27 = arith.constant 2.000000e-01 : f32
    %69 = vector.broadcast %cst_27 : f32 to vector<8x512xf32>
    %70 = arith.mulf %69, %68 : vector<8x512xf32>
    %71 = arith.maximumf %68, %70 : vector<8x512xf32>
    %c0_i32_28 = arith.constant 0 : i32
    %72 = tpu.memref_slice %arg11[%c0_i32_28] : memref<2x!tpu.dma_semaphore, #tpu.memory_space<semaphore_mem>> -> memref<1x!tpu.dma_semaphore, #tpu.memory_space<semaphore_mem>>
    %73 = tpu.memref_squeeze %72 : memref<1x!tpu.dma_semaphore, #tpu.memory_space<semaphore_mem>> -> memref<!tpu.dma_semaphore, #tpu.memory_space<semaphore_mem>>
    tpu.wait_dma2 semaphore(%73 : memref<!tpu.dma_semaphore, #tpu.memory_space<semaphore_mem>>) src(%arg5 : memref<512x1024xbf16, #tpu.memory_space<any>>) dst(%arg9 : memref<512x1024xbf16, #tpu.memory_space<vmem>>)
    %c0_29 = arith.constant 0 : index
    %c0_30 = arith.constant 0 : index
    %74 = vector.load %arg9[%c0_29, %c0_30] : memref<512x1024xbf16, #tpu.memory_space<vmem>>, vector<512x1024xbf16>
    %75 = arith.truncf %71 : vector<8x512xf32> to vector<8x512xbf16>
    %cst_31 = arith.constant dense<0.000000e+00> : vector<8x1024xf32>
    %76 = tpu.matmul %75, %74, %cst_31 {dimension_numbers = #tpu.dot_dimension_numbers<[1], [0], [0], [1], [0, 0, 1, 1], [], []>} : vector<8x512xbf16>, vector<512x1024xbf16>, vector<8x1024xf32> -> vector<8x1024xf32>
    %c0_32 = arith.constant 0 : index
    %c1664 = arith.constant 1664 : index
    %77 = vector.load %arg7[%c0_32, %c1664] : memref<1x4608xf32, #tpu.memory_space<vmem>>, vector<1x1024xf32>
    %c0_33 = arith.constant 0 : index
    %c2688 = arith.constant 2688 : index
    %78 = vector.load %arg7[%c0_33, %c2688] : memref<1x4608xf32, #tpu.memory_space<vmem>>, vector<1x1024xf32>
    %cst_34 = arith.constant dense<0.000000e+00> : vector<1024xf32>
    %79 = vector.multi_reduction <add>, %76, %cst_34 [0] : vector<8x1024xf32> to vector<1024xf32>
    %80 = vector.shape_cast %79 : vector<1024xf32> to vector<1x1024xf32>
    %cst_35 = arith.constant 1.250000e-01 : f32
    %81 = vector.broadcast %cst_35 : f32 to vector<1x1024xf32>
    %82 = arith.mulf %80, %81 : vector<1x1024xf32>
    %83 = arith.mulf %76, %76 : vector<8x1024xf32>
    %cst_36 = arith.constant dense<0.000000e+00> : vector<1024xf32>
    %84 = vector.multi_reduction <add>, %83, %cst_36 [0] : vector<8x1024xf32> to vector<1024xf32>
    %85 = vector.shape_cast %84 : vector<1024xf32> to vector<1x1024xf32>
    %cst_37 = arith.constant 1.250000e-01 : f32
    %86 = vector.broadcast %cst_37 : f32 to vector<1x1024xf32>
    %87 = arith.mulf %85, %86 : vector<1x1024xf32>
    %88 = arith.mulf %82, %82 : vector<1x1024xf32>
    %89 = arith.subf %87, %88 : vector<1x1024xf32>
    %cst_38 = arith.constant 9.99999974E-6 : f32
    %90 = vector.broadcast %cst_38 : f32 to vector<1x1024xf32>
    %91 = arith.addf %89, %90 : vector<1x1024xf32>
    %92 = math.rsqrt %91 : vector<1x1024xf32>
    %93 = arith.mulf %77, %92 : vector<1x1024xf32>
    %94 = arith.mulf %82, %93 : vector<1x1024xf32>
    %95 = arith.subf %78, %94 : vector<1x1024xf32>
    %96 = vector.broadcast %93 : vector<1x1024xf32> to vector<8x1024xf32>
    %97 = arith.mulf %76, %96 : vector<8x1024xf32>
    %98 = vector.broadcast %95 : vector<1x1024xf32> to vector<8x1024xf32>
    %99 = arith.addf %97, %98 : vector<8x1024xf32>
    %cst_39 = arith.constant 2.000000e-01 : f32
    %100 = vector.broadcast %cst_39 : f32 to vector<8x1024xf32>
    %101 = arith.mulf %100, %99 : vector<8x1024xf32>
    %102 = arith.maximumf %99, %101 : vector<8x1024xf32>
    %c1_i32_40 = arith.constant 1 : i32
    %103 = tpu.memref_slice %arg11[%c1_i32_40] : memref<2x!tpu.dma_semaphore, #tpu.memory_space<semaphore_mem>> -> memref<1x!tpu.dma_semaphore, #tpu.memory_space<semaphore_mem>>
    %104 = tpu.memref_squeeze %103 : memref<1x!tpu.dma_semaphore, #tpu.memory_space<semaphore_mem>> -> memref<!tpu.dma_semaphore, #tpu.memory_space<semaphore_mem>>
    tpu.wait_dma2 semaphore(%104 : memref<!tpu.dma_semaphore, #tpu.memory_space<semaphore_mem>>) src(%arg6 : memref<1024x896xbf16, #tpu.memory_space<any>>) dst(%arg10 : memref<1024x896xbf16, #tpu.memory_space<vmem>>)
    %c0_41 = arith.constant 0 : index
    %c0_42 = arith.constant 0 : index
    %105 = vector.load %arg10[%c0_41, %c0_42] : memref<1024x896xbf16, #tpu.memory_space<vmem>>, vector<1024x896xbf16>
    %106 = arith.truncf %102 : vector<8x1024xf32> to vector<8x1024xbf16>
    %cst_43 = arith.constant dense<0.000000e+00> : vector<8x896xf32>
    %107 = tpu.matmul %106, %105, %cst_43 {dimension_numbers = #tpu.dot_dimension_numbers<[1], [0], [0], [1], [0, 0, 1, 1], [], []>} : vector<8x1024xbf16>, vector<1024x896xbf16>, vector<8x896xf32> -> vector<8x896xf32>
    %c0_44 = arith.constant 0 : index
    %c3712 = arith.constant 3712 : index
    %108 = vector.load %arg7[%c0_44, %c3712] : memref<1x4608xf32, #tpu.memory_space<vmem>>, vector<1x896xf32>
    %109 = vector.broadcast %108 : vector<1x896xf32> to vector<8x896xf32>
    %110 = arith.addf %107, %109 : vector<8x896xf32>
    %111 = math.tanh %110 : vector<8x896xf32>
    %c0_45 = arith.constant 0 : index
    %c0_46 = arith.constant 0 : index
    %112 = vector.load %arg8[%c0_45, %c0_46] : memref<8x896xf32, #tpu.memory_space<vmem>>, vector<8x896xf32>
    tpu.vector_store %arg8[%c0_45, %c0_46], %111 {strides = array<i32>} : memref<8x896xf32, #tpu.memory_space<vmem>>, vector<8x896xf32>,
    return
  }
  func.func @transform_0(%arg0: i32) -> (i32, i32) {
    %c0_i32 = arith.constant 0 : i32
    %c0_i32_0 = arith.constant 0 : i32
    %c0_i32_1 = arith.constant 0 : i32
    return %c0_i32, %c0_i32_0 : i32, i32
  }
  func.func @transform_1(%arg0: i32) -> (i32, i32) {
    %c0_i32 = arith.constant 0 : i32
    %c0_i32_0 = arith.constant 0 : i32
    %c0_i32_1 = arith.constant 0 : i32
    return %c0_i32, %c0_i32_0 : i32, i32
  }
  func.func @transform_2(%arg0: i32) -> (i32, i32) {
    %c0_i32 = arith.constant 0 : i32
    %c0_i32_0 = arith.constant 0 : i32
    %c0_i32_1 = arith.constant 0 : i32
    return %c0_i32, %c0_i32_0 : i32, i32
  }
  func.func @transform_3(%arg0: i32) -> (i32, i32) {
    %c0_i32 = arith.constant 0 : i32
    %c0_i32_0 = arith.constant 0 : i32
    %c0_i32_1 = arith.constant 0 : i32
    return %c0_i32, %c0_i32_0 : i32, i32
  }
  func.func @transform_6(%arg0: i32) -> (i32, i32) {
    %c0_i32 = arith.constant 0 : i32
    %c0_i32_0 = arith.constant 0 : i32
    %c0_i32_1 = arith.constant 0 : i32
    return %c0_i32, %c0_i32_0 : i32, i32
  }
  func.func @transform_7(%arg0: i32) -> (i32, i32) {
    %c0_i32 = arith.constant 0 : i32
    %c0_i32_0 = arith.constant 0 : i32
    %c0_i32_1 = arith.constant 0 : i32
    return %c0_i32, %c0_i32_0 : i32, i32
  }
}

</mosaic_0001>

<llo_original>
// kernel: generator_forward.1
$region0: #{generator_forward.1}
  #allocation0 [shape = 'u32[]', space=smem, size = 0x4, offset = 0x4, fixed_abs, tag = 'smem constant byte address 0x4 - core index']
  #allocation1 [shape = 'u32[72,128]{1,0:T(1,128)}', space=vmem, size = 0x9000, scoped, tag = 'internal scratch']
  #allocation2 [shape = 'bf16[512,1024]{1,0:T(8,128)(2,1)}', space=vmem, size = 0x100000, scoped, tag = 'scratch operand']
  #allocation3 [shape = 'bf16[1024,896]{1,0:T(8,128)(2,1)}', space=vmem, size = 0x1c0000, scoped, tag = 'scratch operand']
  #allocation4 [shape = 's32[2]{0}', space=sflag, size = 0x8, scoped, tag = 'scratch operand']
  #allocation12 [shape = 's32[]', space=sflag, size = 0x4, offset = 0, fixed_abs, tag = 'sflag constant byte address 0x0 - dummy sync flag']
  #allocation13 [shape = 's32[]', space=sflag, size = 0x4, offset = 0, fixed_abs, tag = 'sflag constant byte address 0x0 - dummy sync flag']
  #allocation14 [shape = 'u32[]', space=smem, size = 0x4, offset = 0x44, fixed_abs, tag = 'smem constant byte address 0x44 - assertion arg 0']
  #allocation15 [shape = 'u32[]', space=smem, size = 0x4, offset = 0x48, fixed_abs, tag = 'smem constant byte address 0x48 - assertion arg 1']
  #allocation16 [shape = 's32[]', space=sflag, size = 0x4, offset = 0, fixed_abs, tag = 'sflag constant byte address 0x0 - dummy sync flag']
  #allocation17 [shape = 's32[]', space=sflag, size = 0x4, offset = 0, fixed_abs, tag = 'sflag constant byte address 0x0 - dummy sync flag']
  %s0 = inlined_call_operand.vmem [shape: f32[8,128], index: 0, kind: input, shape index: {}]
  %s1 = inlined_call_operand.hbm [shape: bf16[128,128], index: 1, kind: input, shape index: {}]
  %s2 = inlined_call_operand.hbm [shape: bf16[128,256], index: 2, kind: input, shape index: {}]
  %s3 = inlined_call_operand.hbm [shape: bf16[256,512], index: 3, kind: input, shape index: {}]
  %s4 = inlined_call_operand.hbm [shape: bf16[512,1024], index: 4, kind: input, shape index: {}]
  %s5 = inlined_call_operand.hbm [shape: bf16[1024,896], index: 5, kind: input, shape index: {}]
  %s6 = inlined_call_operand.hbm [shape: f32[1,4608], index: 6, kind: input, shape index: {}]
  %s7 = inlined_call_operand.vmem [shape: f32[8,896], index: 7, kind: output, shape index: {}]
  %s8 = sld [smem:[#allocation0]]
  $region54: #{generator_forward.1} parent=0
    _
  %s10 = ssub.s32 1, %s8
  %s11 = scalar_select 0, %s10, %s8
  $region1: #{generator_forward.1} parent=0
    #allocation5 [shape = 'u8[32768]{0}', space=vmem, size = 0x8000, scoped, tag = 'input window, operand 1, single buffered']
    #allocation6 [shape = 's32[1]{0}', space=sflag, size = 0x4, scoped, tag = 'scoped memory for generator_forward.1']
    #allocation7 [shape = 'u8[65536]{0}', space=vmem, size = 0x10000, scoped, tag = 'input window, operand 2, single buffered']
    #allocation8 [shape = 's32[1]{0}', space=sflag, size = 0x4, scoped, tag = 'scoped memory for generator_forward.1']
    #allocation9 [shape = 'u8[262144]{0}', space=vmem, size = 0x40000, scoped, tag = 'input window, operand 3, single buffered']
    #allocation10 [shape = 'u8[18432]{0}', space=vmem, size = 0x4800, scoped, tag = 'input window, operand 6, single buffered']
    #allocation11 [shape = 's32[1]{0}', space=sflag, size = 0x4, scoped, tag = 'scoped memory for generator_forward.1']
    %12 = vsyncpa [#allocation6], 0
    %13 = vsyncpa [#allocation8], 0
    %14 = vsyncpa [#allocation11], 0
    // Predicated region
    $region2: #{generator_forward.1} parent=1 // pred_check
      _
    $region3: #{generator_forward.1} parent=1 // pred_check_branch
      %16 = sbr.rel (0) target = $region5
    $region4: #{generator_forward.1} parent=1 // pred_region
      _
    $region5: #{generator_forward.1} parent=1 // pred_fallthru
      _
    // Predicated region
    $region6: #{generator_forward.1} parent=1 // pred_check
      _
    $region7: #{generator_forward.1} parent=1 // pred_check_branch
      %18 = sbr.rel (0) target = $region9
    $region8: #{generator_forward.1} parent=1 // pred_region
      %20 = vsyncadd [#allocation6], 0
      %s21 = sshll.u32 %s1, 4
      %s22 = int_to_ptr.hbm [resolvable:$true] %s21
      %s23 = sshll.u32 [#allocation5], 4
      %s24 = int_to_ptr.vmem [resolvable:$true] %s23
      %29 = dma.hbm_to_vmem [thread:$0]  %s22, 1024, %s24, [#allocation6], 64, 64, 4
    $region9: #{generator_forward.1} parent=1 // pred_fallthru
      _
    // Predicated region
    $region10: #{generator_forward.1} parent=1 // pred_check
      _
    $region11: #{generator_forward.1} parent=1 // pred_check_branch
      %31 = sbr.rel (0) target = $region13
    $region12: #{generator_forward.1} parent=1 // pred_region
      %33 = vsyncadd [#allocation8], 0
      %s34 = sshll.u32 %s2, 4
      %s35 = int_to_ptr.hbm [resolvable:$true] %s34
      %s36 = sshll.u32 [#allocation7], 4
      %s37 = int_to_ptr.vmem [resolvable:$true] %s36
      %42 = dma.hbm_to_vmem [thread:$0]  %s35, 2048, %s37, [#allocation8], 128, 128, 8
    $region13: #{generator_forward.1} parent=1 // pred_fallthru
      _
    // Predicated region
    $region14: #{generator_forward.1} parent=1 // pred_check
      _
    $region15: #{generator_forward.1} parent=1 // pred_check_branch
      %44 = sbr.rel (0) target = $region17
    $region16: #{generator_forward.1} parent=1 // pred_region
      %46 = vsyncadd [#allocation8], 0
      %s47 = sshll.u32 %s3, 4
      %s48 = int_to_ptr.hbm [resolvable:$true] %s47
      %s49 = sshll.u32 [#allocation9], 4
      %s50 = int_to_ptr.vmem [resolvable:$true] %s49
      %55 = dma.hbm_to_vmem [thread:$0]  %s48, 8192, %s50, [#allocation8], 256, 256, 16
    $region17: #{generator_forward.1} parent=1 // pred_fallthru
      _
    // Predicated region
    $region18: #{generator_forward.1} parent=1 // pred_check
      _
    $region19: #{generator_forward.1} parent=1 // pred_check_branch
      %57 = sbr.rel (0) target = $region21
    $region20: #{generator_forward.1} parent=1 // pred_region
      %59 = vsyncadd [#allocation11], 0
      %s61 = sshll.u32 %s6, 4
      %s62 = int_to_ptr.hbm [resolvable:$true] %s61
      %s63 = sshll.u32 [#allocation10], 4
      %s64 = int_to_ptr.vmem [resolvable:$true] %s63
      %66 = dma.hbm_to_vmem [thread:$0]  %s62, 576, %s64, [#allocation11]
    $region21: #{generator_forward.1} parent=1 // pred_fallthru
      _
    // Predicated region
    $region22: #{generator_forward.1} parent=1 // pred_check
      _
    $region23: #{generator_forward.1} parent=1 // pred_check_branch
      %68 = sbr.rel (0) target = $region25
    $region24: #{generator_forward.1} parent=1 // pred_region
      %70 = dma.done [#allocation6], 1024
    $region25: #{generator_forward.1} parent=1 // pred_fallthru
      _
    // Predicated region
    $region26: #{generator_forward.1} parent=1 // pred_check
      _
    $region27: #{generator_forward.1} parent=1 // pred_check_branch
      %72 = sbr.rel (0) target = $region29
    $region28: #{generator_forward.1} parent=1 // pred_region
      %74 = dma.done [#allocation8], 2048
    $region29: #{generator_forward.1} parent=1 // pred_fallthru
      _
    // Predicated region
    $region30: #{generator_forward.1} parent=1 // pred_check
      _
    $region31: #{generator_forward.1} parent=1 // pred_check_branch
      %76 = sbr.rel (0) target = $region33
    $region32: #{generator_forward.1} parent=1 // pred_region
      %78 = dma.done [#allocation8], 8192
    $region33: #{generator_forward.1} parent=1 // pred_fallthru
      _
    // Predicated region
    $region34: #{generator_forward.1} parent=1 // pred_check
      _
    $region35: #{generator_forward.1} parent=1 // pred_check_branch
      %80 = sbr.rel (0) target = $region37
    $region36: #{generator_forward.1} parent=1 // pred_region
      %82 = dma.done [#allocation11], 576
    $region37: #{generator_forward.1} parent=1 // pred_fallthru
      _
    // Predicated region
    $region38: #{generator_forward.1} parent=1 // pred_check
      _
    $region39: #{generator_forward.1} parent=1 // pred_check_branch
      %84 = sbr.rel target = $region41
    $region40: #{generator_forward.1} parent=1 // pred_region
      %85 = sst [smem:[#allocation14]] [#allocation13]
      %86 = sst [smem:[#allocation15]] [#allocation12]
    $region41: #{generator_forward.1} parent=1 // pred_fallthru
      _
    %88 = shalt.err (0)
    %s90 = sshll.u32 %s4, 4
    %s91 = int_to_ptr.hbm [resolvable:$true] %s90
    %s92 = sshll.u32 [#allocation2], 4
    %s93 = int_to_ptr.vmem [resolvable:$true] %s92
    %95 = dma.hbm_to_vmem [thread:$0]  %s91, 32768, %s93, [#allocation4]
    %s96 = scalar_lea.sflag [#allocation4], 1
    // Predicated region
    $region42: #{generator_forward.1} parent=1 // pred_check
      _
    $region43: #{generator_forward.1} parent=1 // pred_check_branch
      %98 = sbr.rel target = $region45
    $region44: #{generator_forward.1} parent=1 // pred_region
      %99 = sst [smem:[#allocation14]] [#allocation17]
      %100 = sst [smem:[#allocation15]] [#allocation16]
    $region45: #{generator_forward.1} parent=1 // pred_fallthru
      _
    %102 = shalt.err (0)
    %s104 = sshll.u32 %s5, 4
    %s105 = int_to_ptr.hbm [resolvable:$true] %s104
    %s106 = sshll.u32 [#allocation3], 4
    %s107 = int_to_ptr.vmem [resolvable:$true] %s106
    %109 = dma.hbm_to_vmem [thread:$0]  %s105, 57344, %s107, %s96
    %v110 = vld [vmem:[%s0] sm:$0xff]
    %v111 = vld [vmem:[#allocation5] sm:$0xf]
    %v112 = vld [vmem:[#allocation5 + $0x4] sm:$0xf]
    %v113 = vld [vmem:[#allocation5 + $0x8] sm:$0xf]
    %v114 = vld [vmem:[#allocation5 + $0xc] sm:$0xf]
    %v115 = vld [vmem:[#allocation5 + $0x10] sm:$0xf]
    %v116 = vld [vmem:[#allocation5 + $0x14] sm:$0xf]
    %v117 = vld [vmem:[#allocation5 + $0x18] sm:$0xf]
    %v118 = vld [vmem:[#allocation5 + $0x1c] sm:$0xf]
    %v119 = vld [vmem:[#allocation5 + $0x20] sm:$0xf]
    %v120 = vld [vmem:[#allocation5 + $0x24] sm:$0xf]
    %v121 = vld [vmem:[#allocation5 + $0x28] sm:$0xf]
    %v122 = vld [vmem:[#allocation5 + $0x2c] sm:$0xf]
    %v123 = vld [vmem:[#allocation5 + $0x30] sm:$0xf]
    %v124 = vld [vmem:[#allocation5 + $0x34] sm:$0xf]
    %v125 = vld [vmem:[#allocation5 + $0x38] sm:$0xf]
    %v126 = vld [vmem:[#allocation5 + $0x3c] sm:$0xf]
    %v127 = vpack.c.bf16 %v110, %v110
    %v128 = vld [vmem:[#allocation10] sm:$0x1]
    %v130 = vperm.slane %v128, 0
    %v148 = vunpack.c.l.b16 %v111
    %v149 = vunpack.c.l.b16 %v112
    %v150 = vunpack.c.l.b16 %v113
    %v151 = vunpack.c.l.b16 %v114
    %v152 = vunpack.c.l.b16 %v115
    %v153 = vunpack.c.l.b16 %v116
    %v154 = vunpack.c.l.b16 %v117
    %v155 = vunpack.c.l.b16 %v118
    %v156 = vunpack.c.l.b16 %v119
    %v157 = vunpack.c.l.b16 %v120
    %v158 = vunpack.c.l.b16 %v121
    %v159 = vunpack.c.l.b16 %v122
    %v160 = vunpack.c.l.b16 %v123
    %v161 = vunpack.c.l.b16 %v124
    %v162 = vunpack.c.l.b16 %v125
    %v163 = vunpack.c.l.b16 %v126
    %v164 = vpack.c.b16 %v149, %v148
    %v165 = vpack.c.b16 %v151, %v150
    %v166 = vpack.c.b16 %v153, %v152
    %v167 = vpack.c.b16 %v155, %v154
    %v168 = vpack.c.b16 %v157, %v156
    %v169 = vpack.c.b16 %v159, %v158
    %v170 = vpack.c.b16 %v161, %v160
    %v171 = vpack.c.b16 %v163, %v162
    %180 = vmatpush.bf16.msra.mxu0 %v171
    %181 = vmatpush.bf16.msra.mxu0 %v170
    %182 = vmatpush.bf16.msra.mxu0 %v169
    %183 = vmatpush.bf16.msra.mxu0 %v168
    %184 = vmatpush.bf16.msra.mxu0 %v167
    %185 = vmatpush.bf16.msra.mxu0 %v166
    %186 = vmatpush.bf16.msra.mxu0 %v165
    %187 = vmatpush.bf16.msra.mxu0 %v164
    %188 = vmatmul.bf16.gmra.mxu0 %v127
    %v189 = vpop.f32.mrf.mxu0
    %v190 = vadd.f32 %v130, %v189
    %v191 = vpop.f32.mrf.mxu0
    %192 = vdwg.mxu0
    %v193 = vmul.f32 %v190, 0.2
    %v194 = vmax.f32 %v190, %v193
    %v195 = vld [vmem:[#allocation7] sm:$0xff]
    %v196 = vld [vmem:[#allocation7 + $0x8] sm:$0xff]
    %v197 = vld [vmem:[#allocation7 + $0x10] sm:$0xff]
    %v198 = vld [vmem:[#allocation7 + $0x18] sm:$0xff]
    %v199 = vld [vmem:[#allocation7 + $0x20] sm:$0xff]
    %v200 = vld [vmem:[#allocation7 + $0x28] sm:$0xff]
    %v201 = vld [vmem:[#allocation7 + $0x30] sm:$0xff]
    %v202 = vld [vmem:[#allocation7 + $0x38] sm:$0xff]
    %v203 = vld [vmem:[#allocation7 + $0x40] sm:$0xff]
    %v204 = vld [vmem:[#allocation7 + $0x48] sm:$0xff]
    %v205 = vld [vmem:[#allocation7 + $0x50] sm:$0xff]
    %v206 = vld [vmem:[#allocation7 + $0x58] sm:$0xff]
    %v207 = vld [vmem:[#allocation7 + $0x60] sm:$0xff]
    %v208 = vld [vmem:[#allocation7 + $0x68] sm:$0xff]
    %v209 = vld [vmem:[#allocation7 + $0x70] sm:$0xff]
    %v210 = vld [vmem:[#allocation7 + $0x78] sm:$0xff]
    %v211 = vpack.c.bf16 %v194, %v194
    %v228 = vunpack.c.l.b16 %v195
    %v229 = vunpack.c.h.b16 %v195
    %v230 = vunpack.c.l.b16 %v196
    %v231 = vunpack.c.h.b16 %v196
    %v232 = vunpack.c.l.b16 %v197
    %v233 = vunpack.c.h.b16 %v197
    %v234 = vunpack.c.l.b16 %v198
    %v235 = vunpack.c.h.b16 %v198
    %v236 = vunpack.c.l.b16 %v199
    %v237 = vunpack.c.h.b16 %v199
    %v238 = vunpack.c.l.b16 %v200
    %v239 = vunpack.c.h.b16 %v200
    %v240 = vunpack.c.l.b16 %v201
    %v241 = vunpack.c.h.b16 %v201
    %v242 = vunpack.c.l.b16 %v202
    %v243 = vunpack.c.h.b16 %v202
    %v244 = vunpack.c.l.b16 %v203
    %v245 = vunpack.c.h.b16 %v203
    %v246 = vunpack.c.l.b16 %v204
    %v247 = vunpack.c.h.b16 %v204
    %v248 = vunpack.c.l.b16 %v205
    %v249 = vunpack.c.h.b16 %v205
    %v250 = vunpack.c.l.b16 %v206
    %v251 = vunpack.c.h.b16 %v206
    %v252 = vunpack.c.l.b16 %v207
    %v253 = vunpack.c.h.b16 %v207
    %v254 = vunpack.c.l.b16 %v208
    %v255 = vunpack.c.h.b16 %v208
    %v256 = vunpack.c.l.b16 %v209
    %v257 = vunpack.c.h.b16 %v209
    %v258 = vunpack.c.l.b16 %v210
    %v259 = vunpack.c.h.b16 %v210
    %v260 = vpack.c.b16 %v230, %v228
    %v261 = vpack.c.b16 %v231, %v229
    %v262 = vpack.c.b16 %v234, %v232
    %v263 = vpack.c.b16 %v235, %v233
    %v264 = vpack.c.b16 %v238, %v236
    %v265 = vpack.c.b16 %v239, %v237
    %v266 = vpack.c.b16 %v242, %v240
    %v267 = vpack.c.b16 %v243, %v241
    %v268 = vpack.c.b16 %v246, %v244
    %v269 = vpack.c.b16 %v247, %v245
    %v270 = vpack.c.b16 %v250, %v248
    %v271 = vpack.c.b16 %v251, %v249
    %v272 = vpack.c.b16 %v254, %v252
    %v273 = vpack.c.b16 %v255, %v253
    %v274 = vpack.c.b16 %v258, %v256
    %v275 = vpack.c.b16 %v259, %v257
    %292 = vmatpush.bf16.msra.mxu0 %v274
    %293 = vmatpush.bf16.msra.mxu0 %v272
    %294 = vmatpush.bf16.msra.mxu0 %v270
    %295 = vmatpush.bf16.msra.mxu0 %v268
    %296 = vmatpush.bf16.msra.mxu0 %v266
    %297 = vmatpush.bf16.msra.mxu0 %v264
    %298 = vmatpush.bf16.msra.mxu0 %v262
    %299 = vmatpush.bf16.msra.mxu0 %v260
    %300 = vmatmul.bf16.gmra.mxu0 %v211
    %v301 = vpop.f32.mrf.mxu0
    %v302 = vadd.f32 0.0, %v301
    %v303 = vpop.f32.mrf.mxu0
    %304 = vdwg.mxu0
    %305 = vmatpush.bf16.msra.mxu0 %v275
    %306 = vmatpush.bf16.msra.mxu0 %v273
    %307 = vmatpush.bf16.msra.mxu0 %v271
    %308 = vmatpush.bf16.msra.mxu0 %v269
    %309 = vmatpush.bf16.msra.mxu0 %v267
    %310 = vmatpush.bf16.msra.mxu0 %v265
    %311 = vmatpush.bf16.msra.mxu0 %v263
    %312 = vmatpush.bf16.msra.mxu0 %v261
    %313 = vmatmul.bf16.gmra.mxu0 %v211
    %v314 = vpop.f32.mrf.mxu0
    %v315 = vadd.f32 0.0, %v314
    %v316 = vpop.f32.mrf.mxu0
    %317 = vdwg.mxu0
    %v318 = vld [vmem:[#allocation10 + $0x1] sm:$0x3]
    %v319 = vld [vmem:[#allocation10 + $0x3] sm:$0x3]
    %v320 = vrot.slane %v302, 4
    %v321 = vadd.f32 %v302, %v320
    %v322 = vrot.slane %v321, 2
    %v323 = vadd.f32 %v321, %v322
    %v324 = vrot.slane %v323, 1
    %v325 = vadd.f32 %v323, %v324
    %v326 = vrot.slane %v315, 4
    %v327 = vadd.f32 %v315, %v326
    %v328 = vrot.slane %v327, 2
    %v329 = vadd.f32 %v327, %v328
    %v330 = vrot.slane %v329, 1
    %v331 = vadd.f32 %v329, %v330
    %v332 = vmul.f32 %v325, 0.125
    %v333 = vmul.f32 %v331, 0.125
    %v334 = vmul.f32 %v302, %v302
    %v335 = vmul.f32 %v315, %v315
    %v336 = vrot.slane %v334, 4
    %v337 = vadd.f32 %v334, %v336
    %v338 = vrot.slane %v337, 2
    %v339 = vadd.f32 %v337, %v338
    %v340 = vrot.slane %v339, 1
    %v341 = vadd.f32 %v339, %v340
    %v342 = vrot.slane %v335, 4
    %v343 = vadd.f32 %v335, %v342
    %v344 = vrot.slane %v343, 2
    %v345 = vadd.f32 %v343, %v344
    %v346 = vrot.slane %v345, 1
    %v347 = vadd.f32 %v345, %v346
    %v348 = vmul.f32 %v341, 0.125
    %v349 = vmul.f32 %v347, 0.125
    %v350 = vmul.f32 %v332, %v332
    %v351 = vmul.f32 %v333, %v333
    %v352 = vsub.f32 %v348, %v350
    %v353 = vsub.f32 %v349, %v351
    %v354 = vadd.f32 %v352, 1e-05
    %v355 = vadd.f32 %v353, 1e-05
    %v356 = vrsqrt.pop %v354
    %v357 = vmul.f32 %v356, %v354
    %v358 = vmul.f32 %v357, %v356
    %v359 = vmul.f32 0.5, %v358
    %v360 = vsub.f32 1.5, %v359
    %v361 = vmul.f32 %v356, %v360
    %vm362 = vweird.f32 %v354
    %vm363 = vweird.f32 %v356
    %vm364 = vmor %vm362, %vm363
    %v365 = vsel %vm364, %v356, %v361
    %v366 = vrsqrt.pop %v355
    %v367 = vmul.f32 %v366, %v355
    %v368 = vmul.f32 %v367, %v366
    %v369 = vmul.f32 0.5, %v368
    %v370 = vsub.f32 1.5, %v369
    %v371 = vmul.f32 %v366, %v370
    %vm372 = vweird.f32 %v355
    %vm373 = vweird.f32 %v366
    %vm374 = vmor %vm372, %vm373
    %v375 = vsel %vm374, %v366, %v371
    %v378 = vrot.slane %v375, 7
    %vm379 = vcmask 1040384
    %v380 = vsel %vm379, %v365, %v378
    %v382 = vmul.f32 %v318, %v380
    %v384 = vperm.slane %v382, 0
    %v385 = vperm.slane %v382, 1
    %v388 = vmul.f32 %v332, %v384
    %v389 = vmul.f32 %v333, %v385
    %v392 = vrot.slane %v389, 7
    %v393 = vsel %vm379, %v388, %v392
    %v395 = vsub.f32 %v319, %v393
    %v396 = vmul.f32 %v302, %v384
    %v397 = vmul.f32 %v315, %v385
    %v399 = vperm.slane %v395, 0
    %v400 = vperm.slane %v395, 1
    %v403 = vadd.f32 %v396, %v399
    %v404 = vadd.f32 %v397, %v400
    %v405 = vmul.f32 %v403, 0.2
    %v406 = vmul.f32 %v404, 0.2
    %v407 = vmax.f32 %v403, %v405
    %v408 = vmax.f32 %v404, %v406
    %v409 = vld [vmem:[#allocation9] sm:$0xff]
    %v410 = vld [vmem:[#allocation9 + $0x8] sm:$0xff]
    %v411 = vld [vmem:[#allocation9 + $0x10] sm:$0xff]
    %v412 = vld [vmem:[#allocation9 + $0x18] sm:$0xff]
    %v413 = vld [vmem:[#allocation9 + $0x20] sm:$0xff]
    %v414 = vld [vmem:[#allocation9 + $0x28] sm:$0xff]
    %v415 = vld [vmem:[#allocation9 + $0x30] sm:$0xff]
    %v416 = vld [vmem:[#allocation9 + $0x38] sm:$0xff]
    %v417 = vld [vmem:[#allocation9 + $0x40] sm:$0xff]
    %v418 = vld [vmem:[#allocation9 + $0x48] sm:$0xff]
    %v419 = vld [vmem:[#allocation9 + $0x50] sm:$0xff]
    %v420 = vld [vmem:[#allocation9 + $0x58] sm:$0xff]
    %v421 = vld [vmem:[#allocation9 + $0x60] sm:$0xff]
    %v422 = vld [vmem:[#allocation9 + $0x68] sm:$0xff]
    %v423 = vld [vmem:[#allocation9 + $0x70] sm:$0xff]
    %v424 = vld [vmem:[#allocation9 + $0x78] sm:$0xff]
    %v425 = vld [vmem:[#allocation9 + $0x80] sm:$0xff]
    %v426 = vld [vmem:[#allocation9 + $0x88] sm:$0xff]
    %v427 = vld [vmem:[#allocation9 + $0x90] sm:$0xff]
    %v428 = vld [vmem:[#allocation9 + $0x98] sm:$0xff]
    %v429 = vld [vmem:[#allocation9 + $0xa0] sm:$0xff]
    %v430 = vld [vmem:[#allocation9 + $0xa8] sm:$0xff]
    %v431 = vld [vmem:[#allocation9 + $0xb0] sm:$0xff]
    %v432 = vld [vmem:[#allocation9 + $0xb8] sm:$0xff]
    %v433 = vld [vmem:[#allocation9 + $0xc0] sm:$0xff]
    %v434 = vld [vmem:[#allocation9 + $0xc8] sm:$0xff]
    %v435 = vld [vmem:[#allocation9 + $0xd0] sm:$0xff]
    %v436 = vld [vmem:[#allocation9 + $0xd8] sm:$0xff]
    %v437 = vld [vmem:[#allocation9 + $0xe0] sm:$0xff]
    %v438 = vld [vmem:[#allocation9 + $0xe8] sm:$0xff]
    %v439 = vld [vmem:[#allocation9 + $0xf0] sm:$0xff]
    %v440 = vld [vmem:[#allocation9 + $0xf8] sm:$0xff]
    %v441 = vld [vmem:[#allocation9 + $0x100] sm:$0xff]
    %v442 = vld [vmem:[#allocation9 + $0x108] sm:$0xff]
    %v443 = vld [vmem:[#allocation9 + $0x110] sm:$0xff]
    %v444 = vld [vmem:[#allocation9 + $0x118] sm:$0xff]
    %v445 = vld [vmem:[#allocation9 + $0x120] sm:$0xff]
    %v446 = vld [vmem:[#allocation9 + $0x128] sm:$0xff]
    %v447 = vld [vmem:[#allocation9 + $0x130] sm:$0xff]
    %v448 = vld [vmem:[#allocation9 + $0x138] sm:$0xff]
    %v449 = vld [vmem:[#allocation9 + $0x140] sm:$0xff]
    %v450 = vld [vmem:[#allocation9 + $0x148] sm:$0xff]
    %v451 = vld [vmem:[#allocation9 + $0x150] sm:$0xff]
    %v452 = vld [vmem:[#allocation9 + $0x158] sm:$0xff]
    %v453 = vld [vmem:[#allocation9 + $0x160] sm:$0xff]
    %v454 = vld [vmem:[#allocation9 + $0x168] sm:$0xff]
    %v455 = vld [vmem:[#allocation9 + $0x170] sm:$0xff]
    %v456 = vld [vmem:[#allocation9 + $0x178] sm:$0xff]
    %v457 = vld [vmem:[#allocation9 + $0x180] sm:$0xff]
    %v458 = vld [vmem:[#allocation9 + $0x188] sm:$0xff]
    %v459 = vld [vmem:[#allocation9 + $0x190] sm:$0xff]
    %v460 = vld [vmem:[#allocation9 + $0x198] sm:$0xff]
    %v461 = vld [vmem:[#allocation9 + $0x1a0] sm:$0xff]
    %v462 = vld [vmem:[#allocation9 + $0x1a8] sm:$0xff]
    %v463 = vld [vmem:[#allocation9 + $0x1b0] sm:$0xff]
    %v464 = vld [vmem:[#allocation9 + $0x1b8] sm:$0xff]
    %v465 = vld [vmem:[#allocation9 + $0x1c0] sm:$0xff]
    %v466 = vld [vmem:[#allocation9 + $0x1c8] sm:$0xff]
    %v467 = vld [vmem:[#allocation9 + $0x1d0] sm:$0xff]
    %v468 = vld [vmem:[#allocation9 + $0x1d8] sm:$0xff]
    %v469 = vld [vmem:[#allocation9 + $0x1e0] sm:$0xff]
    %v470 = vld [vmem:[#allocation9 + $0x1e8] sm:$0xff]
    %v471 = vld [vmem:[#allocation9 + $0x1f0] sm:$0xff]
    %v472 = vld [vmem:[#allocation9 + $0x1f8] sm:$0xff]
    %v473 = vpack.c.bf16 %v407, %v407
    %v474 = vpack.c.bf16 %v408, %v408
    %v539 = vunpack.c.l.b16 %v409
    %v540 = vunpack.c.h.b16 %v409
    %v541 = vunpack.c.l.b16 %v410
    %v542 = vunpack.c.h.b16 %v410
    %v543 = vunpack.c.l.b16 %v411
    %v544 = vunpack.c.h.b16 %v411
    %v545 = vunpack.c.l.b16 %v412
    %v546 = vunpack.c.h.b16 %v412
    %v547 = vunpack.c.l.b16 %v413
    %v548 = vunpack.c.h.b16 %v413
    %v549 = vunpack.c.l.b16 %v414
    %v550 = vunpack.c.h.b16 %v414
    %v551 = vunpack.c.l.b16 %v415
    %v552 = vunpack.c.h.b16 %v415
    %v553 = vunpack.c.l.b16 %v416
    %v554 = vunpack.c.h.b16 %v416
    %v555 = vunpack.c.l.b16 %v417
    %v556 = vunpack.c.h.b16 %v417
    %v557 = vunpack.c.l.b16 %v418
    %v558 = vunpack.c.h.b16 %v418
    %v559 = vunpack.c.l.b16 %v419
    %v560 = vunpack.c.h.b16 %v419
    %v561 = vunpack.c.l.b16 %v420
    %v562 = vunpack.c.h.b16 %v420
    %v563 = vunpack.c.l.b16 %v421
    %v564 = vunpack.c.h.b16 %v421
    %v565 = vunpack.c.l.b16 %v422
    %v566 = vunpack.c.h.b16 %v422
    %v567 = vunpack.c.l.b16 %v423
    %v568 = vunpack.c.h.b16 %v423
    %v569 = vunpack.c.l.b16 %v424
    %v570 = vunpack.c.h.b16 %v424
    %v571 = vunpack.c.l.b16 %v425
    %v572 = vunpack.c.h.b16 %v425
    %v573 = vunpack.c.l.b16 %v426
    %v574 = vunpack.c.h.b16 %v426
    %v575 = vunpack.c.l.b16 %v427
    %v576 = vunpack.c.h.b16 %v427
    %v577 = vunpack.c.l.b16 %v428
    %v578 = vunpack.c.h.b16 %v428
    %v579 = vunpack.c.l.b16 %v429
    %v580 = vunpack.c.h.b16 %v429
    %v581 = vunpack.c.l.b16 %v430
    %v582 = vunpack.c.h.b16 %v430
    %v583 = vunpack.c.l.b16 %v431
    %v584 = vunpack.c.h.b16 %v431
    %v585 = vunpack.c.l.b16 %v432
    %v586 = vunpack.c.h.b16 %v432
    %v587 = vunpack.c.l.b16 %v433
    %v588 = vunpack.c.h.b16 %v433
    %v589 = vunpack.c.l.b16 %v434
    %v590 = vunpack.c.h.b16 %v434
    %v591 = vunpack.c.l.b16 %v435
    %v592 = vunpack.c.h.b16 %v435
    %v593 = vunpack.c.l.b16 %v436
    %v594 = vunpack.c.h.b16 %v436
    %v595 = vunpack.c.l.b16 %v437
    %v596 = vunpack.c.h.b16 %v437
    %v597 = vunpack.c.l.b16 %v438
    %v598 = vunpack.c.h.b16 %v438
    %v599 = vunpack.c.l.b16 %v439
    %v600 = vunpack.c.h.b16 %v439
    %v601 = vunpack.c.l.b16 %v440
    %v602 = vunpack.c.h.b16 %v440
    %v603 = vunpack.c.l.b16 %v441
    %v604 = vunpack.c.h.b16 %v441
    %v605 = vunpack.c.l.b16 %v442
    %v606 = vunpack.c.h.b16 %v442
    %v607 = vunpack.c.l.b16 %v443
    %v608 = vunpack.c.h.b16 %v443
    %v609 = vunpack.c.l.b16 %v444
    %v610 = vunpack.c.h.b16 %v444
    %v611 = vunpack.c.l.b16 %v445
    %v612 = vunpack.c.h.b16 %v445
    %v613 = vunpack.c.l.b16 %v446
    %v614 = vunpack.c.h.b16 %v446
    %v615 = vunpack.c.l.b16 %v447
    %v616 = vunpack.c.h.b16 %v447
    %v617 = vunpack.c.l.b16 %v448
    %v618 = vunpack.c.h.b16 %v448
    %v619 = vunpack.c.l.b16 %v449
    %v620 = vunpack.c.h.b16 %v449
    %v621 = vunpack.c.l.b16 %v450
    %v622 = vunpack.c.h.b16 %v450
    %v623 = vunpack.c.l.b16 %v451
    %v624 = vunpack.c.h.b16 %v451
    %v625 = vunpack.c.l.b16 %v452
    %v626 = vunpack.c.h.b16 %v452
    %v627 = vunpack.c.l.b16 %v453
    %v628 = vunpack.c.h.b16 %v453
    %v629 = vunpack.c.l.b16 %v454
    %v630 = vunpack.c.h.b16 %v454
    %v631 = vunpack.c.l.b16 %v455
    %v632 = vunpack.c.h.b16 %v455
    %v633 = vunpack.c.l.b16 %v456
    %v634 = vunpack.c.h.b16 %v456
    %v635 = vunpack.c.l.b16 %v457
    %v636 = vunpack.c.h.b16 %v457
    %v637 = vunpack.c.l.b16 %v458
    %v638 = vunpack.c.h.b16 %v458
    %v639 = vunpack.c.l.b16 %v459
    %v640 = vunpack.c.h.b16 %v459
    %v641 = vunpack.c.l.b16 %v460
    %v642 = vunpack.c.h.b16 %v460
    %v643 = vunpack.c.l.b16 %v461
    %v644 = vunpack.c.h.b16 %v461
    %v645 = vunpack.c.l.b16 %v462
    %v646 = vunpack.c.h.b16 %v462
    %v647 = vunpack.c.l.b16 %v463
    %v648 = vunpack.c.h.b16 %v463
    %v649 = vunpack.c.l.b16 %v464
    %v650 = vunpack.c.h.b16 %v464
    %v651 = vunpack.c.l.b16 %v465
    %v652 = vunpack.c.h.b16 %v465
    %v653 = vunpack.c.l.b16 %v466
    %v654 = vunpack.c.h.b16 %v466
    %v655 = vunpack.c.l.b16 %v467
    %v656 = vunpack.c.h.b16 %v467
    %v657 = vunpack.c.l.b16 %v468
    %v658 = vunpack.c.h.b16 %v468
    %v659 = vunpack.c.l.b16 %v469
    %v660 = vunpack.c.h.b16 %v469
    %v661 = vunpack.c.l.b16 %v470
    %v662 = vunpack.c.h.b16 %v470
    %v663 = vunpack.c.l.b16 %v471
    %v664 = vunpack.c.h.b16 %v471
    %v665 = vunpack.c.l.b16 %v472
    %v666 = vunpack.c.h.b16 %v472
    %v667 = vpack.c.b16 %v543, %v539
    %v668 = vpack.c.b16 %v544, %v540
    %v669 = vpack.c.b16 %v545, %v541
    %v670 = vpack.c.b16 %v546, %v542
    %v671 = vpack.c.b16 %v551, %v547
    %v672 = vpack.c.b16 %v552, %v548
    %v673 = vpack.c.b16 %v553, %v549
    %v674 = vpack.c.b16 %v554, %v550
    %v675 = vpack.c.b16 %v559, %v555
    %v676 = vpack.c.b16 %v560, %v556
    %v677 = vpack.c.b16 %v561, %v557
    %v678 = vpack.c.b16 %v562, %v558
    %v679 = vpack.c.b16 %v567, %v563
    %v680 = vpack.c.b16 %v568, %v564
    %v681 = vpack.c.b16 %v569, %v565
    %v682 = vpack.c.b16 %v570, %v566
    %v683 = vpack.c.b16 %v575, %v571
    %v684 = vpack.c.b16 %v576, %v572
    %v685 = vpack.c.b16 %v577, %v573
    %v686 = vpack.c.b16 %v578, %v574
    %v687 = vpack.c.b16 %v583, %v579
    %v688 = vpack.c.b16 %v584, %v580
    %v689 = vpack.c.b16 %v585, %v581
    %v690 = vpack.c.b16 %v586, %v582
    %v691 = vpack.c.b16 %v591, %v587
    %v692 = vpack.c.b16 %v592, %v588
    %v693 = vpack.c.b16 %v593, %v589
    %v694 = vpack.c.b16 %v594, %v590
    %v695 = vpack.c.b16 %v599, %v595
    %v696 = vpack.c.b16 %v600, %v596
    %v697 = vpack.c.b16 %v601, %v597
    %v698 = vpack.c.b16 %v602, %v598
    %v699 = vpack.c.b16 %v607, %v603
    %v700 = vpack.c.b16 %v608, %v604
    %v701 = vpack.c.b16 %v609, %v605
    %v702 = vpack.c.b16 %v610, %v606
    %v703 = vpack.c.b16 %v615, %v611
    %v704 = vpack.c.b16 %v616, %v612
    %v705 = vpack.c.b16 %v617, %v613
    %v706 = vpack.c.b16 %v618, %v614
    %v707 = vpack.c.b16 %v623, %v619
    %v708 = vpack.c.b16 %v624, %v620
    %v709 = vpack.c.b16 %v625, %v621
    %v710 = vpack.c.b16 %v626, %v622
    %v711 = vpack.c.b16 %v631, %v627
    %v712 = vpack.c.b16 %v632, %v628
    %v713 = vpack.c.b16 %v633, %v629
    %v714 = vpack.c.b16 %v634, %v630
    %v715 = vpack.c.b16 %v639, %v635
    %v716 = vpack.c.b16 %v640, %v636
    %v717 = vpack.c.b16 %v641, %v637
    %v718 = vpack.c.b16 %v642, %v638
    %v719 = vpack.c.b16 %v647, %v643
    %v720 = vpack.c.b16 %v648, %v644
    %v721 = vpack.c.b16 %v649, %v645
    %v722 = vpack.c.b16 %v650, %v646
    %v723 = vpack.c.b16 %v655, %v651
    %v724 = vpack.c.b16 %v656, %v652
    %v725 = vpack.c.b16 %v657, %v653
    %v726 = vpack.c.b16 %v658, %v654
    %v727 = vpack.c.b16 %v663, %v659
    %v728 = vpack.c.b16 %v664, %v660
    %v729 = vpack.c.b16 %v665, %v661
    %v730 = vpack.c.b16 %v666, %v662
    %795 = vmatpush.bf16.msra.mxu0 %v695
    %796 = vmatpush.bf16.msra.mxu0 %v691
    %797 = vmatpush.bf16.msra.mxu0 %v687
    %798 = vmatpush.bf16.msra.mxu0 %v683
    %799 = vmatpush.bf16.msra.mxu0 %v679
    %800 = vmatpush.bf16.msra.mxu0 %v675
    %801 = vmatpush.bf16.msra.mxu0 %v671
    %802 = vmatpush.bf16.msra.mxu0 %v667
    %803 = vmatmul.bf16.gmra.mxu0 %v473
    %v804 = vpop.f32.mrf.mxu0
    %v805 = vadd.f32 0.0, %v804
    %v806 = vpop.f32.mrf.mxu0
    %807 = vdwg.mxu0
    %808 = vmatpush.bf16.msra.mxu0 %v727
    %809 = vmatpush.bf16.msra.mxu0 %v723
    %810 = vmatpush.bf16.msra.mxu0 %v719
    %811 = vmatpush.bf16.msra.mxu0 %v715
    %812 = vmatpush.bf16.msra.mxu0 %v711
    %813 = vmatpush.bf16.msra.mxu0 %v707
    %814 = vmatpush.bf16.msra.mxu0 %v703
    %815 = vmatpush.bf16.msra.mxu0 %v699
    %816 = vmatmul.bf16.gmra.mxu0 %v474
    %v817 = vpop.f32.mrf.mxu0
    %v818 = vadd.f32 %v805, %v817
    %v819 = vpop.f32.mrf.mxu0
    %820 = vdwg.mxu0
    %821 = vmatpush.bf16.msra.mxu0 %v696
    %822 = vmatpush.bf16.msra.mxu0 %v692
    %823 = vmatpush.bf16.msra.mxu0 %v688
    %824 = vmatpush.bf16.msra.mxu0 %v684
    %825 = vmatpush.bf16.msra.mxu0 %v680
    %826 = vmatpush.bf16.msra.mxu0 %v676
    %827 = vmatpush.bf16.msra.mxu0 %v672
    %828 = vmatpush.bf16.msra.mxu0 %v668
    %829 = vmatmul.bf16.gmra.mxu0 %v473
    %v830 = vpop.f32.mrf.mxu0
    %v831 = vadd.f32 0.0, %v830
    %v832 = vpop.f32.mrf.mxu0
    %833 = vdwg.mxu0
    %834 = vmatpush.bf16.msra.mxu0 %v728
    %835 = vmatpush.bf16.msra.mxu0 %v724
    %836 = vmatpush.bf16.msra.mxu0 %v720
    %837 = vmatpush.bf16.msra.mxu0 %v716
    %838 = vmatpush.bf16.msra.mxu0 %v712
    %839 = vmatpush.bf16.msra.mxu0 %v708
    %840 = vmatpush.bf16.msra.mxu0 %v704
    %841 = vmatpush.bf16.msra.mxu0 %v700
    %842 = vmatmul.bf16.gmra.mxu0 %v474
    %v843 = vpop.f32.mrf.mxu0
    %v844 = vadd.f32 %v831, %v843
    %v845 = vpop.f32.mrf.mxu0
    %846 = vdwg.mxu0
    %847 = vmatpush.bf16.msra.mxu0 %v697
    %848 = vmatpush.bf16.msra.mxu0 %v693
    %849 = vmatpush.bf16.msra.mxu0 %v689
    %850 = vmatpush.bf16.msra.mxu0 %v685
    %851 = vmatpush.bf16.msra.mxu0 %v681
    %852 = vmatpush.bf16.msra.mxu0 %v677
    %853 = vmatpush.bf16.msra.mxu0 %v673
    %854 = vmatpush.bf16.msra.mxu0 %v669
    %855 = vmatmul.bf16.gmra.mxu0 %v473
    %v856 = vpop.f32.mrf.mxu0
    %v857 = vadd.f32 0.0, %v856
    %v858 = vpop.f32.mrf.mxu0
    %859 = vdwg.mxu0
    %860 = vmatpush.bf16.msra.mxu0 %v729
    %861 = vmatpush.bf16.msra.mxu0 %v725
    %862 = vmatpush.bf16.msra.mxu0 %v721
    %863 = vmatpush.bf16.msra.mxu0 %v717
    %864 = vmatpush.bf16.msra.mxu0 %v713
    %865 = vmatpush.bf16.msra.mxu0 %v709
    %866 = vmatpush.bf16.msra.mxu0 %v705
    %867 = vmatpush.bf16.msra.mxu0 %v701
    %868 = vmatmul.bf16.gmra.mxu0 %v474
    %v869 = vpop.f32.mrf.mxu0
    %v870 = vadd.f32 %v857, %v869
    %v871 = vpop.f32.mrf.mxu0
    %872 = vdwg.mxu0
    %873 = vmatpush.bf16.msra.mxu0 %v698
    %874 = vmatpush.bf16.msra.mxu0 %v694
    %875 = vmatpush.bf16.msra.mxu0 %v690
    %876 = vmatpush.bf16.msra.mxu0 %v686
    %877 = vmatpush.bf16.msra.mxu0 %v682
    %878 = vmatpush.bf16.msra.mxu0 %v678
    %879 = vmatpush.bf16.msra.mxu0 %v674
    %880 = vmatpush.bf16.msra.mxu0 %v670
    %881 = vmatmul.bf16.gmra.mxu0 %v473
    %v882 = vpop.f32.mrf.mxu0
    %v883 = vadd.f32 0.0, %v882
    %v884 = vpop.f32.mrf.mxu0
    %885 = vdwg.mxu0
    %886 = vmatpush.bf16.msra.mxu0 %v730
    %887 = vmatpush.bf16.msra.mxu0 %v726
    %888 = vmatpush.bf16.msra.mxu0 %v722
    %889 = vmatpush.bf16.msra.mxu0 %v718
    %890 = vmatpush.bf16.msra.mxu0 %v714
    %891 = vmatpush.bf16.msra.mxu0 %v710
    %892 = vmatpush.bf16.msra.mxu0 %v706
    %893 = vmatpush.bf16.msra.mxu0 %v702
    %894 = vmatmul.bf16.gmra.mxu0 %v474
    %v895 = vpop.f32.mrf.mxu0
    %v896 = vadd.f32 %v883, %v895
    %v897 = vpop.f32.mrf.mxu0
    %898 = vdwg.mxu0
    %v899 = vld [vmem:[#allocation10 + $0x5] sm:$0xf]
    %v900 = vld [vmem:[#allocation10 + $0x9] sm:$0xf]
    %v901 = vrot.slane %v818, 4
    %v902 = vadd.f32 %v818, %v901
    %v903 = vrot.slane %v902, 2
    %v904 = vadd.f32 %v902, %v903
    %v905 = vrot.slane %v904, 1
    %v906 = vadd.f32 %v904, %v905
    %v907 = vrot.slane %v844, 4
    %v908 = vadd.f32 %v844, %v907
    %v909 = vrot.slane %v908, 2
    %v910 = vadd.f32 %v908, %v909
    %v911 = vrot.slane %v910, 1
    %v912 = vadd.f32 %v910, %v911
    %v913 = vrot.slane %v870, 4
    %v914 = vadd.f32 %v870, %v913
    %v915 = vrot.slane %v914, 2
    %v916 = vadd.f32 %v914, %v915
    %v917 = vrot.slane %v916, 1
    %v918 = vadd.f32 %v916, %v917
    %v919 = vrot.slane %v896, 4
    %v920 = vadd.f32 %v896, %v919
    %v921 = vrot.slane %v920, 2
    %v922 = vadd.f32 %v920, %v921
    %v923 = vrot.slane %v922, 1
    %v924 = vadd.f32 %v922, %v923
    %v925 = vmul.f32 %v906, 0.125
    %v926 = vmul.f32 %v912, 0.125
    %v927 = vmul.f32 %v918, 0.125
    %v928 = vmul.f32 %v924, 0.125
    %v929 = vmul.f32 %v818, %v818
    %v930 = vmul.f32 %v844, %v844
    %v931 = vmul.f32 %v870, %v870
    %v932 = vmul.f32 %v896, %v896
    %v933 = vrot.slane %v929, 4
    %v934 = vadd.f32 %v929, %v933
    %v935 = vrot.slane %v934, 2
    %v936 = vadd.f32 %v934, %v935
    %v937 = vrot.slane %v936, 1
    %v938 = vadd.f32 %v936, %v937
    %v939 = vrot.slane %v930, 4
    %v940 = vadd.f32 %v930, %v939
    %v941 = vrot.slane %v940, 2
    %v942 = vadd.f32 %v940, %v941
    %v943 = vrot.slane %v942, 1
    %v944 = vadd.f32 %v942, %v943
    %v945 = vrot.slane %v931, 4
    %v946 = vadd.f32 %v931, %v945
    %v947 = vrot.slane %v946, 2
    %v948 = vadd.f32 %v946, %v947
    %v949 = vrot.slane %v948, 1
    %v950 = vadd.f32 %v948, %v949
    %v951 = vrot.slane %v932, 4
    %v952 = vadd.f32 %v932, %v951
    %v953 = vrot.slane %v952, 2
    %v954 = vadd.f32 %v952, %v953
    %v955 = vrot.slane %v954, 1
    %v956 = vadd.f32 %v954, %v955
    %v957 = vmul.f32 %v938, 0.125
    %v958 = vmul.f32 %v944, 0.125
    %v959 = vmul.f32 %v950, 0.125
    %v960 = vmul.f32 %v956, 0.125
    %v961 = vmul.f32 %v925, %v925
    %v962 = vmul.f32 %v926, %v926
    %v963 = vmul.f32 %v927, %v927
    %v964 = vmul.f32 %v928, %v928
    %v965 = vsub.f32 %v957, %v961
    %v966 = vsub.f32 %v958, %v962
    %v967 = vsub.f32 %v959, %v963
    %v968 = vsub.f32 %v960, %v964
    %v969 = vadd.f32 %v965, 1e-05
    %v970 = vadd.f32 %v966, 1e-05
    %v971 = vadd.f32 %v967, 1e-05
    %v972 = vadd.f32 %v968, 1e-05
    %v973 = vrsqrt.pop %v969
    %v974 = vmul.f32 %v973, %v969
    %v975 = vmul.f32 %v974, %v973
    %v976 = vmul.f32 0.5, %v975
    %v977 = vsub.f32 1.5, %v976
    %v978 = vmul.f32 %v973, %v977
    %vm979 = vweird.f32 %v969
    %vm980 = vweird.f32 %v973
    %vm981 = vmor %vm979, %vm980
    %v982 = vsel %vm981, %v973, %v978
    %v983 = vrsqrt.pop %v970
    %v984 = vmul.f32 %v983, %v970
    %v985 = vmul.f32 %v984, %v983
    %v986 = vmul.f32 0.5, %v985
    %v987 = vsub.f32 1.5, %v986
    %v988 = vmul.f32 %v983, %v987
    %vm989 = vweird.f32 %v970
    %vm990 = vweird.f32 %v983
    %vm991 = vmor %vm989, %vm990
    %v992 = vsel %vm991, %v983, %v988
    %v993 = vrsqrt.pop %v971
    %v994 = vmul.f32 %v993, %v971
    %v995 = vmul.f32 %v994, %v993
    %v996 = vmul.f32 0.5, %v995
    %v997 = vsub.f32 1.5, %v996
    %v998 = vmul.f32 %v993, %v997
    %vm999 = vweird.f32 %v971
    %vm1000 = vweird.f32 %v993
    %vm1001 = vmor %vm999, %vm1000
    %v1002 = vsel %vm1001, %v993, %v998
    %v1003 = vrsqrt.pop %v972
    %v1004 = vmul.f32 %v1003, %v972
    %v1005 = vmul.f32 %v1004, %v1003
    %v1006 = vmul.f32 0.5, %v1005
    %v1007 = vsub.f32 1.5, %v1006
    %v1008 = vmul.f32 %v1003, %v1007
    %vm1009 = vweird.f32 %v972
    %vm1010 = vweird.f32 %v1003
    %vm1011 = vmor %vm1009, %vm1010
    %v1012 = vsel %vm1011, %v1003, %v1008
    %v1017 = vrot.slane %v992, 7
    %v1018 = vrot.slane %v1002, 6
    %v1019 = vrot.slane %v1012, 5
    %v1020 = vsel %vm379, %v982, %v1017
    %vm1021 = vcmask 1042434
    %v1022 = vsel %vm1021, %v1018, %v1019
    %vm1023 = vcmask 1041408
    %v1024 = vsel %vm1023, %v1020, %v1022
    %v1026 = vmul.f32 %v899, %v1024
    %v1028 = vperm.slane %v1026, 0
    %v1029 = vperm.slane %v1026, 1
    %v1030 = vperm.slane %v1026, 2
    %v1031 = vperm.slane %v1026, 3
    %v1036 = vmul.f32 %v925, %v1028
    %v1037 = vmul.f32 %v926, %v1029
    %v1038 = vmul.f32 %v927, %v1030
    %v1039 = vmul.f32 %v928, %v1031
    %v1044 = vrot.slane %v1037, 7
    %v1045 = vrot.slane %v1038, 6
    %v1046 = vrot.slane %v1039, 5
    %v1047 = vsel %vm379, %v1036, %v1044
    %v1048 = vsel %vm1021, %v1045, %v1046
    %v1049 = vsel %vm1023, %v1047, %v1048
    %v1051 = vsub.f32 %v900, %v1049
    %v1052 = vmul.f32 %v818, %v1028
    %v1053 = vmul.f32 %v844, %v1029
    %v1054 = vmul.f32 %v870, %v1030
    %v1055 = vmul.f32 %v896, %v1031
    %v1057 = vperm.slane %v1051, 0
    %v1058 = vperm.slane %v1051, 1
    %v1059 = vperm.slane %v1051, 2
    %v1060 = vperm.slane %v1051, 3
    %v1065 = vadd.f32 %v1052, %v1057
    %v1066 = vadd.f32 %v1053, %v1058
    %v1067 = vadd.f32 %v1054, %v1059
    %v1068 = vadd.f32 %v1055, %v1060
    %v1069 = vmul.f32 %v1065, 0.2
    %v1070 = vmul.f32 %v1066, 0.2
    %v1071 = vmul.f32 %v1067, 0.2
    %v1072 = vmul.f32 %v1068, 0.2
    %v1073 = vmax.f32 %v1065, %v1069
    %v1074 = vmax.f32 %v1066, %v1070
    %v1075 = vmax.f32 %v1067, %v1071
    %v1076 = vmax.f32 %v1068, %v1072
    %s1077 = smul.u32 4, 64
    %s1078 = smul.u32 %s1077, 8
    %s1079 = sshll.u32 %s1078, 4
    %1080 = dma.done [#allocation4], %s1079
    %v1081 = vld [vmem:[#allocation2] sm:$0xff]
    %v1082 = vld [vmem:[#allocation2 + $0x8] sm:$0xff]
    %v1083 = vld [vmem:[#allocation2 + $0x10] sm:$0xff]
    %v1084 = vld [vmem:[#allocation2 + $0x18] sm:$0xff]
    %v1085 = vld [vmem:[#allocation2 + $0x20] sm:$0xff]
    %v1086 = vld [vmem:[#allocation2 + $0x28] sm:$0xff]
    %v1087 = vld [vmem:[#allocation2 + $0x30] sm:$0xff]
    %v1088 = vld [vmem:[#allocation2 + $0x38] sm:$0xff]
    %v1089 = vld [vmem:[#allocation2 + $0x40] sm:$0xff]
    %v1090 = vld [vmem:[#allocation2 + $0x48] sm:$0xff]
    %v1091 = vld [vmem:[#allocation2 + $0x50] sm:$0xff]
    %v1092 = vld [vmem:[#allocation2 + $0x58] sm:$0xff]
    %v1093 = vld [vmem:[#allocation2 + $0x60] sm:$0xff]
    %v1094 = vld [vmem:[#allocation2 + $0x68] sm:$0xff]
    %v1095 = vld [vmem:[#allocation2 + $0x70] sm:$0xff]
    %v1096 = vld [vmem:[#allocation2 + $0x78] sm:$0xff]
    %v1097 = vld [vmem:[#allocation2 + $0x80] sm:$0xff]
    %v1098 = vld [vmem:[#allocation2 + $0x88] sm:$0xff]
    %v1099 = vld [vmem:[#allocation2 + $0x90] sm:$0xff]
    %v1100 = vld [vmem:[#allocation2 + $0x98] sm:$0xff]
    %v1101 = vld [vmem:[#allocation2 + $0xa0] sm:$0xff]
    %v1102 = vld [vmem:[#allocation2 + $0xa8] sm:$0xff]
    %v1103 = vld [vmem:[#allocation2 + $0xb0] sm:$0xff]
    %v1104 = vld [vmem:[#allocation2 + $0xb8] sm:$0xff]
    %v1105 = vld [vmem:[#allocation2 + $0xc0] sm:$0xff]
    %v1106 = vld [vmem:[#allocation2 + $0xc8] sm:$0xff]
    %v1107 = vld [vmem:[#allocation2 + $0xd0] sm:$0xff]
    %v1108 = vld [vmem:[#allocation2 + $0xd8] sm:$0xff]
    %v1109 = vld [vmem:[#allocation2 + $0xe0] sm:$0xff]
    %v1110 = vld [vmem:[#allocation2 + $0xe8] sm:$0xff]
    %v1111 = vld [vmem:[#allocation2 + $0xf0] sm:$0xff]
    %v1112 = vld [vmem:[#allocation2 + $0xf8] sm:$0xff]
    %v1113 = vld [vmem:[#allocation2 + $0x100] sm:$0xff]
    %v1114 = vld [vmem:[#allocation2 + $0x108] sm:$0xff]
    %v1115 = vld [vmem:[#allocation2 + $0x110] sm:$0xff]
    %v1116 = vld [vmem:[#allocation2 + $0x118] sm:$0xff]
    %v1117 = vld [vmem:[#allocation2 + $0x120] sm:$0xff]
    %v1118 = vld [vmem:[#allocation2 + $0x128] sm:$0xff]
    %v1119 = vld [vmem:[#allocation2 + $0x130] sm:$0xff]
    %v1120 = vld [vmem:[#allocation2 + $0x138] sm:$0xff]
    %v1121 = vld [vmem:[#allocation2 + $0x140] sm:$0xff]
    %v1122 = vld [vmem:[#allocation2 + $0x148] sm:$0xff]
    %v1123 = vld [vmem:[#allocation2 + $0x150] sm:$0xff]
    %v1124 = vld [vmem:[#allocation2 + $0x158] sm:$0xff]
    %v1125 = vld [vmem:[#allocation2 + $0x160] sm:$0xff]
    %v1126 = vld [vmem:[#allocation2 + $0x168] sm:$0xff]
    %v1127 = vld [vmem:[#allocation2 + $0x170] sm:$0xff]
    %v1128 = vld [vmem:[#allocation2 + $0x178] sm:$0xff]
    %v1129 = vld [vmem:[#allocation2 + $0x180] sm:$0xff]
    %v1130 = vld [vmem:[#allocation2 + $0x188] sm:$0xff]
    %v1131 = vld [vmem:[#allocation2 + $0x190] sm:$0xff]
    %v1132 = vld [vmem:[#allocation2 + $0x198] sm:$0xff]
    %v1133 = vld [vmem:[#allocation2 + $0x1a0] sm:$0xff]
    %v1134 = vld [vmem:[#allocation2 + $0x1a8] sm:$0xff]
    %v1135 = vld [vmem:[#allocation2 + $0x1b0] sm:$0xff]
    %v1136 = vld [vmem:[#allocation2 + $0x1b8] sm:$0xff]
    %v1137 = vld [vmem:[#allocation2 + $0x1c0] sm:$0xff]
    %v1138 = vld [vmem:[#allocation2 + $0x1c8] sm:$0xff]
    %v1139 = vld [vmem:[#allocation2 + $0x1d0] sm:$0xff]
    %v1140 = vld [vmem:[#allocation2 + $0x1d8] sm:$0xff]
    %v1141 = vld [vmem:[#allocation2 + $0x1e0] sm:$0xff]
    %v1142 = vld [vmem:[#allocation2 + $0x1e8] sm:$0xff]
    %v1143 = vld [vmem:[#allocation2 + $0x1f0] sm:$0xff]
    %v1144 = vld [vmem:[#allocation2 + $0x1f8] sm:$0xff]
    %v1145 = vld [vmem:[#allocation2 + $0x200] sm:$0xff]
    %v1146 = vld [vmem:[#allocation2 + $0x208] sm:$0xff]
    %v1147 = vld [vmem:[#allocation2 + $0x210] sm:$0xff]
    %v1148 = vld [vmem:[#allocation2 + $0x218] sm:$0xff]
    %v1149 = vld [vmem:[#allocation2 + $0x220] sm:$0xff]
    %v1150 = vld [vmem:[#allocation2 + $0x228] sm:$0xff]
    %v1151 = vld [vmem:[#allocation2 + $0x230] sm:$0xff]
    %v1152 = vld [vmem:[#allocation2 + $0x238] sm:$0xff]
    %v1153 = vld [vmem:[#allocation2 + $0x240] sm:$0xff]
    %v1154 = vld [vmem:[#allocation2 + $0x248] sm:$0xff]
    %v1155 = vld [vmem:[#allocation2 + $0x250] sm:$0xff]
    %v1156 = vld [vmem:[#allocation2 + $0x258] sm:$0xff]
    %v1157 = vld [vmem:[#allocation2 + $0x260] sm:$0xff]
    %v1158 = vld [vmem:[#allocation2 + $0x268] sm:$0xff]
    %v1159 = vld [vmem:[#allocation2 + $0x270] sm:$0xff]
    %v1160 = vld [vmem:[#allocation2 + $0x278] sm:$0xff]
    %v1161 = vld [vmem:[#allocation2 + $0x280] sm:$0xff]
    %v1162 = vld [vmem:[#allocation2 + $0x288] sm:$0xff]
    %v1163 = vld [vmem:[#allocation2 + $0x290] sm:$0xff]
    %v1164 = vld [vmem:[#allocation2 + $0x298] sm:$0xff]
    %v1165 = vld [vmem:[#allocation2 + $0x2a0] sm:$0xff]
    %v1166 = vld [vmem:[#allocation2 + $0x2a8] sm:$0xff]
    %v1167 = vld [vmem:[#allocation2 + $0x2b0] sm:$0xff]
    %v1168 = vld [vmem:[#allocation2 + $0x2b8] sm:$0xff]
    %v1169 = vld [vmem:[#allocation2 + $0x2c0] sm:$0xff]
    %v1170 = vld [vmem:[#allocation2 + $0x2c8] sm:$0xff]
    %v1171 = vld [vmem:[#allocation2 + $0x2d0] sm:$0xff]
    %v1172 = vld [vmem:[#allocation2 + $0x2d8] sm:$0xff]
    %v1173 = vld [vmem:[#allocation2 + $0x2e0] sm:$0xff]
    %v1174 = vld [vmem:[#allocation2 + $0x2e8] sm:$0xff]
    %v1175 = vld [vmem:[#allocation2 + $0x2f0] sm:$0xff]
    %v1176 = vld [vmem:[#allocation2 + $0x2f8] sm:$0xff]
    %v1177 = vld [vmem:[#allocation2 + $0x300] sm:$0xff]
    %v1178 = vld [vmem:[#allocation2 + $0x308] sm:$0xff]
    %v1179 = vld [vmem:[#allocation2 + $0x310] sm:$0xff]
    %v1180 = vld [vmem:[#allocation2 + $0x318] sm:$0xff]
    %v1181 = vld [vmem:[#allocation2 + $0x320] sm:$0xff]
    %v1182 = vld [vmem:[#allocation2 + $0x328] sm:$0xff]
    %v1183 = vld [vmem:[#allocation2 + $0x330] sm:$0xff]
    %v1184 = vld [vmem:[#allocation2 + $0x338] sm:$0xff]
    %v1185 = vld [vmem:[#allocation2 + $0x340] sm:$0xff]
    %v1186 = vld [vmem:[#allocation2 + $0x348] sm:$0xff]
    %v1187 = vld [vmem:[#allocation2 + $0x350] sm:$0xff]
    %v1188 = vld [vmem:[#allocation2 + $0x358] sm:$0xff]
    %v1189 = vld [vmem:[#allocation2 + $0x360] sm:$0xff]
    %v1190 = vld [vmem:[#allocation2 + $0x368] sm:$0xff]
    %v1191 = vld [vmem:[#allocation2 + $0x370] sm:$0xff]
    %v1192 = vld [vmem:[#allocation2 + $0x378] sm:$0xff]
    %v1193 = vld [vmem:[#allocation2 + $0x380] sm:$0xff]
    %v1194 = vld [vmem:[#allocation2 + $0x388] sm:$0xff]
    %v1195 = vld [vmem:[#allocation2 + $0x390] sm:$0xff]
    %v1196 = vld [vmem:[#allocation2 + $0x398] sm:$0xff]
    %v1197 = vld [vmem:[#allocation2 + $0x3a0] sm:$0xff]
    %v1198 = vld [vmem:[#allocation2 + $0x3a8] sm:$0xff]
    %v1199 = vld [vmem:[#allocation2 + $0x3b0] sm:$0xff]
    %v1200 = vld [vmem:[#allocation2 + $0x3b8] sm:$0xff]
    %v1201 = vld [vmem:[#allocation2 + $0x3c0] sm:$0xff]
    %v1202 = vld [vmem:[#allocation2 + $0x3c8] sm:$0xff]
    %v1203 = vld [vmem:[#allocation2 + $0x3d0] sm:$0xff]
    %v1204 = vld [vmem:[#allocation2 + $0x3d8] sm:$0xff]
    %v1205 = vld [vmem:[#allocation2 + $0x3e0] sm:$0xff]
    %v1206 = vld [vmem:[#allocation2 + $0x3e8] sm:$0xff]
    %v1207 = vld [vmem:[#allocation2 + $0x3f0] sm:$0xff]
    %v1208 = vld [vmem:[#allocation2 + $0x3f8] sm:$0xff]
    %v1209 = vld [vmem:[#allocation2 + $0x400] sm:$0xff]
    %v1210 = vld [vmem:[#allocation2 + $0x408] sm:$0xff]
    %v1211 = vld [vmem:[#allocation2 + $0x410] sm:$0xff]
    %v1212 = vld [vmem:[#allocation2 + $0x418] sm:$0xff]
    %v1213 = vld [vmem:[#allocation2 + $0x420] sm:$0xff]
    %v1214 = vld [vmem:[#allocation2 + $0x428] sm:$0xff]
    %v1215 = vld [vmem:[#allocation2 + $0x430] sm:$0xff]
    %v1216 = vld [vmem:[#allocation2 + $0x438] sm:$0xff]
    %v1217 = vld [vmem:[#allocation2 + $0x440] sm:$0xff]
    %v1218 = vld [vmem:[#allocation2 + $0x448] sm:$0xff]
    %v1219 = vld [vmem:[#allocation2 + $0x450] sm:$0xff]
    %v1220 = vld [vmem:[#allocation2 + $0x458] sm:$0xff]
    %v1221 = vld [vmem:[#allocation2 + $0x460] sm:$0xff]
    %v1222 = vld [vmem:[#allocation2 + $0x468] sm:$0xff]
    %v1223 = vld [vmem:[#allocation2 + $0x470] sm:$0xff]
    %v1224 = vld [vmem:[#allocation2 + $0x478] sm:$0xff]
    %v1225 = vld [vmem:[#allocation2 + $0x480] sm:$0xff]
    %v1226 = vld [vmem:[#allocation2 + $0x488] sm:$0xff]
    %v1227 = vld [vmem:[#allocation2 + $0x490] sm:$0xff]
    %v1228 = vld [vmem:[#allocation2 + $0x498] sm:$0xff]
    %v1229 = vld [vmem:[#allocation2 + $0x4a0] sm:$0xff]
    %v1230 = vld [vmem:[#allocation2 + $0x4a8] sm:$0xff]
    %v1231 = vld [vmem:[#allocation2 + $0x4b0] sm:$0xff]
    %v1232 = vld [vmem:[#allocation2 + $0x4b8] sm:$0xff]
    %v1233 = vld [vmem:[#allocation2 + $0x4c0] sm:$0xff]
    %v1234 = vld [vmem:[#allocation2 + $0x4c8] sm:$0xff]
    %v1235 = vld [vmem:[#allocation2 + $0x4d0] sm:$0xff]
    %v1236 = vld [vmem:[#allocation2 + $0x4d8] sm:$0xff]
    %v1237 = vld [vmem:[#allocation2 + $0x4e0] sm:$0xff]
    %v1238 = vld [vmem:[#allocation2 + $0x4e8] sm:$0xff]
    %v1239 = vld [vmem:[#allocation2 + $0x4f0] sm:$0xff]
    %v1240 = vld [vmem:[#allocation2 + $0x4f8] sm:$0xff]
    %v1241 = vld [vmem:[#allocation2 + $0x500] sm:$0xff]
    %v1242 = vld [vmem:[#allocation2 + $0x508] sm:$0xff]
    %v1243 = vld [vmem:[#allocation2 + $0x510] sm:$0xff]
    %v1244 = vld [vmem:[#allocation2 + $0x518] sm:$0xff]
    %v1245 = vld [vmem:[#allocation2 + $0x520] sm:$0xff]
    %v1246 = vld [vmem:[#allocation2 + $0x528] sm:$0xff]
    %v1247 = vld [vmem:[#allocation2 + $0x530] sm:$0xff]
    %v1248 = vld [vmem:[#allocation2 + $0x538] sm:$0xff]
    %v1249 = vld [vmem:[#allocation2 + $0x540] sm:$0xff]
    %v1250 = vld [vmem:[#allocation2 + $0x548] sm:$0xff]
    %v1251 = vld [vmem:[#allocation2 + $0x550] sm:$0xff]
    %v1252 = vld [vmem:[#allocation2 + $0x558] sm:$0xff]
    %v1253 = vld [vmem:[#allocation2 + $0x560] sm:$0xff]
    %v1254 = vld [vmem:[#allocation2 + $0x568] sm:$0xff]
    %v1255 = vld [vmem:[#allocation2 + $0x570] sm:$0xff]
    %v1256 = vld [vmem:[#allocation2 + $0x578] sm:$0xff]
    %v1257 = vld [vmem:[#allocation2 + $0x580] sm:$0xff]
    %v1258 = vld [vmem:[#allocation2 + $0x588] sm:$0xff]
    %v1259 = vld [vmem:[#allocation2 + $0x590] sm:$0xff]
    %v1260 = vld [vmem:[#allocation2 + $0x598] sm:$0xff]
    %v1261 = vld [vmem:[#allocation2 + $0x5a0] sm:$0xff]
    %v1262 = vld [vmem:[#allocation2 + $0x5a8] sm:$0xff]
    %v1263 = vld [vmem:[#allocation2 + $0x5b0] sm:$0xff]
    %v1264 = vld [vmem:[#allocation2 + $0x5b8] sm:$0xff]
    %v1265 = vld [vmem:[#allocation2 + $0x5c0] sm:$0xff]
    %v1266 = vld [vmem:[#allocation2 + $0x5c8] sm:$0xff]
    %v1267 = vld [vmem:[#allocation2 + $0x5d0] sm:$0xff]
    %v1268 = vld [vmem:[#allocation2 + $0x5d8] sm:$0xff]
    %v1269 = vld [vmem:[#allocation2 + $0x5e0] sm:$0xff]
    %v1270 = vld [vmem:[#allocation2 + $0x5e8] sm:$0xff]
    %v1271 = vld [vmem:[#allocation2 + $0x5f0] sm:$0xff]
    %v1272 = vld [vmem:[#allocation2 + $0x5f8] sm:$0xff]
    %v1273 = vld [vmem:[#allocation2 + $0x600] sm:$0xff]
    %v1274 = vld [vmem:[#allocation2 + $0x608] sm:$0xff]
    %v1275 = vld [vmem:[#allocation2 + $0x610] sm:$0xff]
    %v1276 = vld [vmem:[#allocation2 + $0x618] sm:$0xff]
    %v1277 = vld [vmem:[#allocation2 + $0x620] sm:$0xff]
    %v1278 = vld [vmem:[#allocation2 + $0x628] sm:$0xff]
    %v1279 = vld [vmem:[#allocation2 + $0x630] sm:$0xff]
    %v1280 = vld [vmem:[#allocation2 + $0x638] sm:$0xff]
    %v1281 = vld [vmem:[#allocation2 + $0x640] sm:$0xff]
    %v1282 = vld [vmem:[#allocation2 + $0x648] sm:$0xff]
    %v1283 = vld [vmem:[#allocation2 + $0x650] sm:$0xff]
    %v1284 = vld [vmem:[#allocation2 + $0x658] sm:$0xff]
    %v1285 = vld [vmem:[#allocation2 + $0x660] sm:$0xff]
    %v1286 = vld [vmem:[#allocation2 + $0x668] sm:$0xff]
    %v1287 = vld [vmem:[#allocation2 + $0x670] sm:$0xff]
    %v1288 = vld [vmem:[#allocation2 + $0x678] sm:$0xff]
    %v1289 = vld [vmem:[#allocation2 + $0x680] sm:$0xff]
    %v1290 = vld [vmem:[#allocation2 + $0x688] sm:$0xff]
    %v1291 = vld [vmem:[#allocation2 + $0x690] sm:$0xff]
    %v1292 = vld [vmem:[#allocation2 + $0x698] sm:$0xff]
    %v1293 = vld [vmem:[#allocation2 + $0x6a0] sm:$0xff]
    %v1294 = vld [vmem:[#allocation2 + $0x6a8] sm:$0xff]
    %v1295 = vld [vmem:[#allocation2 + $0x6b0] sm:$0xff]
    %v1296 = vld [vmem:[#allocation2 + $0x6b8] sm:$0xff]
    %v1297 = vld [vmem:[#allocation2 + $0x6c0] sm:$0xff]
    %v1298 = vld [vmem:[#allocation2 + $0x6c8] sm:$0xff]
    %v1299 = vld [vmem:[#allocation2 + $0x6d0] sm:$0xff]
    %v1300 = vld [vmem:[#allocation2 + $0x6d8] sm:$0xff]
    %v1301 = vld [vmem:[#allocation2 + $0x6e0] sm:$0xff]
    %v1302 = vld [vmem:[#allocation2 + $0x6e8] sm:$0xff]
    %v1303 = vld [vmem:[#allocation2 + $0x6f0] sm:$0xff]
    %v1304 = vld [vmem:[#allocation2 + $0x6f8] sm:$0xff]
    %v1305 = vld [vmem:[#allocation2 + $0x700] sm:$0xff]
    %v1306 = vld [vmem:[#allocation2 + $0x708] sm:$0xff]
    %v1307 = vld [vmem:[#allocation2 + $0x710] sm:$0xff]
    %v1308 = vld [vmem:[#allocation2 + $0x718] sm:$0xff]
    %v1309 = vld [vmem:[#allocation2 + $0x720] sm:$0xff]
    %v1310 = vld [vmem:[#allocation2 + $0x728] sm:$0xff]
    %v1311 = vld [vmem:[#allocation2 + $0x730] sm:$0xff]
    %v1312 = vld [vmem:[#allocation2 + $0x738] sm:$0xff]
    %v1313 = vld [vmem:[#allocation2 + $0x740] sm:$0xff]
    %v1314 = vld [vmem:[#allocation2 + $0x748] sm:$0xff]
    %v1315 = vld [vmem:[#allocation2 + $0x750] sm:$0xff]
    %v1316 = vld [vmem:[#allocation2 + $0x758] sm:$0xff]
    %v1317 = vld [vmem:[#allocation2 + $0x760] sm:$0xff]
    %v1318 = vld [vmem:[#allocation2 + $0x768] sm:$0xff]
    %v1319 = vld [vmem:[#allocation2 + $0x770] sm:$0xff]
    %v1320 = vld [vmem:[#allocation2 + $0x778] sm:$0xff]
    %v1321 = vld [vmem:[#allocation2 + $0x780] sm:$0xff]
    %v1322 = vld [vmem:[#allocation2 + $0x788] sm:$0xff]
    %v1323 = vld [vmem:[#allocation2 + $0x790] sm:$0xff]
    %v1324 = vld [vmem:[#allocation2 + $0x798] sm:$0xff]
    %v1325 = vld [vmem:[#allocation2 + $0x7a0] sm:$0xff]
    %v1326 = vld [vmem:[#allocation2 + $0x7a8] sm:$0xff]
    %v1327 = vld [vmem:[#allocation2 + $0x7b0] sm:$0xff]
    %v1328 = vld [vmem:[#allocation2 + $0x7b8] sm:$0xff]
    %v1329 = vld [vmem:[#allocation2 + $0x7c0] sm:$0xff]
    %v1330 = vld [vmem:[#allocation2 + $0x7c8] sm:$0xff]
    %v1331 = vld [vmem:[#allocation2 + $0x7d0] sm:$0xff]
    %v1332 = vld [vmem:[#allocation2 + $0x7d8] sm:$0xff]
    %v1333 = vld [vmem:[#allocation2 + $0x7e0] sm:$0xff]
    %v1334 = vld [vmem:[#allocation2 + $0x7e8] sm:$0xff]
    %v1335 = vld [vmem:[#allocation2 + $0x7f0] sm:$0xff]
    %v1336 = vld [vmem:[#allocation2 + $0x7f8] sm:$0xff]
    %v1337 = vpack.c.bf16 %v1073, %v1073
    %v1338 = vpack.c.bf16 %v1074, %v1074
    %v1339 = vpack.c.bf16 %v1075, %v1075
    %v1340 = vpack.c.bf16 %v1076, %v1076
    %v1597 = vunpack.c.l.b16 %v1081
    %v1598 = vunpack.c.h.b16 %v1081
    %v1599 = vunpack.c.l.b16 %v1082
    %v1600 = vunpack.c.h.b16 %v1082
    %v1601 = vunpack.c.l.b16 %v1083
    %v1602 = vunpack.c.h.b16 %v1083
    %v1603 = vunpack.c.l.b16 %v1084
    %v1604 = vunpack.c.h.b16 %v1084
    %v1605 = vunpack.c.l.b16 %v1085
    %v1606 = vunpack.c.h.b16 %v1085
    %v1607 = vunpack.c.l.b16 %v1086
    %v1608 = vunpack.c.h.b16 %v1086
    %v1609 = vunpack.c.l.b16 %v1087
    %v1610 = vunpack.c.h.b16 %v1087
    %v1611 = vunpack.c.l.b16 %v1088
    %v1612 = vunpack.c.h.b16 %v1088
    %v1613 = vunpack.c.l.b16 %v1089
    %v1614 = vunpack.c.h.b16 %v1089
    %v1615 = vunpack.c.l.b16 %v1090
    %v1616 = vunpack.c.h.b16 %v1090
    %v1617 = vunpack.c.l.b16 %v1091
    %v1618 = vunpack.c.h.b16 %v1091
    %v1619 = vunpack.c.l.b16 %v1092
    %v1620 = vunpack.c.h.b16 %v1092
    %v1621 = vunpack.c.l.b16 %v1093
    %v1622 = vunpack.c.h.b16 %v1093
    %v1623 = vunpack.c.l.b16 %v1094
    %v1624 = vunpack.c.h.b16 %v1094
    %v1625 = vunpack.c.l.b16 %v1095
    %v1626 = vunpack.c.h.b16 %v1095
    %v1627 = vunpack.c.l.b16 %v1096
    %v1628 = vunpack.c.h.b16 %v1096
    %v1629 = vunpack.c.l.b16 %v1097
    %v1630 = vunpack.c.h.b16 %v1097
    %v1631 = vunpack.c.l.b16 %v1098
    %v1632 = vunpack.c.h.b16 %v1098
    %v1633 = vunpack.c.l.b16 %v1099
    %v1634 = vunpack.c.h.b16 %v1099
    %v1635 = vunpack.c.l.b16 %v1100
    %v1636 = vunpack.c.h.b16 %v1100
    %v1637 = vunpack.c.l.b16 %v1101
    %v1638 = vunpack.c.h.b16 %v1101
    %v1639 = vunpack.c.l.b16 %v1102
    %v1640 = vunpack.c.h.b16 %v1102
    %v1641 = vunpack.c.l.b16 %v1103
    %v1642 = vunpack.c.h.b16 %v1103
    %v1643 = vunpack.c.l.b16 %v1104
    %v1644 = vunpack.c.h.b16 %v1104
    %v1645 = vunpack.c.l.b16 %v1105
    %v1646 = vunpack.c.h.b16 %v1105
    %v1647 = vunpack.c.l.b16 %v1106
    %v1648 = vunpack.c.h.b16 %v1106
    %v1649 = vunpack.c.l.b16 %v1107
    %v1650 = vunpack.c.h.b16 %v1107
    %v1651 = vunpack.c.l.b16 %v1108
    %v1652 = vunpack.c.h.b16 %v1108
    %v1653 = vunpack.c.l.b16 %v1109
    %v1654 = vunpack.c.h.b16 %v1109
    %v1655 = vunpack.c.l.b16 %v1110
    %v1656 = vunpack.c.h.b16 %v1110
    %v1657 = vunpack.c.l.b16 %v1111
    %v1658 = vunpack.c.h.b16 %v1111
    %v1659 = vunpack.c.l.b16 %v1112
    %v1660 = vunpack.c.h.b16 %v1112
    %v1661 = vunpack.c.l.b16 %v1113
    %v1662 = vunpack.c.h.b16 %v1113
    %v1663 = vunpack.c.l.b16 %v1114
    %v1664 = vunpack.c.h.b16 %v1114
    %v1665 = vunpack.c.l.b16 %v1115
    %v1666 = vunpack.c.h.b16 %v1115
    %v1667 = vunpack.c.l.b16 %v1116
    %v1668 = vunpack.c.h.b16 %v1116
    %v1669 = vunpack.c.l.b16 %v1117
    %v1670 = vunpack.c.h.b16 %v1117
    %v1671 = vunpack.c.l.b16 %v1118
    %v1672 = vunpack.c.h.b16 %v1118
    %v1673 = vunpack.c.l.b16 %v1119
    %v1674 = vunpack.c.h.b16 %v1119
    %v1675 = vunpack.c.l.b16 %v1120
    %v1676 = vunpack.c.h.b16 %v1120
    %v1677 = vunpack.c.l.b16 %v1121
    %v1678 = vunpack.c.h.b16 %v1121
    %v1679 = vunpack.c.l.b16 %v1122
    %v1680 = vunpack.c.h.b16 %v1122
    %v1681 = vunpack.c.l.b16 %v1123
    %v1682 = vunpack.c.h.b16 %v1123
    %v1683 = vunpack.c.l.b16 %v1124
    %v1684 = vunpack.c.h.b16 %v1124
    %v1685 = vunpack.c.l.b16 %v1125
    %v1686 = vunpack.c.h.b16 %v1125
    %v1687 = vunpack.c.l.b16 %v1126
    %v1688 = vunpack.c.h.b16 %v1126
    %v1689 = vunpack.c.l.b16 %v1127
    %v1690 = vunpack.c.h.b16 %v1127
    %v1691 = vunpack.c.l.b16 %v1128
    %v1692 = vunpack.c.h.b16 %v1128
    %v1693 = vunpack.c.l.b16 %v1129
    %v1694 = vunpack.c.h.b16 %v1129
    %v1695 = vunpack.c.l.b16 %v1130
    %v1696 = vunpack.c.h.b16 %v1130
    %v1697 = vunpack.c.l.b16 %v1131
    %v1698 = vunpack.c.h.b16 %v1131
    %v1699 = vunpack.c.l.b16 %v1132
    %v1700 = vunpack.c.h.b16 %v1132
    %v1701 = vunpack.c.l.b16 %v1133
    %v1702 = vunpack.c.h.b16 %v1133
    %v1703 = vunpack.c.l.b16 %v1134
    %v1704 = vunpack.c.h.b16 %v1134
    %v1705 = vunpack.c.l.b16 %v1135
    %v1706 = vunpack.c.h.b16 %v1135
    %v1707 = vunpack.c.l.b16 %v1136
    %v1708 = vunpack.c.h.b16 %v1136
    %v1709 = vunpack.c.l.b16 %v1137
    %v1710 = vunpack.c.h.b16 %v1137
    %v1711 = vunpack.c.l.b16 %v1138
    %v1712 = vunpack.c.h.b16 %v1138
    %v1713 = vunpack.c.l.b16 %v1139
    %v1714 = vunpack.c.h.b16 %v1139
    %v1715 = vunpack.c.l.b16 %v1140
    %v1716 = vunpack.c.h.b16 %v1140
    %v1717 = vunpack.c.l.b16 %v1141
    %v1718 = vunpack.c.h.b16 %v1141
    %v1719 = vunpack.c.l.b16 %v1142
    %v1720 = vunpack.c.h.b16 %v1142
    %v1721 = vunpack.c.l.b16 %v1143
    %v1722 = vunpack.c.h.b16 %v1143
    %v1723 = vunpack.c.l.b16 %v1144
    %v1724 = vunpack.c.h.b16 %v1144
    %v1725 = vunpack.c.l.b16 %v1145
    %v1726 = vunpack.c.h.b16 %v1145
    %v1727 = vunpack.c.l.b16 %v1146
    %v1728 = vunpack.c.h.b16 %v1146
    %v1729 = vunpack.c.l.b16 %v1147
    %v1730 = vunpack.c.h.b16 %v1147
    %v1731 = vunpack.c.l.b16 %v1148
    %v1732 = vunpack.c.h.b16 %v1148
    %v1733 = vunpack.c.l.b16 %v1149
    %v1734 = vunpack.c.h.b16 %v1149
    %v1735 = vunpack.c.l.b16 %v1150
    %v1736 = vunpack.c.h.b16 %v1150
    %v1737 = vunpack.c.l.b16 %v1151
    %v1738 = vunpack.c.h.b16 %v1151
    %v1739 = vunpack.c.l.b16 %v1152
    %v1740 = vunpack.c.h.b16 %v1152
    %v1741 = vunpack.c.l.b16 %v1153
    %v1742 = vunpack.c.h.b16 %v1153
    %v1743 = vunpack.c.l.b16 %v1154
    %v1744 = vunpack.c.h.b16 %v1154
    %v1745 = vunpack.c.l.b16 %v1155
    %v1746 = vunpack.c.h.b16 %v1155
    %v1747 = vunpack.c.l.b16 %v1156
    %v1748 = vunpack.c.h.b16 %v1156
    %v1749 = vunpack.c.l.b16 %v1157
    %v1750 = vunpack.c.h.b16 %v1157
    %v1751 = vunpack.c.l.b16 %v1158
    %v1752 = vunpack.c.h.b16 %v1158
    %v1753 = vunpack.c.l.b16 %v1159
    %v1754 = vunpack.c.h.b16 %v1159
    %v1755 = vunpack.c.l.b16 %v1160
    %v1756 = vunpack.c.h.b16 %v1160
    %v1757 = vunpack.c.l.b16 %v1161
    %v1758 = vunpack.c.h.b16 %v1161
    %v1759 = vunpack.c.l.b16 %v1162
    %v1760 = vunpack.c.h.b16 %v1162
    %v1761 = vunpack.c.l.b16 %v1163
    %v1762 = vunpack.c.h.b16 %v1163
    %v1763 = vunpack.c.l.b16 %v1164
    %v1764 = vunpack.c.h.b16 %v1164
    %v1765 = vunpack.c.l.b16 %v1165
    %v1766 = vunpack.c.h.b16 %v1165
    %v1767 = vunpack.c.l.b16 %v1166
    %v1768 = vunpack.c.h.b16 %v1166
    %v1769 = vunpack.c.l.b16 %v1167
    %v1770 = vunpack.c.h.b16 %v1167
    %v1771 = vunpack.c.l.b16 %v1168
    %v1772 = vunpack.c.h.b16 %v1168
    %v1773 = vunpack.c.l.b16 %v1169
    %v1774 = vunpack.c.h.b16 %v1169
    %v1775 = vunpack.c.l.b16 %v1170
    %v1776 = vunpack.c.h.b16 %v1170
    %v1777 = vunpack.c.l.b16 %v1171
    %v1778 = vunpack.c.h.b16 %v1171
    %v1779 = vunpack.c.l.b16 %v1172
    %v1780 = vunpack.c.h.b16 %v1172
    %v1781 = vunpack.c.l.b16 %v1173
    %v1782 = vunpack.c.h.b16 %v1173
    %v1783 = vunpack.c.l.b16 %v1174
    %v1784 = vunpack.c.h.b16 %v1174
    %v1785 = vunpack.c.l.b16 %v1175
    %v1786 = vunpack.c.h.b16 %v1175
    %v1787 = vunpack.c.l.b16 %v1176
    %v1788 = vunpack.c.h.b16 %v1176
    %v1789 = vunpack.c.l.b16 %v1177
    %v1790 = vunpack.c.h.b16 %v1177
    %v1791 = vunpack.c.l.b16 %v1178
    %v1792 = vunpack.c.h.b16 %v1178
    %v1793 = vunpack.c.l.b16 %v1179
    %v1794 = vunpack.c.h.b16 %v1179
    %v1795 = vunpack.c.l.b16 %v1180
    %v1796 = vunpack.c.h.b16 %v1180
    %v1797 = vunpack.c.l.b16 %v1181
    %v1798 = vunpack.c.h.b16 %v1181
    %v1799 = vunpack.c.l.b16 %v1182
    %v1800 = vunpack.c.h.b16 %v1182
    %v1801 = vunpack.c.l.b16 %v1183
    %v1802 = vunpack.c.h.b16 %v1183
    %v1803 = vunpack.c.l.b16 %v1184
    %v1804 = vunpack.c.h.b16 %v1184
    %v1805 = vunpack.c.l.b16 %v1185
    %v1806 = vunpack.c.h.b16 %v1185
    %v1807 = vunpack.c.l.b16 %v1186
    %v1808 = vunpack.c.h.b16 %v1186
    %v1809 = vunpack.c.l.b16 %v1187
    %v1810 = vunpack.c.h.b16 %v1187
    %v1811 = vunpack.c.l.b16 %v1188
    %v1812 = vunpack.c.h.b16 %v1188
    %v1813 = vunpack.c.l.b16 %v1189
    %v1814 = vunpack.c.h.b16 %v1189
    %v1815 = vunpack.c.l.b16 %v1190
    %v1816 = vunpack.c.h.b16 %v1190
    %v1817 = vunpack.c.l.b16 %v1191
    %v1818 = vunpack.c.h.b16 %v1191
    %v1819 = vunpack.c.l.b16 %v1192
    %v1820 = vunpack.c.h.b16 %v1192
    %v1821 = vunpack.c.l.b16 %v1193
    %v1822 = vunpack.c.h.b16 %v1193
    %v1823 = vunpack.c.l.b16 %v1194
    %v1824 = vunpack.c.h.b16 %v1194
    %v1825 = vunpack.c.l.b16 %v1195
    %v1826 = vunpack.c.h.b16 %v1195
    %v1827 = vunpack.c.l.b16 %v1196
    %v1828 = vunpack.c.h.b16 %v1196
    %v1829 = vunpack.c.l.b16 %v1197
    %v1830 = vunpack.c.h.b16 %v1197
    %v1831 = vunpack.c.l.b16 %v1198
    %v1832 = vunpack.c.h.b16 %v1198
    %v1833 = vunpack.c.l.b16 %v1199
    %v1834 = vunpack.c.h.b16 %v1199
    %v1835 = vunpack.c.l.b16 %v1200
    %v1836 = vunpack.c.h.b16 %v1200
    %v1837 = vunpack.c.l.b16 %v1201
    %v1838 = vunpack.c.h.b16 %v1201
    %v1839 = vunpack.c.l.b16 %v1202
    %v1840 = vunpack.c.h.b16 %v1202
    %v1841 = vunpack.c.l.b16 %v1203
    %v1842 = vunpack.c.h.b16 %v1203
    %v1843 = vunpack.c.l.b16 %v1204
    %v1844 = vunpack.c.h.b16 %v1204
    %v1845 = vunpack.c.l.b16 %v1205
    %v1846 = vunpack.c.h.b16 %v1205
    %v1847 = vunpack.c.l.b16 %v1206
    %v1848 = vunpack.c.h.b16 %v1206
    %v1849 = vunpack.c.l.b16 %v1207
    %v1850 = vunpack.c.h.b16 %v1207
    %v1851 = vunpack.c.l.b16 %v1208
    %v1852 = vunpack.c.h.b16 %v1208
    %v1853 = vunpack.c.l.b16 %v1209
    %v1854 = vunpack.c.h.b16 %v1209
    %v1855 = vunpack.c.l.b16 %v1210
    %v1856 = vunpack.c.h.b16 %v1210
    %v1857 = vunpack.c.l.b16 %v1211
    %v1858 = vunpack.c.h.b16 %v1211
    %v1859 = vunpack.c.l.b16 %v1212
    %v1860 = vunpack.c.h.b16 %v1212
    %v1861 = vunpack.c.l.b16 %v1213
    %v1862 = vunpack.c.h.b16 %v1213
    %v1863 = vunpack.c.l.b16 %v1214
    %v1864 = vunpack.c.h.b16 %v1214
    %v1865 = vunpack.c.l.b16 %v1215
    %v1866 = vunpack.c.h.b16 %v1215
    %v1867 = vunpack.c.l.b16 %v1216
    %v1868 = vunpack.c.h.b16 %v1216
    %v1869 = vunpack.c.l.b16 %v1217
    %v1870 = vunpack.c.h.b16 %v1217
    %v1871 = vunpack.c.l.b16 %v1218
    %v1872 = vunpack.c.h.b16 %v1218
    %v1873 = vunpack.c.l.b16 %v1219
    %v1874 = vunpack.c.h.b16 %v1219
    %v1875 = vunpack.c.l.b16 %v1220
    %v1876 = vunpack.c.h.b16 %v1220
    %v1877 = vunpack.c.l.b16 %v1221
    %v1878 = vunpack.c.h.b16 %v1221
    %v1879 = vunpack.c.l.b16 %v1222
    %v1880 = vunpack.c.h.b16 %v1222
    %v1881 = vunpack.c.l.b16 %v1223
    %v1882 = vunpack.c.h.b16 %v1223
    %v1883 = vunpack.c.l.b16 %v1224
    %v1884 = vunpack.c.h.b16 %v1224
    %v1885 = vunpack.c.l.b16 %v1225
    %v1886 = vunpack.c.h.b16 %v1225
    %v1887 = vunpack.c.l.b16 %v1226
    %v1888 = vunpack.c.h.b16 %v1226
    %v1889 = vunpack.c.l.b16 %v1227
    %v1890 = vunpack.c.h.b16 %v1227
    %v1891 = vunpack.c.l.b16 %v1228
    %v1892 = vunpack.c.h.b16 %v1228
    %v1893 = vunpack.c.l.b16 %v1229
    %v1894 = vunpack.c.h.b16 %v1229
    %v1895 = vunpack.c.l.b16 %v1230
    %v1896 = vunpack.c.h.b16 %v1230
    %v1897 = vunpack.c.l.b16 %v1231
    %v1898 = vunpack.c.h.b16 %v1231
    %v1899 = vunpack.c.l.b16 %v1232
    %v1900 = vunpack.c.h.b16 %v1232
    %v1901 = vunpack.c.l.b16 %v1233
    %v1902 = vunpack.c.h.b16 %v1233
    %v1903 = vunpack.c.l.b16 %v1234
    %v1904 = vunpack.c.h.b16 %v1234
    %v1905 = vunpack.c.l.b16 %v1235
    %v1906 = vunpack.c.h.b16 %v1235
    %v1907 = vunpack.c.l.b16 %v1236
    %v1908 = vunpack.c.h.b16 %v1236
    %v1909 = vunpack.c.l.b16 %v1237
    %v1910 = vunpack.c.h.b16 %v1237
    %v1911 = vunpack.c.l.b16 %v1238
    %v1912 = vunpack.c.h.b16 %v1238
    %v1913 = vunpack.c.l.b16 %v1239
    %v1914 = vunpack.c.h.b16 %v1239
    %v1915 = vunpack.c.l.b16 %v1240
    %v1916 = vunpack.c.h.b16 %v1240
    %v1917 = vunpack.c.l.b16 %v1241
    %v1918 = vunpack.c.h.b16 %v1241
    %v1919 = vunpack.c.l.b16 %v1242
    %v1920 = vunpack.c.h.b16 %v1242
    %v1921 = vunpack.c.l.b16 %v1243
    %v1922 = vunpack.c.h.b16 %v1243
    %v1923 = vunpack.c.l.b16 %v1244
    %v1924 = vunpack.c.h.b16 %v1244
    %v1925 = vunpack.c.l.b16 %v1245
    %v1926 = vunpack.c.h.b16 %v1245
    %v1927 = vunpack.c.l.b16 %v1246
    %v1928 = vunpack.c.h.b16 %v1246
    %v1929 = vunpack.c.l.b16 %v1247
    %v1930 = vunpack.c.h.b16 %v1247
    %v1931 = vunpack.c.l.b16 %v1248
    %v1932 = vunpack.c.h.b16 %v1248
    %v1933 = vunpack.c.l.b16 %v1249
    %v1934 = vunpack.c.h.b16 %v1249
    %v1935 = vunpack.c.l.b16 %v1250
    %v1936 = vunpack.c.h.b16 %v1250
    %v1937 = vunpack.c.l.b16 %v1251
    %v1938 = vunpack.c.h.b16 %v1251
    %v1939 = vunpack.c.l.b16 %v1252
    %v1940 = vunpack.c.h.b16 %v1252
    %v1941 = vunpack.c.l.b16 %v1253
    %v1942 = vunpack.c.h.b16 %v1253
    %v1943 = vunpack.c.l.b16 %v1254
    %v1944 = vunpack.c.h.b16 %v1254
    %v1945 = vunpack.c.l.b16 %v1255
    %v1946 = vunpack.c.h.b16 %v1255
    %v1947 = vunpack.c.l.b16 %v1256
    %v1948 = vunpack.c.h.b16 %v1256
    %v1949 = vunpack.c.l.b16 %v1257
    %v1950 = vunpack.c.h.b16 %v1257
    %v1951 = vunpack.c.l.b16 %v1258
    %v1952 = vunpack.c.h.b16 %v1258
    %v1953 = vunpack.c.l.b16 %v1259
    %v1954 = vunpack.c.h.b16 %v1259
    %v1955 = vunpack.c.l.b16 %v1260
    %v1956 = vunpack.c.h.b16 %v1260
    %v1957 = vunpack.c.l.b16 %v1261
    %v1958 = vunpack.c.h.b16 %v1261
    %v1959 = vunpack.c.l.b16 %v1262
    %v1960 = vunpack.c.h.b16 %v1262
    %v1961 = vunpack.c.l.b16 %v1263
    %v1962 = vunpack.c.h.b16 %v1263
    %v1963 = vunpack.c.l.b16 %v1264
    %v1964 = vunpack.c.h.b16 %v1264
    %v1965 = vunpack.c.l.b16 %v1265
    %v1966 = vunpack.c.h.b16 %v1265
    %v1967 = vunpack.c.l.b16 %v1266
    %v1968 = vunpack.c.h.b16 %v1266
    %v1969 = vunpack.c.l.b16 %v1267
    %v1970 = vunpack.c.h.b16 %v1267
    %v1971 = vunpack.c.l.b16 %v1268
    %v1972 = vunpack.c.h.b16 %v1268
    %v1973 = vunpack.c.l.b16 %v1269
    %v1974 = vunpack.c.h.b16 %v1269
    %v1975 = vunpack.c.l.b16 %v1270
    %v1976 = vunpack.c.h.b16 %v1270
    %v1977 = vunpack.c.l.b16 %v1271
    %v1978 = vunpack.c.h.b16 %v1271
    %v1979 = vunpack.c.l.b16 %v1272
    %v1980 = vunpack.c.h.b16 %v1272
    %v1981 = vunpack.c.l.b16 %v1273
    %v1982 = vunpack.c.h.b16 %v1273
    %v1983 = vunpack.c.l.b16 %v1274
    %v1984 = vunpack.c.h.b16 %v1274
    %v1985 = vunpack.c.l.b16 %v1275
    %v1986 = vunpack.c.h.b16 %v1275
    %v1987 = vunpack.c.l.b16 %v1276
    %v1988 = vunpack.c.h.b16 %v1276
    %v1989 = vunpack.c.l.b16 %v1277
    %v1990 = vunpack.c.h.b16 %v1277
    %v1991 = vunpack.c.l.b16 %v1278
    %v1992 = vunpack.c.h.b16 %v1278
    %v1993 = vunpack.c.l.b16 %v1279
    %v1994 = vunpack.c.h.b16 %v1279
    %v1995 = vunpack.c.l.b16 %v1280
    %v1996 = vunpack.c.h.b16 %v1280
    %v1997 = vunpack.c.l.b16 %v1281
    %v1998 = vunpack.c.h.b16 %v1281
    %v1999 = vunpack.c.l.b16 %v1282
    %v2000 = vunpack.c.h.b16 %v1282
    %v2001 = vunpack.c.l.b16 %v1283
    %v2002 = vunpack.c.h.b16 %v1283
    %v2003 = vunpack.c.l.b16 %v1284
    %v2004 = vunpack.c.h.b16 %v1284
    %v2005 = vunpack.c.l.b16 %v1285
    %v2006 = vunpack.c.h.b16 %v1285
    %v2007 = vunpack.c.l.b16 %v1286
    %v2008 = vunpack.c.h.b16 %v1286
    %v2009 = vunpack.c.l.b16 %v1287
    %v2010 = vunpack.c.h.b16 %v1287
    %v2011 = vunpack.c.l.b16 %v1288
    %v2012 = vunpack.c.h.b16 %v1288
    %v2013 = vunpack.c.l.b16 %v1289
    %v2014 = vunpack.c.h.b16 %v1289
    %v2015 = vunpack.c.l.b16 %v1290
    %v2016 = vunpack.c.h.b16 %v1290
    %v2017 = vunpack.c.l.b16 %v1291
    %v2018 = vunpack.c.h.b16 %v1291
    %v2019 = vunpack.c.l.b16 %v1292
    %v2020 = vunpack.c.h.b16 %v1292
    %v2021 = vunpack.c.l.b16 %v1293
    %v2022 = vunpack.c.h.b16 %v1293
    %v2023 = vunpack.c.l.b16 %v1294
    %v2024 = vunpack.c.h.b16 %v1294
    %v2025 = vunpack.c.l.b16 %v1295
    %v2026 = vunpack.c.h.b16 %v1295
    %v2027 = vunpack.c.l.b16 %v1296
    %v2028 = vunpack.c.h.b16 %v1296
    %v2029 = vunpack.c.l.b16 %v1297
    %v2030 = vunpack.c.h.b16 %v1297
    %v2031 = vunpack.c.l.b16 %v1298
    %v2032 = vunpack.c.h.b16 %v1298
    %v2033 = vunpack.c.l.b16 %v1299
    %v2034 = vunpack.c.h.b16 %v1299
    %v2035 = vunpack.c.l.b16 %v1300
    %v2036 = vunpack.c.h.b16 %v1300
    %v2037 = vunpack.c.l.b16 %v1301
    %v2038 = vunpack.c.h.b16 %v1301
    %v2039 = vunpack.c.l.b16 %v1302
    %v2040 = vunpack.c.h.b16 %v1302
    %v2041 = vunpack.c.l.b16 %v1303
    %v2042 = vunpack.c.h.b16 %v1303
    %v2043 = vunpack.c.l.b16 %v1304
    %v2044 = vunpack.c.h.b16 %v1304
    %v2045 = vunpack.c.l.b16 %v1305
    %v2046 = vunpack.c.h.b16 %v1305
    %v2047 = vunpack.c.l.b16 %v1306
    %v2048 = vunpack.c.h.b16 %v1306
    %v2049 = vunpack.c.l.b16 %v1307
    %v2050 = vunpack.c.h.b16 %v1307
    %v2051 = vunpack.c.l.b16 %v1308
    %v2052 = vunpack.c.h.b16 %v1308
    %v2053 = vunpack.c.l.b16 %v1309
    %v2054 = vunpack.c.h.b16 %v1309
    %v2055 = vunpack.c.l.b16 %v1310
    %v2056 = vunpack.c.h.b16 %v1310
    %v2057 = vunpack.c.l.b16 %v1311
    %v2058 = vunpack.c.h.b16 %v1311
    %v2059 = vunpack.c.l.b16 %v1312
    %v2060 = vunpack.c.h.b16 %v1312
    %v2061 = vunpack.c.l.b16 %v1313
    %v2062 = vunpack.c.h.b16 %v1313
    %v2063 = vunpack.c.l.b16 %v1314
    %v2064 = vunpack.c.h.b16 %v1314
    %v2065 = vunpack.c.l.b16 %v1315
    %v2066 = vunpack.c.h.b16 %v1315
    %v2067 = vunpack.c.l.b16 %v1316
    %v2068 = vunpack.c.h.b16 %v1316
    %v2069 = vunpack.c.l.b16 %v1317
    %v2070 = vunpack.c.h.b16 %v1317
    %v2071 = vunpack.c.l.b16 %v1318
    %v2072 = vunpack.c.h.b16 %v1318
    %v2073 = vunpack.c.l.b16 %v1319
    %v2074 = vunpack.c.h.b16 %v1319
    %v2075 = vunpack.c.l.b16 %v1320
    %v2076 = vunpack.c.h.b16 %v1320
    %v2077 = vunpack.c.l.b16 %v1321
    %v2078 = vunpack.c.h.b16 %v1321
    %v2079 = vunpack.c.l.b16 %v1322
    %v2080 = vunpack.c.h.b16 %v1322
    %v2081 = vunpack.c.l.b16 %v1323
    %v2082 = vunpack.c.h.b16 %v1323
    %v2083 = vunpack.c.l.b16 %v1324
    %v2084 = vunpack.c.h.b16 %v1324
    %v2085 = vunpack.c.l.b16 %v1325
    %v2086 = vunpack.c.h.b16 %v1325
    %v2087 = vunpack.c.l.b16 %v1326
    %v2088 = vunpack.c.h.b16 %v1326
    %v2089 = vunpack.c.l.b16 %v1327
    %v2090 = vunpack.c.h.b16 %v1327
    %v2091 = vunpack.c.l.b16 %v1328
    %v2092 = vunpack.c.h.b16 %v1328
    %v2093 = vunpack.c.l.b16 %v1329
    %v2094 = vunpack.c.h.b16 %v1329
    %v2095 = vunpack.c.l.b16 %v1330
    %v2096 = vunpack.c.h.b16 %v1330
    %v2097 = vunpack.c.l.b16 %v1331
    %v2098 = vunpack.c.h.b16 %v1331
    %v2099 = vunpack.c.l.b16 %v1332
    %v2100 = vunpack.c.h.b16 %v1332
    %v2101 = vunpack.c.l.b16 %v1333
    %v2102 = vunpack.c.h.b16 %v1333
    %v2103 = vunpack.c.l.b16 %v1334
    %v2104 = vunpack.c.h.b16 %v1334
    %v2105 = vunpack.c.l.b16 %v1335
    %v2106 = vunpack.c.h.b16 %v1335
    %v2107 = vunpack.c.l.b16 %v1336
    %v2108 = vunpack.c.h.b16 %v1336
    %v2109 = vpack.c.b16 %v1605, %v1597
    %v2110 = vpack.c.b16 %v1606, %v1598
    %v2111 = vpack.c.b16 %v1607, %v1599
    %v2112 = vpack.c.b16 %v1608, %v1600
    %v2113 = vpack.c.b16 %v1609, %v1601
    %v2114 = vpack.c.b16 %v1610, %v1602
    %v2115 = vpack.c.b16 %v1611, %v1603
    %v2116 = vpack.c.b16 %v1612, %v1604
    %v2117 = vpack.c.b16 %v1621, %v1613
    %v2118 = vpack.c.b16 %v1622, %v1614
    %v2119 = vpack.c.b16 %v1623, %v1615
    %v2120 = vpack.c.b16 %v1624, %v1616
    %v2121 = vpack.c.b16 %v1625, %v1617
    %v2122 = vpack.c.b16 %v1626, %v1618
    %v2123 = vpack.c.b16 %v1627, %v1619
    %v2124 = vpack.c.b16 %v1628, %v1620
    %v2125 = vpack.c.b16 %v1637, %v1629
    %v2126 = vpack.c.b16 %v1638, %v1630
    %v2127 = vpack.c.b16 %v1639, %v1631
    %v2128 = vpack.c.b16 %v1640, %v1632
    %v2129 = vpack.c.b16 %v1641, %v1633
    %v2130 = vpack.c.b16 %v1642, %v1634
    %v2131 = vpack.c.b16 %v1643, %v1635
    %v2132 = vpack.c.b16 %v1644, %v1636
    %v2133 = vpack.c.b16 %v1653, %v1645
    %v2134 = vpack.c.b16 %v1654, %v1646
    %v2135 = vpack.c.b16 %v1655, %v1647
    %v2136 = vpack.c.b16 %v1656, %v1648
    %v2137 = vpack.c.b16 %v1657, %v1649
    %v2138 = vpack.c.b16 %v1658, %v1650
    %v2139 = vpack.c.b16 %v1659, %v1651
    %v2140 = vpack.c.b16 %v1660, %v1652
    %v2141 = vpack.c.b16 %v1669, %v1661
    %v2142 = vpack.c.b16 %v1670, %v1662
    %v2143 = vpack.c.b16 %v1671, %v1663
    %v2144 = vpack.c.b16 %v1672, %v1664
    %v2145 = vpack.c.b16 %v1673, %v1665
    %v2146 = vpack.c.b16 %v1674, %v1666
    %v2147 = vpack.c.b16 %v1675, %v1667
    %v2148 = vpack.c.b16 %v1676, %v1668
    %v2149 = vpack.c.b16 %v1685, %v1677
    %v2150 = vpack.c.b16 %v1686, %v1678
    %v2151 = vpack.c.b16 %v1687, %v1679
    %v2152 = vpack.c.b16 %v1688, %v1680
    %v2153 = vpack.c.b16 %v1689, %v1681
    %v2154 = vpack.c.b16 %v1690, %v1682
    %v2155 = vpack.c.b16 %v1691, %v1683
    %v2156 = vpack.c.b16 %v1692, %v1684
    %v2157 = vpack.c.b16 %v1701, %v1693
    %v2158 = vpack.c.b16 %v1702, %v1694
    %v2159 = vpack.c.b16 %v1703, %v1695
    %v2160 = vpack.c.b16 %v1704, %v1696
    %v2161 = vpack.c.b16 %v1705, %v1697
    %v2162 = vpack.c.b16 %v1706, %v1698
    %v2163 = vpack.c.b16 %v1707, %v1699
    %v2164 = vpack.c.b16 %v1708, %v1700
    %v2165 = vpack.c.b16 %v1717, %v1709
    %v2166 = vpack.c.b16 %v1718, %v1710
    %v2167 = vpack.c.b16 %v1719, %v1711
    %v2168 = vpack.c.b16 %v1720, %v1712
    %v2169 = vpack.c.b16 %v1721, %v1713
    %v2170 = vpack.c.b16 %v1722, %v1714
    %v2171 = vpack.c.b16 %v1723, %v1715
    %v2172 = vpack.c.b16 %v1724, %v1716
    %v2173 = vpack.c.b16 %v1733, %v1725
    %v2174 = vpack.c.b16 %v1734, %v1726
    %v2175 = vpack.c.b16 %v1735, %v1727
    %v2176 = vpack.c.b16 %v1736, %v1728
    %v2177 = vpack.c.b16 %v1737, %v1729
    %v2178 = vpack.c.b16 %v1738, %v1730
    %v2179 = vpack.c.b16 %v1739, %v1731
    %v2180 = vpack.c.b16 %v1740, %v1732
    %v2181 = vpack.c.b16 %v1749, %v1741
    %v2182 = vpack.c.b16 %v1750, %v1742
    %v2183 = vpack.c.b16 %v1751, %v1743
    %v2184 = vpack.c.b16 %v1752, %v1744
    %v2185 = vpack.c.b16 %v1753, %v1745
    %v2186 = vpack.c.b16 %v1754, %v1746
    %v2187 = vpack.c.b16 %v1755, %v1747
    %v2188 = vpack.c.b16 %v1756, %v1748
    %v2189 = vpack.c.b16 %v1765, %v1757
    %v2190 = vpack.c.b16 %v1766, %v1758
    %v2191 = vpack.c.b16 %v1767, %v1759
    %v2192 = vpack.c.b16 %v1768, %v1760
    %v2193 = vpack.c.b16 %v1769, %v1761
    %v2194 = vpack.c.b16 %v1770, %v1762
    %v2195 = vpack.c.b16 %v1771, %v1763
    %v2196 = vpack.c.b16 %v1772, %v1764
    %v2197 = vpack.c.b16 %v1781, %v1773
    %v2198 = vpack.c.b16 %v1782, %v1774
    %v2199 = vpack.c.b16 %v1783, %v1775
    %v2200 = vpack.c.b16 %v1784, %v1776
    %v2201 = vpack.c.b16 %v1785, %v1777
    %v2202 = vpack.c.b16 %v1786, %v1778
    %v2203 = vpack.c.b16 %v1787, %v1779
    %v2204 = vpack.c.b16 %v1788, %v1780
    %v2205 = vpack.c.b16 %v1797, %v1789
    %v2206 = vpack.c.b16 %v1798, %v1790
    %v2207 = vpack.c.b16 %v1799, %v1791
    %v2208 = vpack.c.b16 %v1800, %v1792
    %v2209 = vpack.c.b16 %v1801, %v1793
    %v2210 = vpack.c.b16 %v1802, %v1794
    %v2211 = vpack.c.b16 %v1803, %v1795
    %v2212 = vpack.c.b16 %v1804, %v1796
    %v2213 = vpack.c.b16 %v1813, %v1805
    %v2214 = vpack.c.b16 %v1814, %v1806
    %v2215 = vpack.c.b16 %v1815, %v1807
    %v2216 = vpack.c.b16 %v1816, %v1808
    %v2217 = vpack.c.b16 %v1817, %v1809
    %v2218 = vpack.c.b16 %v1818, %v1810
    %v2219 = vpack.c.b16 %v1819, %v1811
    %v2220 = vpack.c.b16 %v1820, %v1812
    %v2221 = vpack.c.b16 %v1829, %v1821
    %v2222 = vpack.c.b16 %v1830, %v1822
    %v2223 = vpack.c.b16 %v1831, %v1823
    %v2224 = vpack.c.b16 %v1832, %v1824
    %v2225 = vpack.c.b16 %v1833, %v1825
    %v2226 = vpack.c.b16 %v1834, %v1826
    %v2227 = vpack.c.b16 %v1835, %v1827
    %v2228 = vpack.c.b16 %v1836, %v1828
    %v2229 = vpack.c.b16 %v1845, %v1837
    %v2230 = vpack.c.b16 %v1846, %v1838
    %v2231 = vpack.c.b16 %v1847, %v1839
    %v2232 = vpack.c.b16 %v1848, %v1840
    %v2233 = vpack.c.b16 %v1849, %v1841
    %v2234 = vpack.c.b16 %v1850, %v1842
    %v2235 = vpack.c.b16 %v1851, %v1843
    %v2236 = vpack.c.b16 %v1852, %v1844
    %v2237 = vpack.c.b16 %v1861, %v1853
    %v2238 = vpack.c.b16 %v1862, %v1854
    %v2239 = vpack.c.b16 %v1863, %v1855
    %v2240 = vpack.c.b16 %v1864, %v1856
    %v2241 = vpack.c.b16 %v1865, %v1857
    %v2242 = vpack.c.b16 %v1866, %v1858
    %v2243 = vpack.c.b16 %v1867, %v1859
    %v2244 = vpack.c.b16 %v1868, %v1860
    %v2245 = vpack.c.b16 %v1877, %v1869
    %v2246 = vpack.c.b16 %v1878, %v1870
    %v2247 = vpack.c.b16 %v1879, %v1871
    %v2248 = vpack.c.b16 %v1880, %v1872
    %v2249 = vpack.c.b16 %v1881, %v1873
    %v2250 = vpack.c.b16 %v1882, %v1874
    %v2251 = vpack.c.b16 %v1883, %v1875
    %v2252 = vpack.c.b16 %v1884, %v1876
    %v2253 = vpack.c.b16 %v1893, %v1885
    %v2254 = vpack.c.b16 %v1894, %v1886
    %v2255 = vpack.c.b16 %v1895, %v1887
    %v2256 = vpack.c.b16 %v1896, %v1888
    %v2257 = vpack.c.b16 %v1897, %v1889
    %v2258 = vpack.c.b16 %v1898, %v1890
    %v2259 = vpack.c.b16 %v1899, %v1891
    %v2260 = vpack.c.b16 %v1900, %v1892
    %v2261 = vpack.c.b16 %v1909, %v1901
    %v2262 = vpack.c.b16 %v1910, %v1902
    %v2263 = vpack.c.b16 %v1911, %v1903
    %v2264 = vpack.c.b16 %v1912, %v1904
    %v2265 = vpack.c.b16 %v1913, %v1905
    %v2266 = vpack.c.b16 %v1914, %v1906
    %v2267 = vpack.c.b16 %v1915, %v1907
    %v2268 = vpack.c.b16 %v1916, %v1908
    %v2269 = vpack.c.b16 %v1925, %v1917
    %v2270 = vpack.c.b16 %v1926, %v1918
    %v2271 = vpack.c.b16 %v1927, %v1919
    %v2272 = vpack.c.b16 %v1928, %v1920
    %v2273 = vpack.c.b16 %v1929, %v1921
    %v2274 = vpack.c.b16 %v1930, %v1922
    %v2275 = vpack.c.b16 %v1931, %v1923
    %v2276 = vpack.c.b16 %v1932, %v1924
    %v2277 = vpack.c.b16 %v1941, %v1933
    %v2278 = vpack.c.b16 %v1942, %v1934
    %v2279 = vpack.c.b16 %v1943, %v1935
    %v2280 = vpack.c.b16 %v1944, %v1936
    %v2281 = vpack.c.b16 %v1945, %v1937
    %v2282 = vpack.c.b16 %v1946, %v1938
    %v2283 = vpack.c.b16 %v1947, %v1939
    %v2284 = vpack.c.b16 %v1948, %v1940
    %v2285 = vpack.c.b16 %v1957, %v1949
    %v2286 = vpack.c.b16 %v1958, %v1950
    %v2287 = vpack.c.b16 %v1959, %v1951
    %v2288 = vpack.c.b16 %v1960, %v1952
    %v2289 = vpack.c.b16 %v1961, %v1953
    %v2290 = vpack.c.b16 %v1962, %v1954
    %v2291 = vpack.c.b16 %v1963, %v1955
    %v2292 = vpack.c.b16 %v1964, %v1956
    %v2293 = vpack.c.b16 %v1973, %v1965
    %v2294 = vpack.c.b16 %v1974, %v1966
    %v2295 = vpack.c.b16 %v1975, %v1967
    %v2296 = vpack.c.b16 %v1976, %v1968
    %v2297 = vpack.c.b16 %v1977, %v1969
    %v2298 = vpack.c.b16 %v1978, %v1970
    %v2299 = vpack.c.b16 %v1979, %v1971
    %v2300 = vpack.c.b16 %v1980, %v1972
    %v2301 = vpack.c.b16 %v1989, %v1981
    %v2302 = vpack.c.b16 %v1990, %v1982
    %v2303 = vpack.c.b16 %v1991, %v1983
    %v2304 = vpack.c.b16 %v1992, %v1984
    %v2305 = vpack.c.b16 %v1993, %v1985
    %v2306 = vpack.c.b16 %v1994, %v1986
    %v2307 = vpack.c.b16 %v1995, %v1987
    %v2308 = vpack.c.b16 %v1996, %v1988
    %v2309 = vpack.c.b16 %v2005, %v1997
    %v2310 = vpack.c.b16 %v2006, %v1998
    %v2311 = vpack.c.b16 %v2007, %v1999
    %v2312 = vpack.c.b16 %v2008, %v2000
    %v2313 = vpack.c.b16 %v2009, %v2001
    %v2314 = vpack.c.b16 %v2010, %v2002
    %v2315 = vpack.c.b16 %v2011, %v2003
    %v2316 = vpack.c.b16 %v2012, %v2004
    %v2317 = vpack.c.b16 %v2021, %v2013
    %v2318 = vpack.c.b16 %v2022, %v2014
    %v2319 = vpack.c.b16 %v2023, %v2015
    %v2320 = vpack.c.b16 %v2024, %v2016
    %v2321 = vpack.c.b16 %v2025, %v2017
    %v2322 = vpack.c.b16 %v2026, %v2018
    %v2323 = vpack.c.b16 %v2027, %v2019
    %v2324 = vpack.c.b16 %v2028, %v2020
    %v2325 = vpack.c.b16 %v2037, %v2029
    %v2326 = vpack.c.b16 %v2038, %v2030
    %v2327 = vpack.c.b16 %v2039, %v2031
    %v2328 = vpack.c.b16 %v2040, %v2032
    %v2329 = vpack.c.b16 %v2041, %v2033
    %v2330 = vpack.c.b16 %v2042, %v2034
    %v2331 = vpack.c.b16 %v2043, %v2035
    %v2332 = vpack.c.b16 %v2044, %v2036
    %v2333 = vpack.c.b16 %v2053, %v2045
    %v2334 = vpack.c.b16 %v2054, %v2046
    %v2335 = vpack.c.b16 %v2055, %v2047
    %v2336 = vpack.c.b16 %v2056, %v2048
    %v2337 = vpack.c.b16 %v2057, %v2049
    %v2338 = vpack.c.b16 %v2058, %v2050
    %v2339 = vpack.c.b16 %v2059, %v2051
    %v2340 = vpack.c.b16 %v2060, %v2052
    %v2341 = vpack.c.b16 %v2069, %v2061
    %v2342 = vpack.c.b16 %v2070, %v2062
    %v2343 = vpack.c.b16 %v2071, %v2063
    %v2344 = vpack.c.b16 %v2072, %v2064
    %v2345 = vpack.c.b16 %v2073, %v2065
    %v2346 = vpack.c.b16 %v2074, %v2066
    %v2347 = vpack.c.b16 %v2075, %v2067
    %v2348 = vpack.c.b16 %v2076, %v2068
    %v2349 = vpack.c.b16 %v2085, %v2077
    %v2350 = vpack.c.b16 %v2086, %v2078
    %v2351 = vpack.c.b16 %v2087, %v2079
    %v2352 = vpack.c.b16 %v2088, %v2080
    %v2353 = vpack.c.b16 %v2089, %v2081
    %v2354 = vpack.c.b16 %v2090, %v2082
    %v2355 = vpack.c.b16 %v2091, %v2083
    %v2356 = vpack.c.b16 %v2092, %v2084
    %v2357 = vpack.c.b16 %v2101, %v2093
    %v2358 = vpack.c.b16 %v2102, %v2094
    %v2359 = vpack.c.b16 %v2103, %v2095
    %v2360 = vpack.c.b16 %v2104, %v2096
    %v2361 = vpack.c.b16 %v2105, %v2097
    %v2362 = vpack.c.b16 %v2106, %v2098
    %v2363 = vpack.c.b16 %v2107, %v2099
    %v2364 = vpack.c.b16 %v2108, %v2100
    %2621 = vmatpush.bf16.msra.mxu0 %v2165
    %2622 = vmatpush.bf16.msra.mxu0 %v2157
    %2623 = vmatpush.bf16.msra.mxu0 %v2149
    %2624 = vmatpush.bf16.msra.mxu0 %v2141
    %2625 = vmatpush.bf16.msra.mxu0 %v2133
    %2626 = vmatpush.bf16.msra.mxu0 %v2125
    %2627 = vmatpush.bf16.msra.mxu0 %v2117
    %2628 = vmatpush.bf16.msra.mxu0 %v2109
    %2629 = vmatmul.bf16.gmra.mxu0 %v1337
    %v2630 = vpop.f32.mrf.mxu0
    %v2631 = vadd.f32 0.0, %v2630
    %v2632 = vpop.f32.mrf.mxu0
    %2633 = vdwg.mxu0
    %2634 = vmatpush.bf16.msra.mxu0 %v2229
    %2635 = vmatpush.bf16.msra.mxu0 %v2221
    %2636 = vmatpush.bf16.msra.mxu0 %v2213
    %2637 = vmatpush.bf16.msra.mxu0 %v2205
    %2638 = vmatpush.bf16.msra.mxu0 %v2197
    %2639 = vmatpush.bf16.msra.mxu0 %v2189
    %2640 = vmatpush.bf16.msra.mxu0 %v2181
    %2641 = vmatpush.bf16.msra.mxu0 %v2173
    %2642 = vmatmul.bf16.gmra.mxu0 %v1338
    %v2643 = vpop.f32.mrf.mxu0
    %v2644 = vadd.f32 %v2631, %v2643
    %v2645 = vpop.f32.mrf.mxu0
    %2646 = vdwg.mxu0
    %2647 = vmatpush.bf16.msra.mxu0 %v2293
    %2648 = vmatpush.bf16.msra.mxu0 %v2285
    %2649 = vmatpush.bf16.msra.mxu0 %v2277
    %2650 = vmatpush.bf16.msra.mxu0 %v2269
    %2651 = vmatpush.bf16.msra.mxu0 %v2261
    %2652 = vmatpush.bf16.msra.mxu0 %v2253
    %2653 = vmatpush.bf16.msra.mxu0 %v2245
    %2654 = vmatpush.bf16.msra.mxu0 %v2237
    %2655 = vmatmul.bf16.gmra.mxu0 %v1339
    %v2656 = vpop.f32.mrf.mxu0
    %v2657 = vadd.f32 %v2644, %v2656
    %v2658 = vpop.f32.mrf.mxu0
    %2659 = vdwg.mxu0
    %2660 = vmatpush.bf16.msra.mxu0 %v2357
    %2661 = vmatpush.bf16.msra.mxu0 %v2349
    %2662 = vmatpush.bf16.msra.mxu0 %v2341
    %2663 = vmatpush.bf16.msra.mxu0 %v2333
    %2664 = vmatpush.bf16.msra.mxu0 %v2325
    %2665 = vmatpush.bf16.msra.mxu0 %v2317
    %2666 = vmatpush.bf16.msra.mxu0 %v2309
    %2667 = vmatpush.bf16.msra.mxu0 %v2301
    %2668 = vmatmul.bf16.gmra.mxu0 %v1340
    %v2669 = vpop.f32.mrf.mxu0
    %v2670 = vadd.f32 %v2657, %v2669
    %v2671 = vpop.f32.mrf.mxu0
    %2672 = vdwg.mxu0
    %2673 = vmatpush.bf16.msra.mxu0 %v2166
    %2674 = vmatpush.bf16.msra.mxu0 %v2158
    %2675 = vmatpush.bf16.msra.mxu0 %v2150
    %2676 = vmatpush.bf16.msra.mxu0 %v2142
    %2677 = vmatpush.bf16.msra.mxu0 %v2134
    %2678 = vmatpush.bf16.msra.mxu0 %v2126
    %2679 = vmatpush.bf16.msra.mxu0 %v2118
    %2680 = vmatpush.bf16.msra.mxu0 %v2110
    %2681 = vmatmul.bf16.gmra.mxu0 %v1337
    %v2682 = vpop.f32.mrf.mxu0
    %v2683 = vadd.f32 0.0, %v2682
    %v2684 = vpop.f32.mrf.mxu0
    %2685 = vdwg.mxu0
    %2686 = vmatpush.bf16.msra.mxu0 %v2230
    %2687 = vmatpush.bf16.msra.mxu0 %v2222
    %2688 = vmatpush.bf16.msra.mxu0 %v2214
    %2689 = vmatpush.bf16.msra.mxu0 %v2206
    %2690 = vmatpush.bf16.msra.mxu0 %v2198
    %2691 = vmatpush.bf16.msra.mxu0 %v2190
    %2692 = vmatpush.bf16.msra.mxu0 %v2182
    %2693 = vmatpush.bf16.msra.mxu0 %v2174
    %2694 = vmatmul.bf16.gmra.mxu0 %v1338
    %v2695 = vpop.f32.mrf.mxu0
    %v2696 = vadd.f32 %v2683, %v2695
    %v2697 = vpop.f32.mrf.mxu0
    %2698 = vdwg.mxu0
    %2699 = vmatpush.bf16.msra.mxu0 %v2294
    %2700 = vmatpush.bf16.msra.mxu0 %v2286
    %2701 = vmatpush.bf16.msra.mxu0 %v2278
    %2702 = vmatpush.bf16.msra.mxu0 %v2270
    %2703 = vmatpush.bf16.msra.mxu0 %v2262
    %2704 = vmatpush.bf16.msra.mxu0 %v2254
    %2705 = vmatpush.bf16.msra.mxu0 %v2246
    %2706 = vmatpush.bf16.msra.mxu0 %v2238
    %2707 = vmatmul.bf16.gmra.mxu0 %v1339
    %v2708 = vpop.f32.mrf.mxu0
    %v2709 = vadd.f32 %v2696, %v2708
    %v2710 = vpop.f32.mrf.mxu0
    %2711 = vdwg.mxu0
    %2712 = vmatpush.bf16.msra.mxu0 %v2358
    %2713 = vmatpush.bf16.msra.mxu0 %v2350
    %2714 = vmatpush.bf16.msra.mxu0 %v2342
    %2715 = vmatpush.bf16.msra.mxu0 %v2334
    %2716 = vmatpush.bf16.msra.mxu0 %v2326
    %2717 = vmatpush.bf16.msra.mxu0 %v2318
    %2718 = vmatpush.bf16.msra.mxu0 %v2310
    %2719 = vmatpush.bf16.msra.mxu0 %v2302
    %2720 = vmatmul.bf16.gmra.mxu0 %v1340
    %v2721 = vpop.f32.mrf.mxu0
    %v2722 = vadd.f32 %v2709, %v2721
    %v2723 = vpop.f32.mrf.mxu0
    %2724 = vdwg.mxu0
    %2725 = vmatpush.bf16.msra.mxu0 %v2167
    %2726 = vmatpush.bf16.msra.mxu0 %v2159
    %2727 = vmatpush.bf16.msra.mxu0 %v2151
    %2728 = vmatpush.bf16.msra.mxu0 %v2143
    %2729 = vmatpush.bf16.msra.mxu0 %v2135
    %2730 = vmatpush.bf16.msra.mxu0 %v2127
    %2731 = vmatpush.bf16.msra.mxu0 %v2119
    %2732 = vmatpush.bf16.msra.mxu0 %v2111
    %2733 = vmatmul.bf16.gmra.mxu0 %v1337
    %v2734 = vpop.f32.mrf.mxu0
    %v2735 = vadd.f32 0.0, %v2734
    %v2736 = vpop.f32.mrf.mxu0
    %2737 = vdwg.mxu0
    %2738 = vmatpush.bf16.msra.mxu0 %v2231
    %2739 = vmatpush.bf16.msra.mxu0 %v2223
    %2740 = vmatpush.bf16.msra.mxu0 %v2215
    %2741 = vmatpush.bf16.msra.mxu0 %v2207
    %2742 = vmatpush.bf16.msra.mxu0 %v2199
    %2743 = vmatpush.bf16.msra.mxu0 %v2191
    %2744 = vmatpush.bf16.msra.mxu0 %v2183
    %2745 = vmatpush.bf16.msra.mxu0 %v2175
    %2746 = vmatmul.bf16.gmra.mxu0 %v1338
    %v2747 = vpop.f32.mrf.mxu0
    %v2748 = vadd.f32 %v2735, %v2747
    %v2749 = vpop.f32.mrf.mxu0
    %2750 = vdwg.mxu0
    %2751 = vmatpush.bf16.msra.mxu0 %v2295
    %2752 = vmatpush.bf16.msra.mxu0 %v2287
    %2753 = vmatpush.bf16.msra.mxu0 %v2279
    %2754 = vmatpush.bf16.msra.mxu0 %v2271
    %2755 = vmatpush.bf16.msra.mxu0 %v2263
    %2756 = vmatpush.bf16.msra.mxu0 %v2255
    %2757 = vmatpush.bf16.msra.mxu0 %v2247
    %2758 = vmatpush.bf16.msra.mxu0 %v2239
    %2759 = vmatmul.bf16.gmra.mxu0 %v1339
    %v2760 = vpop.f32.mrf.mxu0
    %v2761 = vadd.f32 %v2748, %v2760
    %v2762 = vpop.f32.mrf.mxu0
    %2763 = vdwg.mxu0
    %2764 = vmatpush.bf16.msra.mxu0 %v2359
    %2765 = vmatpush.bf16.msra.mxu0 %v2351
    %2766 = vmatpush.bf16.msra.mxu0 %v2343
    %2767 = vmatpush.bf16.msra.mxu0 %v2335
    %2768 = vmatpush.bf16.msra.mxu0 %v2327
    %2769 = vmatpush.bf16.msra.mxu0 %v2319
    %2770 = vmatpush.bf16.msra.mxu0 %v2311
    %2771 = vmatpush.bf16.msra.mxu0 %v2303
    %2772 = vmatmul.bf16.gmra.mxu0 %v1340
    %v2773 = vpop.f32.mrf.mxu0
    %v2774 = vadd.f32 %v2761, %v2773
    %v2775 = vpop.f32.mrf.mxu0
    %2776 = vdwg.mxu0
    %2777 = vmatpush.bf16.msra.mxu0 %v2168
    %2778 = vmatpush.bf16.msra.mxu0 %v2160
    %2779 = vmatpush.bf16.msra.mxu0 %v2152
    %2780 = vmatpush.bf16.msra.mxu0 %v2144
    %2781 = vmatpush.bf16.msra.mxu0 %v2136
    %2782 = vmatpush.bf16.msra.mxu0 %v2128
    %2783 = vmatpush.bf16.msra.mxu0 %v2120
    %2784 = vmatpush.bf16.msra.mxu0 %v2112
    %2785 = vmatmul.bf16.gmra.mxu0 %v1337
    %v2786 = vpop.f32.mrf.mxu0
    %v2787 = vadd.f32 0.0, %v2786
    %v2788 = vpop.f32.mrf.mxu0
    %2789 = vdwg.mxu0
    %2790 = vmatpush.bf16.msra.mxu0 %v2232
    %2791 = vmatpush.bf16.msra.mxu0 %v2224
    %2792 = vmatpush.bf16.msra.mxu0 %v2216
    %2793 = vmatpush.bf16.msra.mxu0 %v2208
    %2794 = vmatpush.bf16.msra.mxu0 %v2200
    %2795 = vmatpush.bf16.msra.mxu0 %v2192
    %2796 = vmatpush.bf16.msra.mxu0 %v2184
    %2797 = vmatpush.bf16.msra.mxu0 %v2176
    %2798 = vmatmul.bf16.gmra.mxu0 %v1338
    %v2799 = vpop.f32.mrf.mxu0
    %v2800 = vadd.f32 %v2787, %v2799
    %v2801 = vpop.f32.mrf.mxu0
    %2802 = vdwg.mxu0
    %2803 = vmatpush.bf16.msra.mxu0 %v2296
    %2804 = vmatpush.bf16.msra.mxu0 %v2288
    %2805 = vmatpush.bf16.msra.mxu0 %v2280
    %2806 = vmatpush.bf16.msra.mxu0 %v2272
    %2807 = vmatpush.bf16.msra.mxu0 %v2264
    %2808 = vmatpush.bf16.msra.mxu0 %v2256
    %2809 = vmatpush.bf16.msra.mxu0 %v2248
    %2810 = vmatpush.bf16.msra.mxu0 %v2240
    %2811 = vmatmul.bf16.gmra.mxu0 %v1339
    %v2812 = vpop.f32.mrf.mxu0
    %v2813 = vadd.f32 %v2800, %v2812
    %v2814 = vpop.f32.mrf.mxu0
    %2815 = vdwg.mxu0
    %2816 = vmatpush.bf16.msra.mxu0 %v2360
    %2817 = vmatpush.bf16.msra.mxu0 %v2352
    %2818 = vmatpush.bf16.msra.mxu0 %v2344
    %2819 = vmatpush.bf16.msra.mxu0 %v2336
    %2820 = vmatpush.bf16.msra.mxu0 %v2328
    %2821 = vmatpush.bf16.msra.mxu0 %v2320
    %2822 = vmatpush.bf16.msra.mxu0 %v2312
    %2823 = vmatpush.bf16.msra.mxu0 %v2304
    %2824 = vmatmul.bf16.gmra.mxu0 %v1340
    %v2825 = vpop.f32.mrf.mxu0
    %v2826 = vadd.f32 %v2813, %v2825
    %v2827 = vpop.f32.mrf.mxu0
    %2828 = vdwg.mxu0
    %2829 = vmatpush.bf16.msra.mxu0 %v2169
    %2830 = vmatpush.bf16.msra.mxu0 %v2161
    %2831 = vmatpush.bf16.msra.mxu0 %v2153
    %2832 = vmatpush.bf16.msra.mxu0 %v2145
    %2833 = vmatpush.bf16.msra.mxu0 %v2137
    %2834 = vmatpush.bf16.msra.mxu0 %v2129
    %2835 = vmatpush.bf16.msra.mxu0 %v2121
    %2836 = vmatpush.bf16.msra.mxu0 %v2113
    %2837 = vmatmul.bf16.gmra.mxu0 %v1337
    %v2838 = vpop.f32.mrf.mxu0
    %v2839 = vadd.f32 0.0, %v2838
    %v2840 = vpop.f32.mrf.mxu0
    %2841 = vdwg.mxu0
    %2842 = vmatpush.bf16.msra.mxu0 %v2233
    %2843 = vmatpush.bf16.msra.mxu0 %v2225
    %2844 = vmatpush.bf16.msra.mxu0 %v2217
    %2845 = vmatpush.bf16.msra.mxu0 %v2209
    %2846 = vmatpush.bf16.msra.mxu0 %v2201
    %2847 = vmatpush.bf16.msra.mxu0 %v2193
    %2848 = vmatpush.bf16.msra.mxu0 %v2185
    %2849 = vmatpush.bf16.msra.mxu0 %v2177
    %2850 = vmatmul.bf16.gmra.mxu0 %v1338
    %v2851 = vpop.f32.mrf.mxu0
    %v2852 = vadd.f32 %v2839, %v2851
    %v2853 = vpop.f32.mrf.mxu0
    %2854 = vdwg.mxu0
    %2855 = vmatpush.bf16.msra.mxu0 %v2297
    %2856 = vmatpush.bf16.msra.mxu0 %v2289
    %2857 = vmatpush.bf16.msra.mxu0 %v2281
    %2858 = vmatpush.bf16.msra.mxu0 %v2273
    %2859 = vmatpush.bf16.msra.mxu0 %v2265
    %2860 = vmatpush.bf16.msra.mxu0 %v2257
    %2861 = vmatpush.bf16.msra.mxu0 %v2249
    %2862 = vmatpush.bf16.msra.mxu0 %v2241
    %2863 = vmatmul.bf16.gmra.mxu0 %v1339
    %v2864 = vpop.f32.mrf.mxu0
    %v2865 = vadd.f32 %v2852, %v2864
    %v2866 = vpop.f32.mrf.mxu0
    %2867 = vdwg.mxu0
    %2868 = vmatpush.bf16.msra.mxu0 %v2361
    %2869 = vmatpush.bf16.msra.mxu0 %v2353
    %2870 = vmatpush.bf16.msra.mxu0 %v2345
    %2871 = vmatpush.bf16.msra.mxu0 %v2337
    %2872 = vmatpush.bf16.msra.mxu0 %v2329
    %2873 = vmatpush.bf16.msra.mxu0 %v2321
    %2874 = vmatpush.bf16.msra.mxu0 %v2313
    %2875 = vmatpush.bf16.msra.mxu0 %v2305
    %2876 = vmatmul.bf16.gmra.mxu0 %v1340
    %v2877 = vpop.f32.mrf.mxu0
    %v2878 = vadd.f32 %v2865, %v2877
    %v2879 = vpop.f32.mrf.mxu0
    %2880 = vdwg.mxu0
    %2881 = vmatpush.bf16.msra.mxu0 %v2170
    %2882 = vmatpush.bf16.msra.mxu0 %v2162
    %2883 = vmatpush.bf16.msra.mxu0 %v2154
    %2884 = vmatpush.bf16.msra.mxu0 %v2146
    %2885 = vmatpush.bf16.msra.mxu0 %v2138
    %2886 = vmatpush.bf16.msra.mxu0 %v2130
    %2887 = vmatpush.bf16.msra.mxu0 %v2122
    %2888 = vmatpush.bf16.msra.mxu0 %v2114
    %2889 = vmatmul.bf16.gmra.mxu0 %v1337
    %v2890 = vpop.f32.mrf.mxu0
    %v2891 = vadd.f32 0.0, %v2890
    %v2892 = vpop.f32.mrf.mxu0
    %2893 = vdwg.mxu0
    %2894 = vmatpush.bf16.msra.mxu0 %v2234
    %2895 = vmatpush.bf16.msra.mxu0 %v2226
    %2896 = vmatpush.bf16.msra.mxu0 %v2218
    %2897 = vmatpush.bf16.msra.mxu0 %v2210
    %2898 = vmatpush.bf16.msra.mxu0 %v2202
    %2899 = vmatpush.bf16.msra.mxu0 %v2194
    %2900 = vmatpush.bf16.msra.mxu0 %v2186
    %2901 = vmatpush.bf16.msra.mxu0 %v2178
    %2902 = vmatmul.bf16.gmra.mxu0 %v1338
    %v2903 = vpop.f32.mrf.mxu0
    %v2904 = vadd.f32 %v2891, %v2903
    %v2905 = vpop.f32.mrf.mxu0
    %2906 = vdwg.mxu0
    %2907 = vmatpush.bf16.msra.mxu0 %v2298
    %2908 = vmatpush.bf16.msra.mxu0 %v2290
    %2909 = vmatpush.bf16.msra.mxu0 %v2282
    %2910 = vmatpush.bf16.msra.mxu0 %v2274
    %2911 = vmatpush.bf16.msra.mxu0 %v2266
    %2912 = vmatpush.bf16.msra.mxu0 %v2258
    %2913 = vmatpush.bf16.msra.mxu0 %v2250
    %2914 = vmatpush.bf16.msra.mxu0 %v2242
    %2915 = vmatmul.bf16.gmra.mxu0 %v1339
    %v2916 = vpop.f32.mrf.mxu0
    %v2917 = vadd.f32 %v2904, %v2916
    %v2918 = vpop.f32.mrf.mxu0
    %2919 = vdwg.mxu0
    %2920 = vmatpush.bf16.msra.mxu0 %v2362
    %2921 = vmatpush.bf16.msra.mxu0 %v2354
    %2922 = vmatpush.bf16.msra.mxu0 %v2346
    %2923 = vmatpush.bf16.msra.mxu0 %v2338
    %2924 = vmatpush.bf16.msra.mxu0 %v2330
    %2925 = vmatpush.bf16.msra.mxu0 %v2322
    %2926 = vmatpush.bf16.msra.mxu0 %v2314
    %2927 = vmatpush.bf16.msra.mxu0 %v2306
    %2928 = vmatmul.bf16.gmra.mxu0 %v1340
    %v2929 = vpop.f32.mrf.mxu0
    %v2930 = vadd.f32 %v2917, %v2929
    %v2931 = vpop.f32.mrf.mxu0
    %2932 = vdwg.mxu0
    %2933 = vmatpush.bf16.msra.mxu0 %v2171
    %2934 = vmatpush.bf16.msra.mxu0 %v2163
    %2935 = vmatpush.bf16.msra.mxu0 %v2155
    %2936 = vmatpush.bf16.msra.mxu0 %v2147
    %2937 = vmatpush.bf16.msra.mxu0 %v2139
    %2938 = vmatpush.bf16.msra.mxu0 %v2131
    %2939 = vmatpush.bf16.msra.mxu0 %v2123
    %2940 = vmatpush.bf16.msra.mxu0 %v2115
    %2941 = vmatmul.bf16.gmra.mxu0 %v1337
    %v2942 = vpop.f32.mrf.mxu0
    %v2943 = vadd.f32 0.0, %v2942
    %v2944 = vpop.f32.mrf.mxu0
    %2945 = vdwg.mxu0
    %2946 = vmatpush.bf16.msra.mxu0 %v2235
    %2947 = vmatpush.bf16.msra.mxu0 %v2227
    %2948 = vmatpush.bf16.msra.mxu0 %v2219
    %2949 = vmatpush.bf16.msra.mxu0 %v2211
    %2950 = vmatpush.bf16.msra.mxu0 %v2203
    %2951 = vmatpush.bf16.msra.mxu0 %v2195
    %2952 = vmatpush.bf16.msra.mxu0 %v2187
    %2953 = vmatpush.bf16.msra.mxu0 %v2179
    %2954 = vmatmul.bf16.gmra.mxu0 %v1338
    %v2955 = vpop.f32.mrf.mxu0
    %v2956 = vadd.f32 %v2943, %v2955
    %v2957 = vpop.f32.mrf.mxu0
    %2958 = vdwg.mxu0
    %2959 = vmatpush.bf16.msra.mxu0 %v2299
    %2960 = vmatpush.bf16.msra.mxu0 %v2291
    %2961 = vmatpush.bf16.msra.mxu0 %v2283
    %2962 = vmatpush.bf16.msra.mxu0 %v2275
    %2963 = vmatpush.bf16.msra.mxu0 %v2267
    %2964 = vmatpush.bf16.msra.mxu0 %v2259
    %2965 = vmatpush.bf16.msra.mxu0 %v2251
    %2966 = vmatpush.bf16.msra.mxu0 %v2243
    %2967 = vmatmul.bf16.gmra.mxu0 %v1339
    %v2968 = vpop.f32.mrf.mxu0
    %v2969 = vadd.f32 %v2956, %v2968
    %v2970 = vpop.f32.mrf.mxu0
    %2971 = vdwg.mxu0
    %2972 = vmatpush.bf16.msra.mxu0 %v2363
    %2973 = vmatpush.bf16.msra.mxu0 %v2355
    %2974 = vmatpush.bf16.msra.mxu0 %v2347
    %2975 = vmatpush.bf16.msra.mxu0 %v2339
    %2976 = vmatpush.bf16.msra.mxu0 %v2331
    %2977 = vmatpush.bf16.msra.mxu0 %v2323
    %2978 = vmatpush.bf16.msra.mxu0 %v2315
    %2979 = vmatpush.bf16.msra.mxu0 %v2307
    %2980 = vmatmul.bf16.gmra.mxu0 %v1340
    %v2981 = vpop.f32.mrf.mxu0
    %v2982 = vadd.f32 %v2969, %v2981
    %v2983 = vpop.f32.mrf.mxu0
    %2984 = vdwg.mxu0
    %2985 = vmatpush.bf16.msra.mxu0 %v2172
    %2986 = vmatpush.bf16.msra.mxu0 %v2164
    %2987 = vmatpush.bf16.msra.mxu0 %v2156
    %2988 = vmatpush.bf16.msra.mxu0 %v2148
    %2989 = vmatpush.bf16.msra.mxu0 %v2140
    %2990 = vmatpush.bf16.msra.mxu0 %v2132
    %2991 = vmatpush.bf16.msra.mxu0 %v2124
    %2992 = vmatpush.bf16.msra.mxu0 %v2116
    %2993 = vmatmul.bf16.gmra.mxu0 %v1337
    %v2994 = vpop.f32.mrf.mxu0
    %v2995 = vadd.f32 0.0, %v2994
    %v2996 = vpop.f32.mrf.mxu0
    %2997 = vdwg.mxu0
    %2998 = vmatpush.bf16.msra.mxu0 %v2236
    %2999 = vmatpush.bf16.msra.mxu0 %v2228
    %3000 = vmatpush.bf16.msra.mxu0 %v2220
    %3001 = vmatpush.bf16.msra.mxu0 %v2212
    %3002 = vmatpush.bf16.msra.mxu0 %v2204
    %3003 = vmatpush.bf16.msra.mxu0 %v2196
    %3004 = vmatpush.bf16.msra.mxu0 %v2188
    %3005 = vmatpush.bf16.msra.mxu0 %v2180
    %3006 = vmatmul.bf16.gmra.mxu0 %v1338
    %v3007 = vpop.f32.mrf.mxu0
    %v3008 = vadd.f32 %v2995, %v3007
    %v3009 = vpop.f32.mrf.mxu0
    %3010 = vdwg.mxu0
    %3011 = vmatpush.bf16.msra.mxu0 %v2300
    %3012 = vmatpush.bf16.msra.mxu0 %v2292
    %3013 = vmatpush.bf16.msra.mxu0 %v2284
    %3014 = vmatpush.bf16.msra.mxu0 %v2276
    %3015 = vmatpush.bf16.msra.mxu0 %v2268
    %3016 = vmatpush.bf16.msra.mxu0 %v2260
    %3017 = vmatpush.bf16.msra.mxu0 %v2252
    %3018 = vmatpush.bf16.msra.mxu0 %v2244
    %3019 = vmatmul.bf16.gmra.mxu0 %v1339
    %v3020 = vpop.f32.mrf.mxu0
    %v3021 = vadd.f32 %v3008, %v3020
    %v3022 = vpop.f32.mrf.mxu0
    %3023 = vdwg.mxu0
    %3024 = vmatpush.bf16.msra.mxu0 %v2364
    %3025 = vmatpush.bf16.msra.mxu0 %v2356
    %3026 = vmatpush.bf16.msra.mxu0 %v2348
    %3027 = vmatpush.bf16.msra.mxu0 %v2340
    %3028 = vmatpush.bf16.msra.mxu0 %v2332
    %3029 = vmatpush.bf16.msra.mxu0 %v2324
    %3030 = vmatpush.bf16.msra.mxu0 %v2316
    %3031 = vmatpush.bf16.msra.mxu0 %v2308
    %3032 = vmatmul.bf16.gmra.mxu0 %v1340
    %v3033 = vpop.f32.mrf.mxu0
    %v3034 = vadd.f32 %v3021, %v3033
    %v3035 = vpop.f32.mrf.mxu0
    %3036 = vdwg.mxu0
    %v3037 = vld [vmem:[#allocation10 + $0xd] sm:$0xff]
    %v3038 = vld [vmem:[#allocation10 + $0x15] sm:$0xff]
    %v3039 = vrot.slane %v2670, 4
    %v3040 = vadd.f32 %v2670, %v3039
    %v3041 = vrot.slane %v3040, 2
    %v3042 = vadd.f32 %v3040, %v3041
    %v3043 = vrot.slane %v3042, 1
    %v3044 = vadd.f32 %v3042, %v3043
    %v3045 = vrot.slane %v2722, 4
    %v3046 = vadd.f32 %v2722, %v3045
    %v3047 = vrot.slane %v3046, 2
    %v3048 = vadd.f32 %v3046, %v3047
    %v3049 = vrot.slane %v3048, 1
    %v3050 = vadd.f32 %v3048, %v3049
    %v3051 = vrot.slane %v2774, 4
    %v3052 = vadd.f32 %v2774, %v3051
    %v3053 = vrot.slane %v3052, 2
    %v3054 = vadd.f32 %v3052, %v3053
    %v3055 = vrot.slane %v3054, 1
    %v3056 = vadd.f32 %v3054, %v3055
    %v3057 = vrot.slane %v2826, 4
    %v3058 = vadd.f32 %v2826, %v3057
    %v3059 = vrot.slane %v3058, 2
    %v3060 = vadd.f32 %v3058, %v3059
    %v3061 = vrot.slane %v3060, 1
    %v3062 = vadd.f32 %v3060, %v3061
    %v3063 = vrot.slane %v2878, 4
    %v3064 = vadd.f32 %v2878, %v3063
    %v3065 = vrot.slane %v3064, 2
    %v3066 = vadd.f32 %v3064, %v3065
    %v3067 = vrot.slane %v3066, 1
    %v3068 = vadd.f32 %v3066, %v3067
    %v3069 = vrot.slane %v2930, 4
    %v3070 = vadd.f32 %v2930, %v3069
    %v3071 = vrot.slane %v3070, 2
    %v3072 = vadd.f32 %v3070, %v3071
    %v3073 = vrot.slane %v3072, 1
    %v3074 = vadd.f32 %v3072, %v3073
    %v3075 = vrot.slane %v2982, 4
    %v3076 = vadd.f32 %v2982, %v3075
    %v3077 = vrot.slane %v3076, 2
    %v3078 = vadd.f32 %v3076, %v3077
    %v3079 = vrot.slane %v3078, 1
    %v3080 = vadd.f32 %v3078, %v3079
    %v3081 = vrot.slane %v3034, 4
    %v3082 = vadd.f32 %v3034, %v3081
    %v3083 = vrot.slane %v3082, 2
    %v3084 = vadd.f32 %v3082, %v3083
    %v3085 = vrot.slane %v3084, 1
    %v3086 = vadd.f32 %v3084, %v3085
    %v3087 = vmul.f32 %v3044, 0.125
    %v3088 = vmul.f32 %v3050, 0.125
    %v3089 = vmul.f32 %v3056, 0.125
    %v3090 = vmul.f32 %v3062, 0.125
    %v3091 = vmul.f32 %v3068, 0.125
    %v3092 = vmul.f32 %v3074, 0.125
    %v3093 = vmul.f32 %v3080, 0.125
    %v3094 = vmul.f32 %v3086, 0.125
    %v3095 = vmul.f32 %v2670, %v2670
    %v3096 = vmul.f32 %v2722, %v2722
    %v3097 = vmul.f32 %v2774, %v2774
    %v3098 = vmul.f32 %v2826, %v2826
    %v3099 = vmul.f32 %v2878, %v2878
    %v3100 = vmul.f32 %v2930, %v2930
    %v3101 = vmul.f32 %v2982, %v2982
    %v3102 = vmul.f32 %v3034, %v3034
    %v3103 = vrot.slane %v3095, 4
    %v3104 = vadd.f32 %v3095, %v3103
    %v3105 = vrot.slane %v3104, 2
    %v3106 = vadd.f32 %v3104, %v3105
    %v3107 = vrot.slane %v3106, 1
    %v3108 = vadd.f32 %v3106, %v3107
    %v3109 = vrot.slane %v3096, 4
    %v3110 = vadd.f32 %v3096, %v3109
    %v3111 = vrot.slane %v3110, 2
    %v3112 = vadd.f32 %v3110, %v3111
    %v3113 = vrot.slane %v3112, 1
    %v3114 = vadd.f32 %v3112, %v3113
    %v3115 = vrot.slane %v3097, 4
    %v3116 = vadd.f32 %v3097, %v3115
    %v3117 = vrot.slane %v3116, 2
    %v3118 = vadd.f32 %v3116, %v3117
    %v3119 = vrot.slane %v3118, 1
    %v3120 = vadd.f32 %v3118, %v3119
    %v3121 = vrot.slane %v3098, 4
    %v3122 = vadd.f32 %v3098, %v3121
    %v3123 = vrot.slane %v3122, 2
    %v3124 = vadd.f32 %v3122, %v3123
    %v3125 = vrot.slane %v3124, 1
    %v3126 = vadd.f32 %v3124, %v3125
    %v3127 = vrot.slane %v3099, 4
    %v3128 = vadd.f32 %v3099, %v3127
    %v3129 = vrot.slane %v3128, 2
    %v3130 = vadd.f32 %v3128, %v3129
    %v3131 = vrot.slane %v3130, 1
    %v3132 = vadd.f32 %v3130, %v3131
    %v3133 = vrot.slane %v3100, 4
    %v3134 = vadd.f32 %v3100, %v3133
    %v3135 = vrot.slane %v3134, 2
    %v3136 = vadd.f32 %v3134, %v3135
    %v3137 = vrot.slane %v3136, 1
    %v3138 = vadd.f32 %v3136, %v3137
    %v3139 = vrot.slane %v3101, 4
    %v3140 = vadd.f32 %v3101, %v3139
    %v3141 = vrot.slane %v3140, 2
    %v3142 = vadd.f32 %v3140, %v3141
    %v3143 = vrot.slane %v3142, 1
    %v3144 = vadd.f32 %v3142, %v3143
    %v3145 = vrot.slane %v3102, 4
    %v3146 = vadd.f32 %v3102, %v3145
    %v3147 = vrot.slane %v3146, 2
    %v3148 = vadd.f32 %v3146, %v3147
    %v3149 = vrot.slane %v3148, 1
    %v3150 = vadd.f32 %v3148, %v3149
    %v3151 = vmul.f32 %v3108, 0.125
    %v3152 = vmul.f32 %v3114, 0.125
    %v3153 = vmul.f32 %v3120, 0.125
    %v3154 = vmul.f32 %v3126, 0.125
    %v3155 = vmul.f32 %v3132, 0.125
    %v3156 = vmul.f32 %v3138, 0.125
    %v3157 = vmul.f32 %v3144, 0.125
    %v3158 = vmul.f32 %v3150, 0.125
    %v3159 = vmul.f32 %v3087, %v3087
    %v3160 = vmul.f32 %v3088, %v3088
    %v3161 = vmul.f32 %v3089, %v3089
    %v3162 = vmul.f32 %v3090, %v3090
    %v3163 = vmul.f32 %v3091, %v3091
    %v3164 = vmul.f32 %v3092, %v3092
    %v3165 = vmul.f32 %v3093, %v3093
    %v3166 = vmul.f32 %v3094, %v3094
    %v3167 = vsub.f32 %v3151, %v3159
    %v3168 = vsub.f32 %v3152, %v3160
    %v3169 = vsub.f32 %v3153, %v3161
    %v3170 = vsub.f32 %v3154, %v3162
    %v3171 = vsub.f32 %v3155, %v3163
    %v3172 = vsub.f32 %v3156, %v3164
    %v3173 = vsub.f32 %v3157, %v3165
    %v3174 = vsub.f32 %v3158, %v3166
    %v3175 = vadd.f32 %v3167, 1e-05
    %v3176 = vadd.f32 %v3168, 1e-05
    %v3177 = vadd.f32 %v3169, 1e-05
    %v3178 = vadd.f32 %v3170, 1e-05
    %v3179 = vadd.f32 %v3171, 1e-05
    %v3180 = vadd.f32 %v3172, 1e-05
    %v3181 = vadd.f32 %v3173, 1e-05
    %v3182 = vadd.f32 %v3174, 1e-05
    %v3183 = vrsqrt.pop %v3175
    %v3184 = vmul.f32 %v3183, %v3175
    %v3185 = vmul.f32 %v3184, %v3183
    %v3186 = vmul.f32 0.5, %v3185
    %v3187 = vsub.f32 1.5, %v3186
    %v3188 = vmul.f32 %v3183, %v3187
    %vm3189 = vweird.f32 %v3175
    %vm3190 = vweird.f32 %v3183
    %vm3191 = vmor %vm3189, %vm3190
    %v3192 = vsel %vm3191, %v3183, %v3188
    %v3193 = vrsqrt.pop %v3176
    %v3194 = vmul.f32 %v3193, %v3176
    %v3195 = vmul.f32 %v3194, %v3193
    %v3196 = vmul.f32 0.5, %v3195
    %v3197 = vsub.f32 1.5, %v3196
    %v3198 = vmul.f32 %v3193, %v3197
    %vm3199 = vweird.f32 %v3176
    %vm3200 = vweird.f32 %v3193
    %vm3201 = vmor %vm3199, %vm3200
    %v3202 = vsel %vm3201, %v3193, %v3198
    %v3203 = vrsqrt.pop %v3177
    %v3204 = vmul.f32 %v3203, %v3177
    %v3205 = vmul.f32 %v3204, %v3203
    %v3206 = vmul.f32 0.5, %v3205
    %v3207 = vsub.f32 1.5, %v3206
    %v3208 = vmul.f32 %v3203, %v3207
    %vm3209 = vweird.f32 %v3177
    %vm3210 = vweird.f32 %v3203
    %vm3211 = vmor %vm3209, %vm3210
    %v3212 = vsel %vm3211, %v3203, %v3208
    %v3213 = vrsqrt.pop %v3178
    %v3214 = vmul.f32 %v3213, %v3178
    %v3215 = vmul.f32 %v3214, %v3213
    %v3216 = vmul.f32 0.5, %v3215
    %v3217 = vsub.f32 1.5, %v3216
    %v3218 = vmul.f32 %v3213, %v3217
    %vm3219 = vweird.f32 %v3178
    %vm3220 = vweird.f32 %v3213
    %vm3221 = vmor %vm3219, %vm3220
    %v3222 = vsel %vm3221, %v3213, %v3218
    %v3223 = vrsqrt.pop %v3179
    %v3224 = vmul.f32 %v3223, %v3179
    %v3225 = vmul.f32 %v3224, %v3223
    %v3226 = vmul.f32 0.5, %v3225
    %v3227 = vsub.f32 1.5, %v3226
    %v3228 = vmul.f32 %v3223, %v3227
    %vm3229 = vweird.f32 %v3179
    %vm3230 = vweird.f32 %v3223
    %vm3231 = vmor %vm3229, %vm3230
    %v3232 = vsel %vm3231, %v3223, %v3228
    %v3233 = vrsqrt.pop %v3180
    %v3234 = vmul.f32 %v3233, %v3180
    %v3235 = vmul.f32 %v3234, %v3233
    %v3236 = vmul.f32 0.5, %v3235
    %v3237 = vsub.f32 1.5, %v3236
    %v3238 = vmul.f32 %v3233, %v3237
    %vm3239 = vweird.f32 %v3180
    %vm3240 = vweird.f32 %v3233
    %vm3241 = vmor %vm3239, %vm3240
    %v3242 = vsel %vm3241, %v3233, %v3238
    %v3243 = vrsqrt.pop %v3181
    %v3244 = vmul.f32 %v3243, %v3181
    %v3245 = vmul.f32 %v3244, %v3243
    %v3246 = vmul.f32 0.5, %v3245
    %v3247 = vsub.f32 1.5, %v3246
    %v3248 = vmul.f32 %v3243, %v3247
    %vm3249 = vweird.f32 %v3181
    %vm3250 = vweird.f32 %v3243
    %vm3251 = vmor %vm3249, %vm3250
    %v3252 = vsel %vm3251, %v3243, %v3248
    %v3253 = vrsqrt.pop %v3182
    %v3254 = vmul.f32 %v3253, %v3182
    %v3255 = vmul.f32 %v3254, %v3253
    %v3256 = vmul.f32 0.5, %v3255
    %v3257 = vsub.f32 1.5, %v3256
    %v3258 = vmul.f32 %v3253, %v3257
    %vm3259 = vweird.f32 %v3182
    %vm3260 = vweird.f32 %v3253
    %vm3261 = vmor %vm3259, %vm3260
    %v3262 = vsel %vm3261, %v3253, %v3258
    %v3271 = vrot.slane %v3202, 7
    %v3272 = vrot.slane %v3212, 6
    %v3273 = vrot.slane %v3222, 5
    %v3274 = vrot.slane %v3232, 4
    %v3275 = vrot.slane %v3242, 3
    %v3276 = vrot.slane %v3252, 2
    %v3277 = vrot.slane %v3262, 1
    %v3278 = vsel %vm379, %v3192, %v3271
    %v3279 = vsel %vm1021, %v3272, %v3273
    %v3280 = vsel %vm1023, %v3278, %v3279
    %vm3281 = vcmask 1044484
    %v3282 = vsel %vm3281, %v3274, %v3275
    %vm3283 = vcmask 1046534
    %v3284 = vsel %vm3283, %v3276, %v3277
    %vm3285 = vcmask 1045508
    %v3286 = vsel %vm3285, %v3282, %v3284
    %vm3287 = vcmask 1043456
    %v3288 = vsel %vm3287, %v3280, %v3286
    %v3290 = vmul.f32 %v3037, %v3288
    %v3292 = vperm.slane %v3290, 0
    %v3293 = vperm.slane %v3290, 1
    %v3294 = vperm.slane %v3290, 2
    %v3295 = vperm.slane %v3290, 3
    %v3296 = vperm.slane %v3290, 4
    %v3297 = vperm.slane %v3290, 5
    %v3298 = vperm.slane %v3290, 6
    %v3299 = vperm.slane %v3290, 7
    %v3308 = vmul.f32 %v3087, %v3292
    %v3309 = vmul.f32 %v3088, %v3293
    %v3310 = vmul.f32 %v3089, %v3294
    %v3311 = vmul.f32 %v3090, %v3295
    %v3312 = vmul.f32 %v3091, %v3296
    %v3313 = vmul.f32 %v3092, %v3297
    %v3314 = vmul.f32 %v3093, %v3298
    %v3315 = vmul.f32 %v3094, %v3299
    %v3324 = vrot.slane %v3309, 7
    %v3325 = vrot.slane %v3310, 6
    %v3326 = vrot.slane %v3311, 5
    %v3327 = vrot.slane %v3312, 4
    %v3328 = vrot.slane %v3313, 3
    %v3329 = vrot.slane %v3314, 2
    %v3330 = vrot.slane %v3315, 1
    %v3331 = vsel %vm379, %v3308, %v3324
    %v3332 = vsel %vm1021, %v3325, %v3326
    %v3333 = vsel %vm1023, %v3331, %v3332
    %v3334 = vsel %vm3281, %v3327, %v3328
    %v3335 = vsel %vm3283, %v3329, %v3330
    %v3336 = vsel %vm3285, %v3334, %v3335
    %v3337 = vsel %vm3287, %v3333, %v3336
    %v3339 = vsub.f32 %v3038, %v3337
    %v3340 = vmul.f32 %v2670, %v3292
    %v3341 = vmul.f32 %v2722, %v3293
    %v3342 = vmul.f32 %v2774, %v3294
    %v3343 = vmul.f32 %v2826, %v3295
    %v3344 = vmul.f32 %v2878, %v3296
    %v3345 = vmul.f32 %v2930, %v3297
    %v3346 = vmul.f32 %v2982, %v3298
    %v3347 = vmul.f32 %v3034, %v3299
    %v3349 = vperm.slane %v3339, 0
    %v3350 = vperm.slane %v3339, 1
    %v3351 = vperm.slane %v3339, 2
    %v3352 = vperm.slane %v3339, 3
    %v3353 = vperm.slane %v3339, 4
    %v3354 = vperm.slane %v3339, 5
    %v3355 = vperm.slane %v3339, 6
    %v3356 = vperm.slane %v3339, 7
    %v3365 = vadd.f32 %v3340, %v3349
    %v3366 = vadd.f32 %v3341, %v3350
    %v3367 = vadd.f32 %v3342, %v3351
    %v3368 = vadd.f32 %v3343, %v3352
    %v3369 = vadd.f32 %v3344, %v3353
    %v3370 = vadd.f32 %v3345, %v3354
    %v3371 = vadd.f32 %v3346, %v3355
    %v3372 = vadd.f32 %v3347, %v3356
    %v3373 = vmul.f32 %v3365, 0.2
    %v3374 = vmul.f32 %v3366, 0.2
    %v3375 = vmul.f32 %v3367, 0.2
    %v3376 = vmul.f32 %v3368, 0.2
    %v3377 = vmul.f32 %v3369, 0.2
    %v3378 = vmul.f32 %v3370, 0.2
    %v3379 = vmul.f32 %v3371, 0.2
    %v3380 = vmul.f32 %v3372, 0.2
    %v3381 = vmax.f32 %v3365, %v3373
    %v3382 = vmax.f32 %v3366, %v3374
    %v3383 = vmax.f32 %v3367, %v3375
    %v3384 = vmax.f32 %v3368, %v3376
    %v3385 = vmax.f32 %v3369, %v3377
    %v3386 = vmax.f32 %v3370, %v3378
    %v3387 = vmax.f32 %v3371, %v3379
    %v3388 = vmax.f32 %v3372, %v3380
    %s3389 = smul.u32 4, 128
    %s3390 = smul.u32 %s3389, 7
    %s3391 = sshll.u32 %s3390, 4
    %3392 = dma.done %s96, %s3391
    %v3393 = vld [vmem:[#allocation3] sm:$0xff]
    %v3394 = vld [vmem:[#allocation3 + $0x8] sm:$0xff]
    %v3395 = vld [vmem:[#allocation3 + $0x10] sm:$0xff]
    %v3396 = vld [vmem:[#allocation3 + $0x18] sm:$0xf]
    %v3397 = vld [vmem:[#allocation3 + $0x1c] sm:$0xff]
    %v3398 = vld [vmem:[#allocation3 + $0x24] sm:$0xff]
    %v3399 = vld [vmem:[#allocation3 + $0x2c] sm:$0xff]
    %v3400 = vld [vmem:[#allocation3 + $0x34] sm:$0xf]
    %v3401 = vld [vmem:[#allocation3 + $0x38] sm:$0xff]
    %v3402 = vld [vmem:[#allocation3 + $0x40] sm:$0xff]
    %v3403 = vld [vmem:[#allocation3 + $0x48] sm:$0xff]
    %v3404 = vld [vmem:[#allocation3 + $0x50] sm:$0xf]
    %v3405 = vld [vmem:[#allocation3 + $0x54] sm:$0xff]
    %v3406 = vld [vmem:[#allocation3 + $0x5c] sm:$0xff]
    %v3407 = vld [vmem:[#allocation3 + $0x64] sm:$0xff]
    %v3408 = vld [vmem:[#allocation3 + $0x6c] sm:$0xf]
    %v3409 = vld [vmem:[#allocation3 + $0x70] sm:$0xff]
    %v3410 = vld [vmem:[#allocation3 + $0x78] sm:$0xff]
    %v3411 = vld [vmem:[#allocation3 + $0x80] sm:$0xff]
    %v3412 = vld [vmem:[#allocation3 + $0x88] sm:$0xf]
    %v3413 = vld [vmem:[#allocation3 + $0x8c] sm:$0xff]
    %v3414 = vld [vmem:[#allocation3 + $0x94] sm:$0xff]
    %v3415 = vld [vmem:[#allocation3 + $0x9c] sm:$0xff]
    %v3416 = vld [vmem:[#allocation3 + $0xa4] sm:$0xf]
    %v3417 = vld [vmem:[#allocation3 + $0xa8] sm:$0xff]
    %v3418 = vld [vmem:[#allocation3 + $0xb0] sm:$0xff]
    %v3419 = vld [vmem:[#allocation3 + $0xb8] sm:$0xff]
    %v3420 = vld [vmem:[#allocation3 + $0xc0] sm:$0xf]
    %v3421 = vld [vmem:[#allocation3 + $0xc4] sm:$0xff]
    %v3422 = vld [vmem:[#allocation3 + $0xcc] sm:$0xff]
    %v3423 = vld [vmem:[#allocation3 + $0xd4] sm:$0xff]
    %v3424 = vld [vmem:[#allocation3 + $0xdc] sm:$0xf]
    %v3425 = vld [vmem:[#allocation3 + $0xe0] sm:$0xff]
    %v3426 = vld [vmem:[#allocation3 + $0xe8] sm:$0xff]
    %v3427 = vld [vmem:[#allocation3 + $0xf0] sm:$0xff]
    %v3428 = vld [vmem:[#allocation3 + $0xf8] sm:$0xf]
    %v3429 = vld [vmem:[#allocation3 + $0xfc] sm:$0xff]
    %v3430 = vld [vmem:[#allocation3 + $0x104] sm:$0xff]
    %v3431 = vld [vmem:[#allocation3 + $0x10c] sm:$0xff]
    %v3432 = vld [vmem:[#allocation3 + $0x114] sm:$0xf]
    %v3433 = vld [vmem:[#allocation3 + $0x118] sm:$0xff]
    %v3434 = vld [vmem:[#allocation3 + $0x120] sm:$0xff]
    %v3435 = vld [vmem:[#allocation3 + $0x128] sm:$0xff]
    %v3436 = vld [vmem:[#allocation3 + $0x130] sm:$0xf]
    %v3437 = vld [vmem:[#allocation3 + $0x134] sm:$0xff]
    %v3438 = vld [vmem:[#allocation3 + $0x13c] sm:$0xff]
    %v3439 = vld [vmem:[#allocation3 + $0x144] sm:$0xff]
    %v3440 = vld [vmem:[#allocation3 + $0x14c] sm:$0xf]
    %v3441 = vld [vmem:[#allocation3 + $0x150] sm:$0xff]
    %v3442 = vld [vmem:[#allocation3 + $0x158] sm:$0xff]
    %v3443 = vld [vmem:[#allocation3 + $0x160] sm:$0xff]
    %v3444 = vld [vmem:[#allocation3 + $0x168] sm:$0xf]
    %v3445 = vld [vmem:[#allocation3 + $0x16c] sm:$0xff]
    %v3446 = vld [vmem:[#allocation3 + $0x174] sm:$0xff]
    %v3447 = vld [vmem:[#allocation3 + $0x17c] sm:$0xff]
    %v3448 = vld [vmem:[#allocation3 + $0x184] sm:$0xf]
    %v3449 = vld [vmem:[#allocation3 + $0x188] sm:$0xff]
    %v3450 = vld [vmem:[#allocation3 + $0x190] sm:$0xff]
    %v3451 = vld [vmem:[#allocation3 + $0x198] sm:$0xff]
    %v3452 = vld [vmem:[#allocation3 + $0x1a0] sm:$0xf]
    %v3453 = vld [vmem:[#allocation3 + $0x1a4] sm:$0xff]
    %v3454 = vld [vmem:[#allocation3 + $0x1ac] sm:$0xff]
    %v3455 = vld [vmem:[#allocation3 + $0x1b4] sm:$0xff]
    %v3456 = vld [vmem:[#allocation3 + $0x1bc] sm:$0xf]
    %v3457 = vld [vmem:[#allocation3 + $0x1c0] sm:$0xff]
    %v3458 = vld [vmem:[#allocation3 + $0x1c8] sm:$0xff]
    %v3459 = vld [vmem:[#allocation3 + $0x1d0] sm:$0xff]
    %v3460 = vld [vmem:[#allocation3 + $0x1d8] sm:$0xf]
    %v3461 = vld [vmem:[#allocation3 + $0x1dc] sm:$0xff]
    %v3462 = vld [vmem:[#allocation3 + $0x1e4] sm:$0xff]
    %v3463 = vld [vmem:[#allocation3 + $0x1ec] sm:$0xff]
    %v3464 = vld [vmem:[#allocation3 + $0x1f4] sm:$0xf]
    %v3465 = vld [vmem:[#allocation3 + $0x1f8] sm:$0xff]
    %v3466 = vld [vmem:[#allocation3 + $0x200] sm:$0xff]
    %v3467 = vld [vmem:[#allocation3 + $0x208] sm:$0xff]
    %v3468 = vld [vmem:[#allocation3 + $0x210] sm:$0xf]
    %v3469 = vld [vmem:[#allocation3 + $0x214] sm:$0xff]
    %v3470 = vld [vmem:[#allocation3 + $0x21c] sm:$0xff]
    %v3471 = vld [vmem:[#allocation3 + $0x224] sm:$0xff]
    %v3472 = vld [vmem:[#allocation3 + $0x22c] sm:$0xf]
    %v3473 = vld [vmem:[#allocation3 + $0x230] sm:$0xff]
    %v3474 = vld [vmem:[#allocation3 + $0x238] sm:$0xff]
    %v3475 = vld [vmem:[#allocation3 + $0x240] sm:$0xff]
    %v3476 = vld [vmem:[#allocation3 + $0x248] sm:$0xf]
    %v3477 = vld [vmem:[#allocation3 + $0x24c] sm:$0xff]
    %v3478 = vld [vmem:[#allocation3 + $0x254] sm:$0xff]
    %v3479 = vld [vmem:[#allocation3 + $0x25c] sm:$0xff]
    %v3480 = vld [vmem:[#allocation3 + $0x264] sm:$0xf]
    %v3481 = vld [vmem:[#allocation3 + $0x268] sm:$0xff]
    %v3482 = vld [vmem:[#allocation3 + $0x270] sm:$0xff]
    %v3483 = vld [vmem:[#allocation3 + $0x278] sm:$0xff]
    %v3484 = vld [vmem:[#allocation3 + $0x280] sm:$0xf]
    %v3485 = vld [vmem:[#allocation3 + $0x284] sm:$0xff]
    %v3486 = vld [vmem:[#allocation3 + $0x28c] sm:$0xff]
    %v3487 = vld [vmem:[#allocation3 + $0x294] sm:$0xff]
    %v3488 = vld [vmem:[#allocation3 + $0x29c] sm:$0xf]
    %v3489 = vld [vmem:[#allocation3 + $0x2a0] sm:$0xff]
    %v3490 = vld [vmem:[#allocation3 + $0x2a8] sm:$0xff]
    %v3491 = vld [vmem:[#allocation3 + $0x2b0] sm:$0xff]
    %v3492 = vld [vmem:[#allocation3 + $0x2b8] sm:$0xf]
    %v3493 = vld [vmem:[#allocation3 + $0x2bc] sm:$0xff]
    %v3494 = vld [vmem:[#allocation3 + $0x2c4] sm:$0xff]
    %v3495 = vld [vmem:[#allocation3 + $0x2cc] sm:$0xff]
    %v3496 = vld [vmem:[#allocation3 + $0x2d4] sm:$0xf]
    %v3497 = vld [vmem:[#allocation3 + $0x2d8] sm:$0xff]
    %v3498 = vld [vmem:[#allocation3 + $0x2e0] sm:$0xff]
    %v3499 = vld [vmem:[#allocation3 + $0x2e8] sm:$0xff]
    %v3500 = vld [vmem:[#allocation3 + $0x2f0] sm:$0xf]
    %v3501 = vld [vmem:[#allocation3 + $0x2f4] sm:$0xff]
    %v3502 = vld [vmem:[#allocation3 + $0x2fc] sm:$0xff]
    %v3503 = vld [vmem:[#allocation3 + $0x304] sm:$0xff]
    %v3504 = vld [vmem:[#allocation3 + $0x30c] sm:$0xf]
    %v3505 = vld [vmem:[#allocation3 + $0x310] sm:$0xff]
    %v3506 = vld [vmem:[#allocation3 + $0x318] sm:$0xff]
    %v3507 = vld [vmem:[#allocation3 + $0x320] sm:$0xff]
    %v3508 = vld [vmem:[#allocation3 + $0x328] sm:$0xf]
    %v3509 = vld [vmem:[#allocation3 + $0x32c] sm:$0xff]
    %v3510 = vld [vmem:[#allocation3 + $0x334] sm:$0xff]
    %v3511 = vld [vmem:[#allocation3 + $0x33c] sm:$0xff]
    %v3512 = vld [vmem:[#allocation3 + $0x344] sm:$0xf]
    %v3513 = vld [vmem:[#allocation3 + $0x348] sm:$0xff]
    %v3514 = vld [vmem:[#allocation3 + $0x350] sm:$0xff]
    %v3515 = vld [vmem:[#allocation3 + $0x358] sm:$0xff]
    %v3516 = vld [vmem:[#allocation3 + $0x360] sm:$0xf]
    %v3517 = vld [vmem:[#allocation3 + $0x364] sm:$0xff]
    %v3518 = vld [vmem:[#allocation3 + $0x36c] sm:$0xff]
    %v3519 = vld [vmem:[#allocation3 + $0x374] sm:$0xff]
    %v3520 = vld [vmem:[#allocation3 + $0x37c] sm:$0xf]
    %v3521 = vld [vmem:[#allocation3 + $0x380] sm:$0xff]
    %v3522 = vld [vmem:[#allocation3 + $0x388] sm:$0xff]
    %v3523 = vld [vmem:[#allocation3 + $0x390] sm:$0xff]
    %v3524 = vld [vmem:[#allocation3 + $0x398] sm:$0xf]
    %v3525 = vld [vmem:[#allocation3 + $0x39c] sm:$0xff]
    %v3526 = vld [vmem:[#allocation3 + $0x3a4] sm:$0xff]
    %v3527 = vld [vmem:[#allocation3 + $0x3ac] sm:$0xff]
    %v3528 = vld [vmem:[#allocation3 + $0x3b4] sm:$0xf]
    %v3529 = vld [vmem:[#allocation3 + $0x3b8] sm:$0xff]
    %v3530 = vld [vmem:[#allocation3 + $0x3c0] sm:$0xff]
    %v3531 = vld [vmem:[#allocation3 + $0x3c8] sm:$0xff]
    %v3532 = vld [vmem:[#allocation3 + $0x3d0] sm:$0xf]
    %v3533 = vld [vmem:[#allocation3 + $0x3d4] sm:$0xff]
    %v3534 = vld [vmem:[#allocation3 + $0x3dc] sm:$0xff]
    %v3535 = vld [vmem:[#allocation3 + $0x3e4] sm:$0xff]
    %v3536 = vld [vmem:[#allocation3 + $0x3ec] sm:$0xf]
    %v3537 = vld [vmem:[#allocation3 + $0x3f0] sm:$0xff]
    %v3538 = vld [vmem:[#allocation3 + $0x3f8] sm:$0xff]
    %v3539 = vld [vmem:[#allocation3 + $0x400] sm:$0xff]
    %v3540 = vld [vmem:[#allocation3 + $0x408] sm:$0xf]
    %v3541 = vld [vmem:[#allocation3 + $0x40c] sm:$0xff]
    %v3542 = vld [vmem:[#allocation3 + $0x414] sm:$0xff]
    %v3543 = vld [vmem:[#allocation3 + $0x41c] sm:$0xff]
    %v3544 = vld [vmem:[#allocation3 + $0x424] sm:$0xf]
    %v3545 = vld [vmem:[#allocation3 + $0x428] sm:$0xff]
    %v3546 = vld [vmem:[#allocation3 + $0x430] sm:$0xff]
    %v3547 = vld [vmem:[#allocation3 + $0x438] sm:$0xff]
    %v3548 = vld [vmem:[#allocation3 + $0x440] sm:$0xf]
    %v3549 = vld [vmem:[#allocation3 + $0x444] sm:$0xff]
    %v3550 = vld [vmem:[#allocation3 + $0x44c] sm:$0xff]
    %v3551 = vld [vmem:[#allocation3 + $0x454] sm:$0xff]
    %v3552 = vld [vmem:[#allocation3 + $0x45c] sm:$0xf]
    %v3553 = vld [vmem:[#allocation3 + $0x460] sm:$0xff]
    %v3554 = vld [vmem:[#allocation3 + $0x468] sm:$0xff]
    %v3555 = vld [vmem:[#allocation3 + $0x470] sm:$0xff]
    %v3556 = vld [vmem:[#allocation3 + $0x478] sm:$0xf]
    %v3557 = vld [vmem:[#allocation3 + $0x47c] sm:$0xff]
    %v3558 = vld [vmem:[#allocation3 + $0x484] sm:$0xff]
    %v3559 = vld [vmem:[#allocation3 + $0x48c] sm:$0xff]
    %v3560 = vld [vmem:[#allocation3 + $0x494] sm:$0xf]
    %v3561 = vld [vmem:[#allocation3 + $0x498] sm:$0xff]
    %v3562 = vld [vmem:[#allocation3 + $0x4a0] sm:$0xff]
    %v3563 = vld [vmem:[#allocation3 + $0x4a8] sm:$0xff]
    %v3564 = vld [vmem:[#allocation3 + $0x4b0] sm:$0xf]
    %v3565 = vld [vmem:[#allocation3 + $0x4b4] sm:$0xff]
    %v3566 = vld [vmem:[#allocation3 + $0x4bc] sm:$0xff]
    %v3567 = vld [vmem:[#allocation3 + $0x4c4] sm:$0xff]
    %v3568 = vld [vmem:[#allocation3 + $0x4cc] sm:$0xf]
    %v3569 = vld [vmem:[#allocation3 + $0x4d0] sm:$0xff]
    %v3570 = vld [vmem:[#allocation3 + $0x4d8] sm:$0xff]
    %v3571 = vld [vmem:[#allocation3 + $0x4e0] sm:$0xff]
    %v3572 = vld [vmem:[#allocation3 + $0x4e8] sm:$0xf]
    %v3573 = vld [vmem:[#allocation3 + $0x4ec] sm:$0xff]
    %v3574 = vld [vmem:[#allocation3 + $0x4f4] sm:$0xff]
    %v3575 = vld [vmem:[#allocation3 + $0x4fc] sm:$0xff]
    %v3576 = vld [vmem:[#allocation3 + $0x504] sm:$0xf]
    %v3577 = vld [vmem:[#allocation3 + $0x508] sm:$0xff]
    %v3578 = vld [vmem:[#allocation3 + $0x510] sm:$0xff]
    %v3579 = vld [vmem:[#allocation3 + $0x518] sm:$0xff]
    %v3580 = vld [vmem:[#allocation3 + $0x520] sm:$0xf]
    %v3581 = vld [vmem:[#allocation3 + $0x524] sm:$0xff]
    %v3582 = vld [vmem:[#allocation3 + $0x52c] sm:$0xff]
    %v3583 = vld [vmem:[#allocation3 + $0x534] sm:$0xff]
    %v3584 = vld [vmem:[#allocation3 + $0x53c] sm:$0xf]
    %v3585 = vld [vmem:[#allocation3 + $0x540] sm:$0xff]
    %v3586 = vld [vmem:[#allocation3 + $0x548] sm:$0xff]
    %v3587 = vld [vmem:[#allocation3 + $0x550] sm:$0xff]
    %v3588 = vld [vmem:[#allocation3 + $0x558] sm:$0xf]
    %v3589 = vld [vmem:[#allocation3 + $0x55c] sm:$0xff]
    %v3590 = vld [vmem:[#allocation3 + $0x564] sm:$0xff]
    %v3591 = vld [vmem:[#allocation3 + $0x56c] sm:$0xff]
    %v3592 = vld [vmem:[#allocation3 + $0x574] sm:$0xf]
    %v3593 = vld [vmem:[#allocation3 + $0x578] sm:$0xff]
    %v3594 = vld [vmem:[#allocation3 + $0x580] sm:$0xff]
    %v3595 = vld [vmem:[#allocation3 + $0x588] sm:$0xff]
    %v3596 = vld [vmem:[#allocation3 + $0x590] sm:$0xf]
    %v3597 = vld [vmem:[#allocation3 + $0x594] sm:$0xff]
    %v3598 = vld [vmem:[#allocation3 + $0x59c] sm:$0xff]
    %v3599 = vld [vmem:[#allocation3 + $0x5a4] sm:$0xff]
    %v3600 = vld [vmem:[#allocation3 + $0x5ac] sm:$0xf]
    %v3601 = vld [vmem:[#allocation3 + $0x5b0] sm:$0xff]
    %v3602 = vld [vmem:[#allocation3 + $0x5b8] sm:$0xff]
    %v3603 = vld [vmem:[#allocation3 + $0x5c0] sm:$0xff]
    %v3604 = vld [vmem:[#allocation3 + $0x5c8] sm:$0xf]
    %v3605 = vld [vmem:[#allocation3 + $0x5cc] sm:$0xff]
    %v3606 = vld [vmem:[#allocation3 + $0x5d4] sm:$0xff]
    %v3607 = vld [vmem:[#allocation3 + $0x5dc] sm:$0xff]
    %v3608 = vld [vmem:[#allocation3 + $0x5e4] sm:$0xf]
    %v3609 = vld [vmem:[#allocation3 + $0x5e8] sm:$0xff]
    %v3610 = vld [vmem:[#allocation3 + $0x5f0] sm:$0xff]
    %v3611 = vld [vmem:[#allocation3 + $0x5f8] sm:$0xff]
    %v3612 = vld [vmem:[#allocation3 + $0x600] sm:$0xf]
    %v3613 = vld [vmem:[#allocation3 + $0x604] sm:$0xff]
    %v3614 = vld [vmem:[#allocation3 + $0x60c] sm:$0xff]
    %v3615 = vld [vmem:[#allocation3 + $0x614] sm:$0xff]
    %v3616 = vld [vmem:[#allocation3 + $0x61c] sm:$0xf]
    %v3617 = vld [vmem:[#allocation3 + $0x620] sm:$0xff]
    %v3618 = vld [vmem:[#allocation3 + $0x628] sm:$0xff]
    %v3619 = vld [vmem:[#allocation3 + $0x630] sm:$0xff]
    %v3620 = vld [vmem:[#allocation3 + $0x638] sm:$0xf]
    %v3621 = vld [vmem:[#allocation3 + $0x63c] sm:$0xff]
    %v3622 = vld [vmem:[#allocation3 + $0x644] sm:$0xff]
    %v3623 = vld [vmem:[#allocation3 + $0x64c] sm:$0xff]
    %v3624 = vld [vmem:[#allocation3 + $0x654] sm:$0xf]
    %v3625 = vld [vmem:[#allocation3 + $0x658] sm:$0xff]
    %v3626 = vld [vmem:[#allocation3 + $0x660] sm:$0xff]
    %v3627 = vld [vmem:[#allocation3 + $0x668] sm:$0xff]
    %v3628 = vld [vmem:[#allocation3 + $0x670] sm:$0xf]
    %v3629 = vld [vmem:[#allocation3 + $0x674] sm:$0xff]
    %v3630 = vld [vmem:[#allocation3 + $0x67c] sm:$0xff]
    %v3631 = vld [vmem:[#allocation3 + $0x684] sm:$0xff]
    %v3632 = vld [vmem:[#allocation3 + $0x68c] sm:$0xf]
    %v3633 = vld [vmem:[#allocation3 + $0x690] sm:$0xff]
    %v3634 = vld [vmem:[#allocation3 + $0x698] sm:$0xff]
    %v3635 = vld [vmem:[#allocation3 + $0x6a0] sm:$0xff]
    %v3636 = vld [vmem:[#allocation3 + $0x6a8] sm:$0xf]
    %v3637 = vld [vmem:[#allocation3 + $0x6ac] sm:$0xff]
    %v3638 = vld [vmem:[#allocation3 + $0x6b4] sm:$0xff]
    %v3639 = vld [vmem:[#allocation3 + $0x6bc] sm:$0xff]
    %v3640 = vld [vmem:[#allocation3 + $0x6c4] sm:$0xf]
    %v3641 = vld [vmem:[#allocation3 + $0x6c8] sm:$0xff]
    %v3642 = vld [vmem:[#allocation3 + $0x6d0] sm:$0xff]
    %v3643 = vld [vmem:[#allocation3 + $0x6d8] sm:$0xff]
    %v3644 = vld [vmem:[#allocation3 + $0x6e0] sm:$0xf]
    %v3645 = vld [vmem:[#allocation3 + $0x6e4] sm:$0xff]
    %v3646 = vld [vmem:[#allocation3 + $0x6ec] sm:$0xff]
    %v3647 = vld [vmem:[#allocation3 + $0x6f4] sm:$0xff]
    %v3648 = vld [vmem:[#allocation3 + $0x6fc] sm:$0xf]
    %v3649 = vld [vmem:[#allocation3 + $0x700] sm:$0xff]
    %v3650 = vld [vmem:[#allocation3 + $0x708] sm:$0xff]
    %v3651 = vld [vmem:[#allocation3 + $0x710] sm:$0xff]
    %v3652 = vld [vmem:[#allocation3 + $0x718] sm:$0xf]
    %v3653 = vld [vmem:[#allocation3 + $0x71c] sm:$0xff]
    %v3654 = vld [vmem:[#allocation3 + $0x724] sm:$0xff]
    %v3655 = vld [vmem:[#allocation3 + $0x72c] sm:$0xff]
    %v3656 = vld [vmem:[#allocation3 + $0x734] sm:$0xf]
    %v3657 = vld [vmem:[#allocation3 + $0x738] sm:$0xff]
    %v3658 = vld [vmem:[#allocation3 + $0x740] sm:$0xff]
    %v3659 = vld [vmem:[#allocation3 + $0x748] sm:$0xff]
    %v3660 = vld [vmem:[#allocation3 + $0x750] sm:$0xf]
    %v3661 = vld [vmem:[#allocation3 + $0x754] sm:$0xff]
    %v3662 = vld [vmem:[#allocation3 + $0x75c] sm:$0xff]
    %v3663 = vld [vmem:[#allocation3 + $0x764] sm:$0xff]
    %v3664 = vld [vmem:[#allocation3 + $0x76c] sm:$0xf]
    %v3665 = vld [vmem:[#allocation3 + $0x770] sm:$0xff]
    %v3666 = vld [vmem:[#allocation3 + $0x778] sm:$0xff]
    %v3667 = vld [vmem:[#allocation3 + $0x780] sm:$0xff]
    %v3668 = vld [vmem:[#allocation3 + $0x788] sm:$0xf]
    %v3669 = vld [vmem:[#allocation3 + $0x78c] sm:$0xff]
    %v3670 = vld [vmem:[#allocation3 + $0x794] sm:$0xff]
    %v3671 = vld [vmem:[#allocation3 + $0x79c] sm:$0xff]
    %v3672 = vld [vmem:[#allocation3 + $0x7a4] sm:$0xf]
    %v3673 = vld [vmem:[#allocation3 + $0x7a8] sm:$0xff]
    %v3674 = vld [vmem:[#allocation3 + $0x7b0] sm:$0xff]
    %v3675 = vld [vmem:[#allocation3 + $0x7b8] sm:$0xff]
    %v3676 = vld [vmem:[#allocation3 + $0x7c0] sm:$0xf]
    %v3677 = vld [vmem:[#allocation3 + $0x7c4] sm:$0xff]
    %v3678 = vld [vmem:[#allocation3 + $0x7cc] sm:$0xff]
    %v3679 = vld [vmem:[#allocation3 + $0x7d4] sm:$0xff]
    %v3680 = vld [vmem:[#allocation3 + $0x7dc] sm:$0xf]
    %v3681 = vld [vmem:[#allocation3 + $0x7e0] sm:$0xff]
    %v3682 = vld [vmem:[#allocation3 + $0x7e8] sm:$0xff]
    %v3683 = vld [vmem:[#allocation3 + $0x7f0] sm:$0xff]
    %v3684 = vld [vmem:[#allocation3 + $0x7f8] sm:$0xf]
    %v3685 = vld [vmem:[#allocation3 + $0x7fc] sm:$0xff]
    %v3686 = vld [vmem:[#allocation3 + $0x804] sm:$0xff]
    %v3687 = vld [vmem:[#allocation3 + $0x80c] sm:$0xff]
    %v3688 = vld [vmem:[#allocation3 + $0x814] sm:$0xf]
    %v3689 = vld [vmem:[#allocation3 + $0x818] sm:$0xff]
    %v3690 = vld [vmem:[#allocation3 + $0x820] sm:$0xff]
    %v3691 = vld [vmem:[#allocation3 + $0x828] sm:$0xff]
    %v3692 = vld [vmem:[#allocation3 + $0x830] sm:$0xf]
    %v3693 = vld [vmem:[#allocation3 + $0x834] sm:$0xff]
    %v3694 = vld [vmem:[#allocation3 + $0x83c] sm:$0xff]
    %v3695 = vld [vmem:[#allocation3 + $0x844] sm:$0xff]
    %v3696 = vld [vmem:[#allocation3 + $0x84c] sm:$0xf]
    %v3697 = vld [vmem:[#allocation3 + $0x850] sm:$0xff]
    %v3698 = vld [vmem:[#allocation3 + $0x858] sm:$0xff]
    %v3699 = vld [vmem:[#allocation3 + $0x860] sm:$0xff]
    %v3700 = vld [vmem:[#allocation3 + $0x868] sm:$0xf]
    %v3701 = vld [vmem:[#allocation3 + $0x86c] sm:$0xff]
    %v3702 = vld [vmem:[#allocation3 + $0x874] sm:$0xff]
    %v3703 = vld [vmem:[#allocation3 + $0x87c] sm:$0xff]
    %v3704 = vld [vmem:[#allocation3 + $0x884] sm:$0xf]
    %v3705 = vld [vmem:[#allocation3 + $0x888] sm:$0xff]
    %v3706 = vld [vmem:[#allocation3 + $0x890] sm:$0xff]
    %v3707 = vld [vmem:[#allocation3 + $0x898] sm:$0xff]
    %v3708 = vld [vmem:[#allocation3 + $0x8a0] sm:$0xf]
    %v3709 = vld [vmem:[#allocation3 + $0x8a4] sm:$0xff]
    %v3710 = vld [vmem:[#allocation3 + $0x8ac] sm:$0xff]
    %v3711 = vld [vmem:[#allocation3 + $0x8b4] sm:$0xff]
    %v3712 = vld [vmem:[#allocation3 + $0x8bc] sm:$0xf]
    %v3713 = vld [vmem:[#allocation3 + $0x8c0] sm:$0xff]
    %v3714 = vld [vmem:[#allocation3 + $0x8c8] sm:$0xff]
    %v3715 = vld [vmem:[#allocation3 + $0x8d0] sm:$0xff]
    %v3716 = vld [vmem:[#allocation3 + $0x8d8] sm:$0xf]
    %v3717 = vld [vmem:[#allocation3 + $0x8dc] sm:$0xff]
    %v3718 = vld [vmem:[#allocation3 + $0x8e4] sm:$0xff]
    %v3719 = vld [vmem:[#allocation3 + $0x8ec] sm:$0xff]
    %v3720 = vld [vmem:[#allocation3 + $0x8f4] sm:$0xf]
    %v3721 = vld [vmem:[#allocation3 + $0x8f8] sm:$0xff]
    %v3722 = vld [vmem:[#allocation3 + $0x900] sm:$0xff]
    %v3723 = vld [vmem:[#allocation3 + $0x908] sm:$0xff]
    %v3724 = vld [vmem:[#allocation3 + $0x910] sm:$0xf]
    %v3725 = vld [vmem:[#allocation3 + $0x914] sm:$0xff]
    %v3726 = vld [vmem:[#allocation3 + $0x91c] sm:$0xff]
    %v3727 = vld [vmem:[#allocation3 + $0x924] sm:$0xff]
    %v3728 = vld [vmem:[#allocation3 + $0x92c] sm:$0xf]
    %v3729 = vld [vmem:[#allocation3 + $0x930] sm:$0xff]
    %v3730 = vld [vmem:[#allocation3 + $0x938] sm:$0xff]
    %v3731 = vld [vmem:[#allocation3 + $0x940] sm:$0xff]
    %v3732 = vld [vmem:[#allocation3 + $0x948] sm:$0xf]
    %v3733 = vld [vmem:[#allocation3 + $0x94c] sm:$0xff]
    %v3734 = vld [vmem:[#allocation3 + $0x954] sm:$0xff]
    %v3735 = vld [vmem:[#allocation3 + $0x95c] sm:$0xff]
    %v3736 = vld [vmem:[#allocation3 + $0x964] sm:$0xf]
    %v3737 = vld [vmem:[#allocation3 + $0x968] sm:$0xff]
    %v3738 = vld [vmem:[#allocation3 + $0x970] sm:$0xff]
    %v3739 = vld [vmem:[#allocation3 + $0x978] sm:$0xff]
    %v3740 = vld [vmem:[#allocation3 + $0x980] sm:$0xf]
    %v3741 = vld [vmem:[#allocation3 + $0x984] sm:$0xff]
    %v3742 = vld [vmem:[#allocation3 + $0x98c] sm:$0xff]
    %v3743 = vld [vmem:[#allocation3 + $0x994] sm:$0xff]
    %v3744 = vld [vmem:[#allocation3 + $0x99c] sm:$0xf]
    %v3745 = vld [vmem:[#allocation3 + $0x9a0] sm:$0xff]
    %v3746 = vld [vmem:[#allocation3 + $0x9a8] sm:$0xff]
    %v3747 = vld [vmem:[#allocation3 + $0x9b0] sm:$0xff]
    %v3748 = vld [vmem:[#allocation3 + $0x9b8] sm:$0xf]
    %v3749 = vld [vmem:[#allocation3 + $0x9bc] sm:$0xff]
    %v3750 = vld [vmem:[#allocation3 + $0x9c4] sm:$0xff]
    %v3751 = vld [vmem:[#allocation3 + $0x9cc] sm:$0xff]
    %v3752 = vld [vmem:[#allocation3 + $0x9d4] sm:$0xf]
    %v3753 = vld [vmem:[#allocation3 + $0x9d8] sm:$0xff]
    %v3754 = vld [vmem:[#allocation3 + $0x9e0] sm:$0xff]
    %v3755 = vld [vmem:[#allocation3 + $0x9e8] sm:$0xff]
    %v3756 = vld [vmem:[#allocation3 + $0x9f0] sm:$0xf]
    %v3757 = vld [vmem:[#allocation3 + $0x9f4] sm:$0xff]
    %v3758 = vld [vmem:[#allocation3 + $0x9fc] sm:$0xff]
    %v3759 = vld [vmem:[#allocation3 + $0xa04] sm:$0xff]
    %v3760 = vld [vmem:[#allocation3 + $0xa0c] sm:$0xf]
    %v3761 = vld [vmem:[#allocation3 + $0xa10] sm:$0xff]
    %v3762 = vld [vmem:[#allocation3 + $0xa18] sm:$0xff]
    %v3763 = vld [vmem:[#allocation3 + $0xa20] sm:$0xff]
    %v3764 = vld [vmem:[#allocation3 + $0xa28] sm:$0xf]
    %v3765 = vld [vmem:[#allocation3 + $0xa2c] sm:$0xff]
    %v3766 = vld [vmem:[#allocation3 + $0xa34] sm:$0xff]
    %v3767 = vld [vmem:[#allocation3 + $0xa3c] sm:$0xff]
    %v3768 = vld [vmem:[#allocation3 + $0xa44] sm:$0xf]
    %v3769 = vld [vmem:[#allocation3 + $0xa48] sm:$0xff]
    %v3770 = vld [vmem:[#allocation3 + $0xa50] sm:$0xff]
    %v3771 = vld [vmem:[#allocation3 + $0xa58] sm:$0xff]
    %v3772 = vld [vmem:[#allocation3 + $0xa60] sm:$0xf]
    %v3773 = vld [vmem:[#allocation3 + $0xa64] sm:$0xff]
    %v3774 = vld [vmem:[#allocation3 + $0xa6c] sm:$0xff]
    %v3775 = vld [vmem:[#allocation3 + $0xa74] sm:$0xff]
    %v3776 = vld [vmem:[#allocation3 + $0xa7c] sm:$0xf]
    %v3777 = vld [vmem:[#allocation3 + $0xa80] sm:$0xff]
    %v3778 = vld [vmem:[#allocation3 + $0xa88] sm:$0xff]
    %v3779 = vld [vmem:[#allocation3 + $0xa90] sm:$0xff]
    %v3780 = vld [vmem:[#allocation3 + $0xa98] sm:$0xf]
    %v3781 = vld [vmem:[#allocation3 + $0xa9c] sm:$0xff]
    %v3782 = vld [vmem:[#allocation3 + $0xaa4] sm:$0xff]
    %v3783 = vld [vmem:[#allocation3 + $0xaac] sm:$0xff]
    %v3784 = vld [vmem:[#allocation3 + $0xab4] sm:$0xf]
    %v3785 = vld [vmem:[#allocation3 + $0xab8] sm:$0xff]
    %v3786 = vld [vmem:[#allocation3 + $0xac0] sm:$0xff]
    %v3787 = vld [vmem:[#allocation3 + $0xac8] sm:$0xff]
    %v3788 = vld [vmem:[#allocation3 + $0xad0] sm:$0xf]
    %v3789 = vld [vmem:[#allocation3 + $0xad4] sm:$0xff]
    %v3790 = vld [vmem:[#allocation3 + $0xadc] sm:$0xff]
    %v3791 = vld [vmem:[#allocation3 + $0xae4] sm:$0xff]
    %v3792 = vld [vmem:[#allocation3 + $0xaec] sm:$0xf]
    %v3793 = vld [vmem:[#allocation3 + $0xaf0] sm:$0xff]
    %v3794 = vld [vmem:[#allocation3 + $0xaf8] sm:$0xff]
    %v3795 = vld [vmem:[#allocation3 + $0xb00] sm:$0xff]
    %v3796 = vld [vmem:[#allocation3 + $0xb08] sm:$0xf]
    %v3797 = vld [vmem:[#allocation3 + $0xb0c] sm:$0xff]
    %v3798 = vld [vmem:[#allocation3 + $0xb14] sm:$0xff]
    %v3799 = vld [vmem:[#allocation3 + $0xb1c] sm:$0xff]
    %v3800 = vld [vmem:[#allocation3 + $0xb24] sm:$0xf]
    %v3801 = vld [vmem:[#allocation3 + $0xb28] sm:$0xff]
    %v3802 = vld [vmem:[#allocation3 + $0xb30] sm:$0xff]
    %v3803 = vld [vmem:[#allocation3 + $0xb38] sm:$0xff]
    %v3804 = vld [vmem:[#allocation3 + $0xb40] sm:$0xf]
    %v3805 = vld [vmem:[#allocation3 + $0xb44] sm:$0xff]
    %v3806 = vld [vmem:[#allocation3 + $0xb4c] sm:$0xff]
    %v3807 = vld [vmem:[#allocation3 + $0xb54] sm:$0xff]
    %v3808 = vld [vmem:[#allocation3 + $0xb5c] sm:$0xf]
    %v3809 = vld [vmem:[#allocation3 + $0xb60] sm:$0xff]
    %v3810 = vld [vmem:[#allocation3 + $0xb68] sm:$0xff]
    %v3811 = vld [vmem:[#allocation3 + $0xb70] sm:$0xff]
    %v3812 = vld [vmem:[#allocation3 + $0xb78] sm:$0xf]
    %v3813 = vld [vmem:[#allocation3 + $0xb7c] sm:$0xff]
    %v3814 = vld [vmem:[#allocation3 + $0xb84] sm:$0xff]
    %v3815 = vld [vmem:[#allocation3 + $0xb8c] sm:$0xff]
    %v3816 = vld [vmem:[#allocation3 + $0xb94] sm:$0xf]
    %v3817 = vld [vmem:[#allocation3 + $0xb98] sm:$0xff]
    %v3818 = vld [vmem:[#allocation3 + $0xba0] sm:$0xff]
    %v3819 = vld [vmem:[#allocation3 + $0xba8] sm:$0xff]
    %v3820 = vld [vmem:[#allocation3 + $0xbb0] sm:$0xf]
    %v3821 = vld [vmem:[#allocation3 + $0xbb4] sm:$0xff]
    %v3822 = vld [vmem:[#allocation3 + $0xbbc] sm:$0xff]
    %v3823 = vld [vmem:[#allocation3 + $0xbc4] sm:$0xff]
    %v3824 = vld [vmem:[#allocation3 + $0xbcc] sm:$0xf]
    %v3825 = vld [vmem:[#allocation3 + $0xbd0] sm:$0xff]
    %v3826 = vld [vmem:[#allocation3 + $0xbd8] sm:$0xff]
    %v3827 = vld [vmem:[#allocation3 + $0xbe0] sm:$0xff]
    %v3828 = vld [vmem:[#allocation3 + $0xbe8] sm:$0xf]
    %v3829 = vld [vmem:[#allocation3 + $0xbec] sm:$0xff]
    %v3830 = vld [vmem:[#allocation3 + $0xbf4] sm:$0xff]
    %v3831 = vld [vmem:[#allocation3 + $0xbfc] sm:$0xff]
    %v3832 = vld [vmem:[#allocation3 + $0xc04] sm:$0xf]
    %v3833 = vld [vmem:[#allocation3 + $0xc08] sm:$0xff]
    %v3834 = vld [vmem:[#allocation3 + $0xc10] sm:$0xff]
    %v3835 = vld [vmem:[#allocation3 + $0xc18] sm:$0xff]
    %v3836 = vld [vmem:[#allocation3 + $0xc20] sm:$0xf]
    %v3837 = vld [vmem:[#allocation3 + $0xc24] sm:$0xff]
    %v3838 = vld [vmem:[#allocation3 + $0xc2c] sm:$0xff]
    %v3839 = vld [vmem:[#allocation3 + $0xc34] sm:$0xff]
    %v3840 = vld [vmem:[#allocation3 + $0xc3c] sm:$0xf]
    %v3841 = vld [vmem:[#allocation3 + $0xc40] sm:$0xff]
    %v3842 = vld [vmem:[#allocation3 + $0xc48] sm:$0xff]
    %v3843 = vld [vmem:[#allocation3 + $0xc50] sm:$0xff]
    %v3844 = vld [vmem:[#allocation3 + $0xc58] sm:$0xf]
    %v3845 = vld [vmem:[#allocation3 + $0xc5c] sm:$0xff]
    %v3846 = vld [vmem:[#allocation3 + $0xc64] sm:$0xff]
    %v3847 = vld [vmem:[#allocation3 + $0xc6c] sm:$0xff]
    %v3848 = vld [vmem:[#allocation3 + $0xc74] sm:$0xf]
    %v3849 = vld [vmem:[#allocation3 + $0xc78] sm:$0xff]
    %v3850 = vld [vmem:[#allocation3 + $0xc80] sm:$0xff]
    %v3851 = vld [vmem:[#allocation3 + $0xc88] sm:$0xff]
    %v3852 = vld [vmem:[#allocation3 + $0xc90] sm:$0xf]
    %v3853 = vld [vmem:[#allocation3 + $0xc94] sm:$0xff]
    %v3854 = vld [vmem:[#allocation3 + $0xc9c] sm:$0xff]
    %v3855 = vld [vmem:[#allocation3 + $0xca4] sm:$0xff]
    %v3856 = vld [vmem:[#allocation3 + $0xcac] sm:$0xf]
    %v3857 = vld [vmem:[#allocation3 + $0xcb0] sm:$0xff]
    %v3858 = vld [vmem:[#allocation3 + $0xcb8] sm:$0xff]
    %v3859 = vld [vmem:[#allocation3 + $0xcc0] sm:$0xff]
    %v3860 = vld [vmem:[#allocation3 + $0xcc8] sm:$0xf]
    %v3861 = vld [vmem:[#allocation3 + $0xccc] sm:$0xff]
    %v3862 = vld [vmem:[#allocation3 + $0xcd4] sm:$0xff]
    %v3863 = vld [vmem:[#allocation3 + $0xcdc] sm:$0xff]
    %v3864 = vld [vmem:[#allocation3 + $0xce4] sm:$0xf]
    %v3865 = vld [vmem:[#allocation3 + $0xce8] sm:$0xff]
    %v3866 = vld [vmem:[#allocation3 + $0xcf0] sm:$0xff]
    %v3867 = vld [vmem:[#allocation3 + $0xcf8] sm:$0xff]
    %v3868 = vld [vmem:[#allocation3 + $0xd00] sm:$0xf]
    %v3869 = vld [vmem:[#allocation3 + $0xd04] sm:$0xff]
    %v3870 = vld [vmem:[#allocation3 + $0xd0c] sm:$0xff]
    %v3871 = vld [vmem:[#allocation3 + $0xd14] sm:$0xff]
    %v3872 = vld [vmem:[#allocation3 + $0xd1c] sm:$0xf]
    %v3873 = vld [vmem:[#allocation3 + $0xd20] sm:$0xff]
    %v3874 = vld [vmem:[#allocation3 + $0xd28] sm:$0xff]
    %v3875 = vld [vmem:[#allocation3 + $0xd30] sm:$0xff]
    %v3876 = vld [vmem:[#allocation3 + $0xd38] sm:$0xf]
    %v3877 = vld [vmem:[#allocation3 + $0xd3c] sm:$0xff]
    %v3878 = vld [vmem:[#allocation3 + $0xd44] sm:$0xff]
    %v3879 = vld [vmem:[#allocation3 + $0xd4c] sm:$0xff]
    %v3880 = vld [vmem:[#allocation3 + $0xd54] sm:$0xf]
    %v3881 = vld [vmem:[#allocation3 + $0xd58] sm:$0xff]
    %v3882 = vld [vmem:[#allocation3 + $0xd60] sm:$0xff]
    %v3883 = vld [vmem:[#allocation3 + $0xd68] sm:$0xff]
    %v3884 = vld [vmem:[#allocation3 + $0xd70] sm:$0xf]
    %v3885 = vld [vmem:[#allocation3 + $0xd74] sm:$0xff]
    %v3886 = vld [vmem:[#allocation3 + $0xd7c] sm:$0xff]
    %v3887 = vld [vmem:[#allocation3 + $0xd84] sm:$0xff]
    %v3888 = vld [vmem:[#allocation3 + $0xd8c] sm:$0xf]
    %v3889 = vld [vmem:[#allocation3 + $0xd90] sm:$0xff]
    %v3890 = vld [vmem:[#allocation3 + $0xd98] sm:$0xff]
    %v3891 = vld [vmem:[#allocation3 + $0xda0] sm:$0xff]
    %v3892 = vld [vmem:[#allocation3 + $0xda8] sm:$0xf]
    %v3893 = vld [vmem:[#allocation3 + $0xdac] sm:$0xff]
    %v3894 = vld [vmem:[#allocation3 + $0xdb4] sm:$0xff]
    %v3895 = vld [vmem:[#allocation3 + $0xdbc] sm:$0xff]
    %v3896 = vld [vmem:[#allocation3 + $0xdc4] sm:$0xf]
    %v3897 = vld [vmem:[#allocation3 + $0xdc8] sm:$0xff]
    %v3898 = vld [vmem:[#allocation3 + $0xdd0] sm:$0xff]
    %v3899 = vld [vmem:[#allocation3 + $0xdd8] sm:$0xff]
    %v3900 = vld [vmem:[#allocation3 + $0xde0] sm:$0xf]
    %v3901 = vld [vmem:[#allocation3 + $0xde4] sm:$0xff]
    %v3902 = vld [vmem:[#allocation3 + $0xdec] sm:$0xff]
    %v3903 = vld [vmem:[#allocation3 + $0xdf4] sm:$0xff]
    %v3904 = vld [vmem:[#allocation3 + $0xdfc] sm:$0xf]
    %v3905 = vpack.c.bf16 %v3381, %v3381
    %v3906 = vpack.c.bf16 %v3382, %v3382
    %v3907 = vpack.c.bf16 %v3383, %v3383
    %v3908 = vpack.c.bf16 %v3384, %v3384
    %v3909 = vpack.c.bf16 %v3385, %v3385
    %v3910 = vpack.c.bf16 %v3386, %v3386
    %v3911 = vpack.c.bf16 %v3387, %v3387
    %v3912 = vpack.c.bf16 %v3388, %v3388
    %v3913 = vld [vmem:[#allocation10 + $0x1d] sm:$0xff]
    %v3915 = vperm.slane %v3913, 0
    %v3916 = vperm.slane %v3913, 1
    %v3917 = vperm.slane %v3913, 2
    %v3918 = vperm.slane %v3913, 3
    %v3919 = vperm.slane %v3913, 4
    %v3920 = vperm.slane %v3913, 5
    %v3921 = vperm.slane %v3913, 6
    %v4441 = vunpack.c.l.b16 %v3393
    %v4442 = vunpack.c.h.b16 %v3393
    %v4443 = vunpack.c.l.b16 %v3394
    %v4444 = vunpack.c.h.b16 %v3394
    %v4445 = vunpack.c.l.b16 %v3395
    %v4446 = vunpack.c.h.b16 %v3395
    %v4447 = vunpack.c.l.b16 %v3396
    %v4448 = vunpack.c.l.b16 %v3397
    %v4449 = vunpack.c.h.b16 %v3397
    %v4450 = vunpack.c.l.b16 %v3398
    %v4451 = vunpack.c.h.b16 %v3398
    %v4452 = vunpack.c.l.b16 %v3399
    %v4453 = vunpack.c.h.b16 %v3399
    %v4454 = vunpack.c.l.b16 %v3400
    %v4455 = vunpack.c.l.b16 %v3401
    %v4456 = vunpack.c.h.b16 %v3401
    %v4457 = vunpack.c.l.b16 %v3402
    %v4458 = vunpack.c.h.b16 %v3402
    %v4459 = vunpack.c.l.b16 %v3403
    %v4460 = vunpack.c.h.b16 %v3403
    %v4461 = vunpack.c.l.b16 %v3404
    %v4462 = vunpack.c.l.b16 %v3405
    %v4463 = vunpack.c.h.b16 %v3405
    %v4464 = vunpack.c.l.b16 %v3406
    %v4465 = vunpack.c.h.b16 %v3406
    %v4466 = vunpack.c.l.b16 %v3407
    %v4467 = vunpack.c.h.b16 %v3407
    %v4468 = vunpack.c.l.b16 %v3408
    %v4469 = vunpack.c.l.b16 %v3409
    %v4470 = vunpack.c.h.b16 %v3409
    %v4471 = vunpack.c.l.b16 %v3410
    %v4472 = vunpack.c.h.b16 %v3410
    %v4473 = vunpack.c.l.b16 %v3411
    %v4474 = vunpack.c.h.b16 %v3411
    %v4475 = vunpack.c.l.b16 %v3412
    %v4476 = vunpack.c.l.b16 %v3413
    %v4477 = vunpack.c.h.b16 %v3413
    %v4478 = vunpack.c.l.b16 %v3414
    %v4479 = vunpack.c.h.b16 %v3414
    %v4480 = vunpack.c.l.b16 %v3415
    %v4481 = vunpack.c.h.b16 %v3415
    %v4482 = vunpack.c.l.b16 %v3416
    %v4483 = vunpack.c.l.b16 %v3417
    %v4484 = vunpack.c.h.b16 %v3417
    %v4485 = vunpack.c.l.b16 %v3418
    %v4486 = vunpack.c.h.b16 %v3418
    %v4487 = vunpack.c.l.b16 %v3419
    %v4488 = vunpack.c.h.b16 %v3419
    %v4489 = vunpack.c.l.b16 %v3420
    %v4490 = vunpack.c.l.b16 %v3421
    %v4491 = vunpack.c.h.b16 %v3421
    %v4492 = vunpack.c.l.b16 %v3422
    %v4493 = vunpack.c.h.b16 %v3422
    %v4494 = vunpack.c.l.b16 %v3423
    %v4495 = vunpack.c.h.b16 %v3423
    %v4496 = vunpack.c.l.b16 %v3424
    %v4497 = vunpack.c.l.b16 %v3425
    %v4498 = vunpack.c.h.b16 %v3425
    %v4499 = vunpack.c.l.b16 %v3426
    %v4500 = vunpack.c.h.b16 %v3426
    %v4501 = vunpack.c.l.b16 %v3427
    %v4502 = vunpack.c.h.b16 %v3427
    %v4503 = vunpack.c.l.b16 %v3428
    %v4504 = vunpack.c.l.b16 %v3429
    %v4505 = vunpack.c.h.b16 %v3429
    %v4506 = vunpack.c.l.b16 %v3430
    %v4507 = vunpack.c.h.b16 %v3430
    %v4508 = vunpack.c.l.b16 %v3431
    %v4509 = vunpack.c.h.b16 %v3431
    %v4510 = vunpack.c.l.b16 %v3432
    %v4511 = vunpack.c.l.b16 %v3433
    %v4512 = vunpack.c.h.b16 %v3433
    %v4513 = vunpack.c.l.b16 %v3434
    %v4514 = vunpack.c.h.b16 %v3434
    %v4515 = vunpack.c.l.b16 %v3435
    %v4516 = vunpack.c.h.b16 %v3435
    %v4517 = vunpack.c.l.b16 %v3436
    %v4518 = vunpack.c.l.b16 %v3437
    %v4519 = vunpack.c.h.b16 %v3437
    %v4520 = vunpack.c.l.b16 %v3438
    %v4521 = vunpack.c.h.b16 %v3438
    %v4522 = vunpack.c.l.b16 %v3439
    %v4523 = vunpack.c.h.b16 %v3439
    %v4524 = vunpack.c.l.b16 %v3440
    %v4525 = vunpack.c.l.b16 %v3441
    %v4526 = vunpack.c.h.b16 %v3441
    %v4527 = vunpack.c.l.b16 %v3442
    %v4528 = vunpack.c.h.b16 %v3442
    %v4529 = vunpack.c.l.b16 %v3443
    %v4530 = vunpack.c.h.b16 %v3443
    %v4531 = vunpack.c.l.b16 %v3444
    %v4532 = vunpack.c.l.b16 %v3445
    %v4533 = vunpack.c.h.b16 %v3445
    %v4534 = vunpack.c.l.b16 %v3446
    %v4535 = vunpack.c.h.b16 %v3446
    %v4536 = vunpack.c.l.b16 %v3447
    %v4537 = vunpack.c.h.b16 %v3447
    %v4538 = vunpack.c.l.b16 %v3448
    %v4539 = vunpack.c.l.b16 %v3449
    %v4540 = vunpack.c.h.b16 %v3449
    %v4541 = vunpack.c.l.b16 %v3450
    %v4542 = vunpack.c.h.b16 %v3450
    %v4543 = vunpack.c.l.b16 %v3451
    %v4544 = vunpack.c.h.b16 %v3451
    %v4545 = vunpack.c.l.b16 %v3452
    %v4546 = vunpack.c.l.b16 %v3453
    %v4547 = vunpack.c.h.b16 %v3453
    %v4548 = vunpack.c.l.b16 %v3454
    %v4549 = vunpack.c.h.b16 %v3454
    %v4550 = vunpack.c.l.b16 %v3455
    %v4551 = vunpack.c.h.b16 %v3455
    %v4552 = vunpack.c.l.b16 %v3456
    %v4553 = vunpack.c.l.b16 %v3457
    %v4554 = vunpack.c.h.b16 %v3457
    %v4555 = vunpack.c.l.b16 %v3458
    %v4556 = vunpack.c.h.b16 %v3458
    %v4557 = vunpack.c.l.b16 %v3459
    %v4558 = vunpack.c.h.b16 %v3459
    %v4559 = vunpack.c.l.b16 %v3460
    %v4560 = vunpack.c.l.b16 %v3461
    %v4561 = vunpack.c.h.b16 %v3461
    %v4562 = vunpack.c.l.b16 %v3462
    %v4563 = vunpack.c.h.b16 %v3462
    %v4564 = vunpack.c.l.b16 %v3463
    %v4565 = vunpack.c.h.b16 %v3463
    %v4566 = vunpack.c.l.b16 %v3464
    %v4567 = vunpack.c.l.b16 %v3465
    %v4568 = vunpack.c.h.b16 %v3465
    %v4569 = vunpack.c.l.b16 %v3466
    %v4570 = vunpack.c.h.b16 %v3466
    %v4571 = vunpack.c.l.b16 %v3467
    %v4572 = vunpack.c.h.b16 %v3467
    %v4573 = vunpack.c.l.b16 %v3468
    %v4574 = vunpack.c.l.b16 %v3469
    %v4575 = vunpack.c.h.b16 %v3469
    %v4576 = vunpack.c.l.b16 %v3470
    %v4577 = vunpack.c.h.b16 %v3470
    %v4578 = vunpack.c.l.b16 %v3471
    %v4579 = vunpack.c.h.b16 %v3471
    %v4580 = vunpack.c.l.b16 %v3472
    %v4581 = vunpack.c.l.b16 %v3473
    %v4582 = vunpack.c.h.b16 %v3473
    %v4583 = vunpack.c.l.b16 %v3474
    %v4584 = vunpack.c.h.b16 %v3474
    %v4585 = vunpack.c.l.b16 %v3475
    %v4586 = vunpack.c.h.b16 %v3475
    %v4587 = vunpack.c.l.b16 %v3476
    %v4588 = vunpack.c.l.b16 %v3477
    %v4589 = vunpack.c.h.b16 %v3477
    %v4590 = vunpack.c.l.b16 %v3478
    %v4591 = vunpack.c.h.b16 %v3478
    %v4592 = vunpack.c.l.b16 %v3479
    %v4593 = vunpack.c.h.b16 %v3479
    %v4594 = vunpack.c.l.b16 %v3480
    %v4595 = vunpack.c.l.b16 %v3481
    %v4596 = vunpack.c.h.b16 %v3481
    %v4597 = vunpack.c.l.b16 %v3482
    %v4598 = vunpack.c.h.b16 %v3482
    %v4599 = vunpack.c.l.b16 %v3483
    %v4600 = vunpack.c.h.b16 %v3483
    %v4601 = vunpack.c.l.b16 %v3484
    %v4602 = vunpack.c.l.b16 %v3485
    %v4603 = vunpack.c.h.b16 %v3485
    %v4604 = vunpack.c.l.b16 %v3486
    %v4605 = vunpack.c.h.b16 %v3486
    %v4606 = vunpack.c.l.b16 %v3487
    %v4607 = vunpack.c.h.b16 %v3487
    %v4608 = vunpack.c.l.b16 %v3488
    %v4609 = vunpack.c.l.b16 %v3489
    %v4610 = vunpack.c.h.b16 %v3489
    %v4611 = vunpack.c.l.b16 %v3490
    %v4612 = vunpack.c.h.b16 %v3490
    %v4613 = vunpack.c.l.b16 %v3491
    %v4614 = vunpack.c.h.b16 %v3491
    %v4615 = vunpack.c.l.b16 %v3492
    %v4616 = vunpack.c.l.b16 %v3493
    %v4617 = vunpack.c.h.b16 %v3493
    %v4618 = vunpack.c.l.b16 %v3494
    %v4619 = vunpack.c.h.b16 %v3494
    %v4620 = vunpack.c.l.b16 %v3495
    %v4621 = vunpack.c.h.b16 %v3495
    %v4622 = vunpack.c.l.b16 %v3496
    %v4623 = vunpack.c.l.b16 %v3497
    %v4624 = vunpack.c.h.b16 %v3497
    %v4625 = vunpack.c.l.b16 %v3498
    %v4626 = vunpack.c.h.b16 %v3498
    %v4627 = vunpack.c.l.b16 %v3499
    %v4628 = vunpack.c.h.b16 %v3499
    %v4629 = vunpack.c.l.b16 %v3500
    %v4630 = vunpack.c.l.b16 %v3501
    %v4631 = vunpack.c.h.b16 %v3501
    %v4632 = vunpack.c.l.b16 %v3502
    %v4633 = vunpack.c.h.b16 %v3502
    %v4634 = vunpack.c.l.b16 %v3503
    %v4635 = vunpack.c.h.b16 %v3503
    %v4636 = vunpack.c.l.b16 %v3504
    %v4637 = vunpack.c.l.b16 %v3505
    %v4638 = vunpack.c.h.b16 %v3505
    %v4639 = vunpack.c.l.b16 %v3506
    %v4640 = vunpack.c.h.b16 %v3506
    %v4641 = vunpack.c.l.b16 %v3507
    %v4642 = vunpack.c.h.b16 %v3507
    %v4643 = vunpack.c.l.b16 %v3508
    %v4644 = vunpack.c.l.b16 %v3509
    %v4645 = vunpack.c.h.b16 %v3509
    %v4646 = vunpack.c.l.b16 %v3510
    %v4647 = vunpack.c.h.b16 %v3510
    %v4648 = vunpack.c.l.b16 %v3511
    %v4649 = vunpack.c.h.b16 %v3511
    %v4650 = vunpack.c.l.b16 %v3512
    %v4651 = vunpack.c.l.b16 %v3513
    %v4652 = vunpack.c.h.b16 %v3513
    %v4653 = vunpack.c.l.b16 %v3514
    %v4654 = vunpack.c.h.b16 %v3514
    %v4655 = vunpack.c.l.b16 %v3515
    %v4656 = vunpack.c.h.b16 %v3515
    %v4657 = vunpack.c.l.b16 %v3516
    %v4658 = vunpack.c.l.b16 %v3517
    %v4659 = vunpack.c.h.b16 %v3517
    %v4660 = vunpack.c.l.b16 %v3518
    %v4661 = vunpack.c.h.b16 %v3518
    %v4662 = vunpack.c.l.b16 %v3519
    %v4663 = vunpack.c.h.b16 %v3519
    %v4664 = vunpack.c.l.b16 %v3520
    %v4665 = vunpack.c.l.b16 %v3521
    %v4666 = vunpack.c.h.b16 %v3521
    %v4667 = vunpack.c.l.b16 %v3522
    %v4668 = vunpack.c.h.b16 %v3522
    %v4669 = vunpack.c.l.b16 %v3523
    %v4670 = vunpack.c.h.b16 %v3523
    %v4671 = vunpack.c.l.b16 %v3524
    %v4672 = vunpack.c.l.b16 %v3525
    %v4673 = vunpack.c.h.b16 %v3525
    %v4674 = vunpack.c.l.b16 %v3526
    %v4675 = vunpack.c.h.b16 %v3526
    %v4676 = vunpack.c.l.b16 %v3527
    %v4677 = vunpack.c.h.b16 %v3527
    %v4678 = vunpack.c.l.b16 %v3528
    %v4679 = vunpack.c.l.b16 %v3529
    %v4680 = vunpack.c.h.b16 %v3529
    %v4681 = vunpack.c.l.b16 %v3530
    %v4682 = vunpack.c.h.b16 %v3530
    %v4683 = vunpack.c.l.b16 %v3531
    %v4684 = vunpack.c.h.b16 %v3531
    %v4685 = vunpack.c.l.b16 %v3532
    %v4686 = vunpack.c.l.b16 %v3533
    %v4687 = vunpack.c.h.b16 %v3533
    %v4688 = vunpack.c.l.b16 %v3534
    %v4689 = vunpack.c.h.b16 %v3534
    %v4690 = vunpack.c.l.b16 %v3535
    %v4691 = vunpack.c.h.b16 %v3535
    %v4692 = vunpack.c.l.b16 %v3536
    %v4693 = vunpack.c.l.b16 %v3537
    %v4694 = vunpack.c.h.b16 %v3537
    %v4695 = vunpack.c.l.b16 %v3538
    %v4696 = vunpack.c.h.b16 %v3538
    %v4697 = vunpack.c.l.b16 %v3539
    %v4698 = vunpack.c.h.b16 %v3539
    %v4699 = vunpack.c.l.b16 %v3540
    %v4700 = vunpack.c.l.b16 %v3541
    %v4701 = vunpack.c.h.b16 %v3541
    %v4702 = vunpack.c.l.b16 %v3542
    %v4703 = vunpack.c.h.b16 %v3542
    %v4704 = vunpack.c.l.b16 %v3543
    %v4705 = vunpack.c.h.b16 %v3543
    %v4706 = vunpack.c.l.b16 %v3544
    %v4707 = vunpack.c.l.b16 %v3545
    %v4708 = vunpack.c.h.b16 %v3545
    %v4709 = vunpack.c.l.b16 %v3546
    %v4710 = vunpack.c.h.b16 %v3546
    %v4711 = vunpack.c.l.b16 %v3547
    %v4712 = vunpack.c.h.b16 %v3547
    %v4713 = vunpack.c.l.b16 %v3548
    %v4714 = vunpack.c.l.b16 %v3549
    %v4715 = vunpack.c.h.b16 %v3549
    %v4716 = vunpack.c.l.b16 %v3550
    %v4717 = vunpack.c.h.b16 %v3550
    %v4718 = vunpack.c.l.b16 %v3551
    %v4719 = vunpack.c.h.b16 %v3551
    %v4720 = vunpack.c.l.b16 %v3552
    %v4721 = vunpack.c.l.b16 %v3553
    %v4722 = vunpack.c.h.b16 %v3553
    %v4723 = vunpack.c.l.b16 %v3554
    %v4724 = vunpack.c.h.b16 %v3554
    %v4725 = vunpack.c.l.b16 %v3555
    %v4726 = vunpack.c.h.b16 %v3555
    %v4727 = vunpack.c.l.b16 %v3556
    %v4728 = vunpack.c.l.b16 %v3557
    %v4729 = vunpack.c.h.b16 %v3557
    %v4730 = vunpack.c.l.b16 %v3558
    %v4731 = vunpack.c.h.b16 %v3558
    %v4732 = vunpack.c.l.b16 %v3559
    %v4733 = vunpack.c.h.b16 %v3559
    %v4734 = vunpack.c.l.b16 %v3560
    %v4735 = vunpack.c.l.b16 %v3561
    %v4736 = vunpack.c.h.b16 %v3561
    %v4737 = vunpack.c.l.b16 %v3562
    %v4738 = vunpack.c.h.b16 %v3562
    %v4739 = vunpack.c.l.b16 %v3563
    %v4740 = vunpack.c.h.b16 %v3563
    %v4741 = vunpack.c.l.b16 %v3564
    %v4742 = vunpack.c.l.b16 %v3565
    %v4743 = vunpack.c.h.b16 %v3565
    %v4744 = vunpack.c.l.b16 %v3566
    %v4745 = vunpack.c.h.b16 %v3566
    %v4746 = vunpack.c.l.b16 %v3567
    %v4747 = vunpack.c.h.b16 %v3567
    %v4748 = vunpack.c.l.b16 %v3568
    %v4749 = vunpack.c.l.b16 %v3569
    %v4750 = vunpack.c.h.b16 %v3569
    %v4751 = vunpack.c.l.b16 %v3570
    %v4752 = vunpack.c.h.b16 %v3570
    %v4753 = vunpack.c.l.b16 %v3571
    %v4754 = vunpack.c.h.b16 %v3571
    %v4755 = vunpack.c.l.b16 %v3572
    %v4756 = vunpack.c.l.b16 %v3573
    %v4757 = vunpack.c.h.b16 %v3573
    %v4758 = vunpack.c.l.b16 %v3574
    %v4759 = vunpack.c.h.b16 %v3574
    %v4760 = vunpack.c.l.b16 %v3575
    %v4761 = vunpack.c.h.b16 %v3575
    %v4762 = vunpack.c.l.b16 %v3576
    %v4763 = vunpack.c.l.b16 %v3577
    %v4764 = vunpack.c.h.b16 %v3577
    %v4765 = vunpack.c.l.b16 %v3578
    %v4766 = vunpack.c.h.b16 %v3578
    %v4767 = vunpack.c.l.b16 %v3579
    %v4768 = vunpack.c.h.b16 %v3579
    %v4769 = vunpack.c.l.b16 %v3580
    %v4770 = vunpack.c.l.b16 %v3581
    %v4771 = vunpack.c.h.b16 %v3581
    %v4772 = vunpack.c.l.b16 %v3582
    %v4773 = vunpack.c.h.b16 %v3582
    %v4774 = vunpack.c.l.b16 %v3583
    %v4775 = vunpack.c.h.b16 %v3583
    %v4776 = vunpack.c.l.b16 %v3584
    %v4777 = vunpack.c.l.b16 %v3585
    %v4778 = vunpack.c.h.b16 %v3585
    %v4779 = vunpack.c.l.b16 %v3586
    %v4780 = vunpack.c.h.b16 %v3586
    %v4781 = vunpack.c.l.b16 %v3587
    %v4782 = vunpack.c.h.b16 %v3587
    %v4783 = vunpack.c.l.b16 %v3588
    %v4784 = vunpack.c.l.b16 %v3589
    %v4785 = vunpack.c.h.b16 %v3589
    %v4786 = vunpack.c.l.b16 %v3590
    %v4787 = vunpack.c.h.b16 %v3590
    %v4788 = vunpack.c.l.b16 %v3591
    %v4789 = vunpack.c.h.b16 %v3591
    %v4790 = vunpack.c.l.b16 %v3592
    %v4791 = vunpack.c.l.b16 %v3593
    %v4792 = vunpack.c.h.b16 %v3593
    %v4793 = vunpack.c.l.b16 %v3594
    %v4794 = vunpack.c.h.b16 %v3594
    %v4795 = vunpack.c.l.b16 %v3595
    %v4796 = vunpack.c.h.b16 %v3595
    %v4797 = vunpack.c.l.b16 %v3596
    %v4798 = vunpack.c.l.b16 %v3597
    %v4799 = vunpack.c.h.b16 %v3597
    %v4800 = vunpack.c.l.b16 %v3598
    %v4801 = vunpack.c.h.b16 %v3598
    %v4802 = vunpack.c.l.b16 %v3599
    %v4803 = vunpack.c.h.b16 %v3599
    %v4804 = vunpack.c.l.b16 %v3600
    %v4805 = vunpack.c.l.b16 %v3601
    %v4806 = vunpack.c.h.b16 %v3601
    %v4807 = vunpack.c.l.b16 %v3602
    %v4808 = vunpack.c.h.b16 %v3602
    %v4809 = vunpack.c.l.b16 %v3603
    %v4810 = vunpack.c.h.b16 %v3603
    %v4811 = vunpack.c.l.b16 %v3604
    %v4812 = vunpack.c.l.b16 %v3605
    %v4813 = vunpack.c.h.b16 %v3605
    %v4814 = vunpack.c.l.b16 %v3606
    %v4815 = vunpack.c.h.b16 %v3606
    %v4816 = vunpack.c.l.b16 %v3607
    %v4817 = vunpack.c.h.b16 %v3607
    %v4818 = vunpack.c.l.b16 %v3608
    %v4819 = vunpack.c.l.b16 %v3609
    %v4820 = vunpack.c.h.b16 %v3609
    %v4821 = vunpack.c.l.b16 %v3610
    %v4822 = vunpack.c.h.b16 %v3610
    %v4823 = vunpack.c.l.b16 %v3611
    %v4824 = vunpack.c.h.b16 %v3611
    %v4825 = vunpack.c.l.b16 %v3612
    %v4826 = vunpack.c.l.b16 %v3613
    %v4827 = vunpack.c.h.b16 %v3613
    %v4828 = vunpack.c.l.b16 %v3614
    %v4829 = vunpack.c.h.b16 %v3614
    %v4830 = vunpack.c.l.b16 %v3615
    %v4831 = vunpack.c.h.b16 %v3615
    %v4832 = vunpack.c.l.b16 %v3616
    %v4833 = vunpack.c.l.b16 %v3617
    %v4834 = vunpack.c.h.b16 %v3617
    %v4835 = vunpack.c.l.b16 %v3618
    %v4836 = vunpack.c.h.b16 %v3618
    %v4837 = vunpack.c.l.b16 %v3619
    %v4838 = vunpack.c.h.b16 %v3619
    %v4839 = vunpack.c.l.b16 %v3620
    %v4840 = vunpack.c.l.b16 %v3621
    %v4841 = vunpack.c.h.b16 %v3621
    %v4842 = vunpack.c.l.b16 %v3622
    %v4843 = vunpack.c.h.b16 %v3622
    %v4844 = vunpack.c.l.b16 %v3623
    %v4845 = vunpack.c.h.b16 %v3623
    %v4846 = vunpack.c.l.b16 %v3624
    %v4847 = vunpack.c.l.b16 %v3625
    %v4848 = vunpack.c.h.b16 %v3625
    %v4849 = vunpack.c.l.b16 %v3626
    %v4850 = vunpack.c.h.b16 %v3626
    %v4851 = vunpack.c.l.b16 %v3627
    %v4852 = vunpack.c.h.b16 %v3627
    %v4853 = vunpack.c.l.b16 %v3628
    %v4854 = vunpack.c.l.b16 %v3629
    %v4855 = vunpack.c.h.b16 %v3629
    %v4856 = vunpack.c.l.b16 %v3630
    %v4857 = vunpack.c.h.b16 %v3630
    %v4858 = vunpack.c.l.b16 %v3631
    %v4859 = vunpack.c.h.b16 %v3631
    %v4860 = vunpack.c.l.b16 %v3632
    %v4861 = vunpack.c.l.b16 %v3633
    %v4862 = vunpack.c.h.b16 %v3633
    %v4863 = vunpack.c.l.b16 %v3634
    %v4864 = vunpack.c.h.b16 %v3634
    %v4865 = vunpack.c.l.b16 %v3635
    %v4866 = vunpack.c.h.b16 %v3635
    %v4867 = vunpack.c.l.b16 %v3636
    %v4868 = vunpack.c.l.b16 %v3637
    %v4869 = vunpack.c.h.b16 %v3637
    %v4870 = vunpack.c.l.b16 %v3638
    %v4871 = vunpack.c.h.b16 %v3638
    %v4872 = vunpack.c.l.b16 %v3639
    %v4873 = vunpack.c.h.b16 %v3639
    %v4874 = vunpack.c.l.b16 %v3640
    %v4875 = vunpack.c.l.b16 %v3641
    %v4876 = vunpack.c.h.b16 %v3641
    %v4877 = vunpack.c.l.b16 %v3642
    %v4878 = vunpack.c.h.b16 %v3642
    %v4879 = vunpack.c.l.b16 %v3643
    %v4880 = vunpack.c.h.b16 %v3643
    %v4881 = vunpack.c.l.b16 %v3644
    %v4882 = vunpack.c.l.b16 %v3645
    %v4883 = vunpack.c.h.b16 %v3645
    %v4884 = vunpack.c.l.b16 %v3646
    %v4885 = vunpack.c.h.b16 %v3646
    %v4886 = vunpack.c.l.b16 %v3647
    %v4887 = vunpack.c.h.b16 %v3647
    %v4888 = vunpack.c.l.b16 %v3648
    %v4889 = vunpack.c.l.b16 %v3649
    %v4890 = vunpack.c.h.b16 %v3649
    %v4891 = vunpack.c.l.b16 %v3650
    %v4892 = vunpack.c.h.b16 %v3650
    %v4893 = vunpack.c.l.b16 %v3651
    %v4894 = vunpack.c.h.b16 %v3651
    %v4895 = vunpack.c.l.b16 %v3652
    %v4896 = vunpack.c.l.b16 %v3653
    %v4897 = vunpack.c.h.b16 %v3653
    %v4898 = vunpack.c.l.b16 %v3654
    %v4899 = vunpack.c.h.b16 %v3654
    %v4900 = vunpack.c.l.b16 %v3655
    %v4901 = vunpack.c.h.b16 %v3655
    %v4902 = vunpack.c.l.b16 %v3656
    %v4903 = vunpack.c.l.b16 %v3657
    %v4904 = vunpack.c.h.b16 %v3657
    %v4905 = vunpack.c.l.b16 %v3658
    %v4906 = vunpack.c.h.b16 %v3658
    %v4907 = vunpack.c.l.b16 %v3659
    %v4908 = vunpack.c.h.b16 %v3659
    %v4909 = vunpack.c.l.b16 %v3660
    %v4910 = vunpack.c.l.b16 %v3661
    %v4911 = vunpack.c.h.b16 %v3661
    %v4912 = vunpack.c.l.b16 %v3662
    %v4913 = vunpack.c.h.b16 %v3662
    %v4914 = vunpack.c.l.b16 %v3663
    %v4915 = vunpack.c.h.b16 %v3663
    %v4916 = vunpack.c.l.b16 %v3664
    %v4917 = vunpack.c.l.b16 %v3665
    %v4918 = vunpack.c.h.b16 %v3665
    %v4919 = vunpack.c.l.b16 %v3666
    %v4920 = vunpack.c.h.b16 %v3666
    %v4921 = vunpack.c.l.b16 %v3667
    %v4922 = vunpack.c.h.b16 %v3667
    %v4923 = vunpack.c.l.b16 %v3668
    %v4924 = vunpack.c.l.b16 %v3669
    %v4925 = vunpack.c.h.b16 %v3669
    %v4926 = vunpack.c.l.b16 %v3670
    %v4927 = vunpack.c.h.b16 %v3670
    %v4928 = vunpack.c.l.b16 %v3671
    %v4929 = vunpack.c.h.b16 %v3671
    %v4930 = vunpack.c.l.b16 %v3672
    %v4931 = vunpack.c.l.b16 %v3673
    %v4932 = vunpack.c.h.b16 %v3673
    %v4933 = vunpack.c.l.b16 %v3674
    %v4934 = vunpack.c.h.b16 %v3674
    %v4935 = vunpack.c.l.b16 %v3675
    %v4936 = vunpack.c.h.b16 %v3675
    %v4937 = vunpack.c.l.b16 %v3676
    %v4938 = vunpack.c.l.b16 %v3677
    %v4939 = vunpack.c.h.b16 %v3677
    %v4940 = vunpack.c.l.b16 %v3678
    %v4941 = vunpack.c.h.b16 %v3678
    %v4942 = vunpack.c.l.b16 %v3679
    %v4943 = vunpack.c.h.b16 %v3679
    %v4944 = vunpack.c.l.b16 %v3680
    %v4945 = vunpack.c.l.b16 %v3681
    %v4946 = vunpack.c.h.b16 %v3681
    %v4947 = vunpack.c.l.b16 %v3682
    %v4948 = vunpack.c.h.b16 %v3682
    %v4949 = vunpack.c.l.b16 %v3683
    %v4950 = vunpack.c.h.b16 %v3683
    %v4951 = vunpack.c.l.b16 %v3684
    %v4952 = vunpack.c.l.b16 %v3685
    %v4953 = vunpack.c.h.b16 %v3685
    %v4954 = vunpack.c.l.b16 %v3686
    %v4955 = vunpack.c.h.b16 %v3686
    %v4956 = vunpack.c.l.b16 %v3687
    %v4957 = vunpack.c.h.b16 %v3687
    %v4958 = vunpack.c.l.b16 %v3688
    %v4959 = vunpack.c.l.b16 %v3689
    %v4960 = vunpack.c.h.b16 %v3689
    %v4961 = vunpack.c.l.b16 %v3690
    %v4962 = vunpack.c.h.b16 %v3690
    %v4963 = vunpack.c.l.b16 %v3691
    %v4964 = vunpack.c.h.b16 %v3691
    %v4965 = vunpack.c.l.b16 %v3692
    %v4966 = vunpack.c.l.b16 %v3693
    %v4967 = vunpack.c.h.b16 %v3693
    %v4968 = vunpack.c.l.b16 %v3694
    %v4969 = vunpack.c.h.b16 %v3694
    %v4970 = vunpack.c.l.b16 %v3695
    %v4971 = vunpack.c.h.b16 %v3695
    %v4972 = vunpack.c.l.b16 %v3696
    %v4973 = vunpack.c.l.b16 %v3697
    %v4974 = vunpack.c.h.b16 %v3697
    %v4975 = vunpack.c.l.b16 %v3698
    %v4976 = vunpack.c.h.b16 %v3698
    %v4977 = vunpack.c.l.b16 %v3699
    %v4978 = vunpack.c.h.b16 %v3699
    %v4979 = vunpack.c.l.b16 %v3700
    %v4980 = vunpack.c.l.b16 %v3701
    %v4981 = vunpack.c.h.b16 %v3701
    %v4982 = vunpack.c.l.b16 %v3702
    %v4983 = vunpack.c.h.b16 %v3702
    %v4984 = vunpack.c.l.b16 %v3703
    %v4985 = vunpack.c.h.b16 %v3703
    %v4986 = vunpack.c.l.b16 %v3704
    %v4987 = vunpack.c.l.b16 %v3705
    %v4988 = vunpack.c.h.b16 %v3705
    %v4989 = vunpack.c.l.b16 %v3706
    %v4990 = vunpack.c.h.b16 %v3706
    %v4991 = vunpack.c.l.b16 %v3707
    %v4992 = vunpack.c.h.b16 %v3707
    %v4993 = vunpack.c.l.b16 %v3708
    %v4994 = vunpack.c.l.b16 %v3709
    %v4995 = vunpack.c.h.b16 %v3709
    %v4996 = vunpack.c.l.b16 %v3710
    %v4997 = vunpack.c.h.b16 %v3710
    %v4998 = vunpack.c.l.b16 %v3711
    %v4999 = vunpack.c.h.b16 %v3711
    %v5000 = vunpack.c.l.b16 %v3712
    %v5001 = vunpack.c.l.b16 %v3713
    %v5002 = vunpack.c.h.b16 %v3713
    %v5003 = vunpack.c.l.b16 %v3714
    %v5004 = vunpack.c.h.b16 %v3714
    %v5005 = vunpack.c.l.b16 %v3715
    %v5006 = vunpack.c.h.b16 %v3715
    %v5007 = vunpack.c.l.b16 %v3716
    %v5008 = vunpack.c.l.b16 %v3717
    %v5009 = vunpack.c.h.b16 %v3717
    %v5010 = vunpack.c.l.b16 %v3718
    %v5011 = vunpack.c.h.b16 %v3718
    %v5012 = vunpack.c.l.b16 %v3719
    %v5013 = vunpack.c.h.b16 %v3719
    %v5014 = vunpack.c.l.b16 %v3720
    %v5015 = vunpack.c.l.b16 %v3721
    %v5016 = vunpack.c.h.b16 %v3721
    %v5017 = vunpack.c.l.b16 %v3722
    %v5018 = vunpack.c.h.b16 %v3722
    %v5019 = vunpack.c.l.b16 %v3723
    %v5020 = vunpack.c.h.b16 %v3723
    %v5021 = vunpack.c.l.b16 %v3724
    %v5022 = vunpack.c.l.b16 %v3725
    %v5023 = vunpack.c.h.b16 %v3725
    %v5024 = vunpack.c.l.b16 %v3726
    %v5025 = vunpack.c.h.b16 %v3726
    %v5026 = vunpack.c.l.b16 %v3727
    %v5027 = vunpack.c.h.b16 %v3727
    %v5028 = vunpack.c.l.b16 %v3728
    %v5029 = vunpack.c.l.b16 %v3729
    %v5030 = vunpack.c.h.b16 %v3729
    %v5031 = vunpack.c.l.b16 %v3730
    %v5032 = vunpack.c.h.b16 %v3730
    %v5033 = vunpack.c.l.b16 %v3731
    %v5034 = vunpack.c.h.b16 %v3731
    %v5035 = vunpack.c.l.b16 %v3732
    %v5036 = vunpack.c.l.b16 %v3733
    %v5037 = vunpack.c.h.b16 %v3733
    %v5038 = vunpack.c.l.b16 %v3734
    %v5039 = vunpack.c.h.b16 %v3734
    %v5040 = vunpack.c.l.b16 %v3735
    %v5041 = vunpack.c.h.b16 %v3735
    %v5042 = vunpack.c.l.b16 %v3736
    %v5043 = vunpack.c.l.b16 %v3737
    %v5044 = vunpack.c.h.b16 %v3737
    %v5045 = vunpack.c.l.b16 %v3738
    %v5046 = vunpack.c.h.b16 %v3738
    %v5047 = vunpack.c.l.b16 %v3739
    %v5048 = vunpack.c.h.b16 %v3739
    %v5049 = vunpack.c.l.b16 %v3740
    %v5050 = vunpack.c.l.b16 %v3741
    %v5051 = vunpack.c.h.b16 %v3741
    %v5052 = vunpack.c.l.b16 %v3742
    %v5053 = vunpack.c.h.b16 %v3742
    %v5054 = vunpack.c.l.b16 %v3743
    %v5055 = vunpack.c.h.b16 %v3743
    %v5056 = vunpack.c.l.b16 %v3744
    %v5057 = vunpack.c.l.b16 %v3745
    %v5058 = vunpack.c.h.b16 %v3745
    %v5059 = vunpack.c.l.b16 %v3746
    %v5060 = vunpack.c.h.b16 %v3746
    %v5061 = vunpack.c.l.b16 %v3747
    %v5062 = vunpack.c.h.b16 %v3747
    %v5063 = vunpack.c.l.b16 %v3748
    %v5064 = vunpack.c.l.b16 %v3749
    %v5065 = vunpack.c.h.b16 %v3749
    %v5066 = vunpack.c.l.b16 %v3750
    %v5067 = vunpack.c.h.b16 %v3750
    %v5068 = vunpack.c.l.b16 %v3751
    %v5069 = vunpack.c.h.b16 %v3751
    %v5070 = vunpack.c.l.b16 %v3752
    %v5071 = vunpack.c.l.b16 %v3753
    %v5072 = vunpack.c.h.b16 %v3753
    %v5073 = vunpack.c.l.b16 %v3754
    %v5074 = vunpack.c.h.b16 %v3754
    %v5075 = vunpack.c.l.b16 %v3755
    %v5076 = vunpack.c.h.b16 %v3755
    %v5077 = vunpack.c.l.b16 %v3756
    %v5078 = vunpack.c.l.b16 %v3757
    %v5079 = vunpack.c.h.b16 %v3757
    %v5080 = vunpack.c.l.b16 %v3758
    %v5081 = vunpack.c.h.b16 %v3758
    %v5082 = vunpack.c.l.b16 %v3759
    %v5083 = vunpack.c.h.b16 %v3759
    %v5084 = vunpack.c.l.b16 %v3760
    %v5085 = vunpack.c.l.b16 %v3761
    %v5086 = vunpack.c.h.b16 %v3761
    %v5087 = vunpack.c.l.b16 %v3762
    %v5088 = vunpack.c.h.b16 %v3762
    %v5089 = vunpack.c.l.b16 %v3763
    %v5090 = vunpack.c.h.b16 %v3763
    %v5091 = vunpack.c.l.b16 %v3764
    %v5092 = vunpack.c.l.b16 %v3765
    %v5093 = vunpack.c.h.b16 %v3765
    %v5094 = vunpack.c.l.b16 %v3766
    %v5095 = vunpack.c.h.b16 %v3766
    %v5096 = vunpack.c.l.b16 %v3767
    %v5097 = vunpack.c.h.b16 %v3767
    %v5098 = vunpack.c.l.b16 %v3768
    %v5099 = vunpack.c.l.b16 %v3769
    %v5100 = vunpack.c.h.b16 %v3769
    %v5101 = vunpack.c.l.b16 %v3770
    %v5102 = vunpack.c.h.b16 %v3770
    %v5103 = vunpack.c.l.b16 %v3771
    %v5104 = vunpack.c.h.b16 %v3771
    %v5105 = vunpack.c.l.b16 %v3772
    %v5106 = vunpack.c.l.b16 %v3773
    %v5107 = vunpack.c.h.b16 %v3773
    %v5108 = vunpack.c.l.b16 %v3774
    %v5109 = vunpack.c.h.b16 %v3774
    %v5110 = vunpack.c.l.b16 %v3775
    %v5111 = vunpack.c.h.b16 %v3775
    %v5112 = vunpack.c.l.b16 %v3776
    %v5113 = vunpack.c.l.b16 %v3777
    %v5114 = vunpack.c.h.b16 %v3777
    %v5115 = vunpack.c.l.b16 %v3778
    %v5116 = vunpack.c.h.b16 %v3778
    %v5117 = vunpack.c.l.b16 %v3779
    %v5118 = vunpack.c.h.b16 %v3779
    %v5119 = vunpack.c.l.b16 %v3780
    %v5120 = vunpack.c.l.b16 %v3781
    %v5121 = vunpack.c.h.b16 %v3781
    %v5122 = vunpack.c.l.b16 %v3782
    %v5123 = vunpack.c.h.b16 %v3782
    %v5124 = vunpack.c.l.b16 %v3783
    %v5125 = vunpack.c.h.b16 %v3783
    %v5126 = vunpack.c.l.b16 %v3784
    %v5127 = vunpack.c.l.b16 %v3785
    %v5128 = vunpack.c.h.b16 %v3785
    %v5129 = vunpack.c.l.b16 %v3786
    %v5130 = vunpack.c.h.b16 %v3786
    %v5131 = vunpack.c.l.b16 %v3787
    %v5132 = vunpack.c.h.b16 %v3787
    %v5133 = vunpack.c.l.b16 %v3788
    %v5134 = vunpack.c.l.b16 %v3789
    %v5135 = vunpack.c.h.b16 %v3789
    %v5136 = vunpack.c.l.b16 %v3790
    %v5137 = vunpack.c.h.b16 %v3790
    %v5138 = vunpack.c.l.b16 %v3791
    %v5139 = vunpack.c.h.b16 %v3791
    %v5140 = vunpack.c.l.b16 %v3792
    %v5141 = vunpack.c.l.b16 %v3793
    %v5142 = vunpack.c.h.b16 %v3793
    %v5143 = vunpack.c.l.b16 %v3794
    %v5144 = vunpack.c.h.b16 %v3794
    %v5145 = vunpack.c.l.b16 %v3795
    %v5146 = vunpack.c.h.b16 %v3795
    %v5147 = vunpack.c.l.b16 %v3796
    %v5148 = vunpack.c.l.b16 %v3797
    %v5149 = vunpack.c.h.b16 %v3797
    %v5150 = vunpack.c.l.b16 %v3798
    %v5151 = vunpack.c.h.b16 %v3798
    %v5152 = vunpack.c.l.b16 %v3799
    %v5153 = vunpack.c.h.b16 %v3799
    %v5154 = vunpack.c.l.b16 %v3800
    %v5155 = vunpack.c.l.b16 %v3801
    %v5156 = vunpack.c.h.b16 %v3801
    %v5157 = vunpack.c.l.b16 %v3802
    %v5158 = vunpack.c.h.b16 %v3802
    %v5159 = vunpack.c.l.b16 %v3803
    %v5160 = vunpack.c.h.b16 %v3803
    %v5161 = vunpack.c.l.b16 %v3804
    %v5162 = vunpack.c.l.b16 %v3805
    %v5163 = vunpack.c.h.b16 %v3805
    %v5164 = vunpack.c.l.b16 %v3806
    %v5165 = vunpack.c.h.b16 %v3806
    %v5166 = vunpack.c.l.b16 %v3807
    %v5167 = vunpack.c.h.b16 %v3807
    %v5168 = vunpack.c.l.b16 %v3808
    %v5169 = vunpack.c.l.b16 %v3809
    %v5170 = vunpack.c.h.b16 %v3809
    %v5171 = vunpack.c.l.b16 %v3810
    %v5172 = vunpack.c.h.b16 %v3810
    %v5173 = vunpack.c.l.b16 %v3811
    %v5174 = vunpack.c.h.b16 %v3811
    %v5175 = vunpack.c.l.b16 %v3812
    %v5176 = vunpack.c.l.b16 %v3813
    %v5177 = vunpack.c.h.b16 %v3813
    %v5178 = vunpack.c.l.b16 %v3814
    %v5179 = vunpack.c.h.b16 %v3814
    %v5180 = vunpack.c.l.b16 %v3815
    %v5181 = vunpack.c.h.b16 %v3815
    %v5182 = vunpack.c.l.b16 %v3816
    %v5183 = vunpack.c.l.b16 %v3817
    %v5184 = vunpack.c.h.b16 %v3817
    %v5185 = vunpack.c.l.b16 %v3818
    %v5186 = vunpack.c.h.b16 %v3818
    %v5187 = vunpack.c.l.b16 %v3819
    %v5188 = vunpack.c.h.b16 %v3819
    %v5189 = vunpack.c.l.b16 %v3820
    %v5190 = vunpack.c.l.b16 %v3821
    %v5191 = vunpack.c.h.b16 %v3821
    %v5192 = vunpack.c.l.b16 %v3822
    %v5193 = vunpack.c.h.b16 %v3822
    %v5194 = vunpack.c.l.b16 %v3823
    %v5195 = vunpack.c.h.b16 %v3823
    %v5196 = vunpack.c.l.b16 %v3824
    %v5197 = vunpack.c.l.b16 %v3825
    %v5198 = vunpack.c.h.b16 %v3825
    %v5199 = vunpack.c.l.b16 %v3826
    %v5200 = vunpack.c.h.b16 %v3826
    %v5201 = vunpack.c.l.b16 %v3827
    %v5202 = vunpack.c.h.b16 %v3827
    %v5203 = vunpack.c.l.b16 %v3828
    %v5204 = vunpack.c.l.b16 %v3829
    %v5205 = vunpack.c.h.b16 %v3829
    %v5206 = vunpack.c.l.b16 %v3830
    %v5207 = vunpack.c.h.b16 %v3830
    %v5208 = vunpack.c.l.b16 %v3831
    %v5209 = vunpack.c.h.b16 %v3831
    %v5210 = vunpack.c.l.b16 %v3832
    %v5211 = vunpack.c.l.b16 %v3833
    %v5212 = vunpack.c.h.b16 %v3833
    %v5213 = vunpack.c.l.b16 %v3834
    %v5214 = vunpack.c.h.b16 %v3834
    %v5215 = vunpack.c.l.b16 %v3835
    %v5216 = vunpack.c.h.b16 %v3835
    %v5217 = vunpack.c.l.b16 %v3836
    %v5218 = vunpack.c.l.b16 %v3837
    %v5219 = vunpack.c.h.b16 %v3837
    %v5220 = vunpack.c.l.b16 %v3838
    %v5221 = vunpack.c.h.b16 %v3838
    %v5222 = vunpack.c.l.b16 %v3839
    %v5223 = vunpack.c.h.b16 %v3839
    %v5224 = vunpack.c.l.b16 %v3840
    %v5225 = vunpack.c.l.b16 %v3841
    %v5226 = vunpack.c.h.b16 %v3841
    %v5227 = vunpack.c.l.b16 %v3842
    %v5228 = vunpack.c.h.b16 %v3842
    %v5229 = vunpack.c.l.b16 %v3843
    %v5230 = vunpack.c.h.b16 %v3843
    %v5231 = vunpack.c.l.b16 %v3844
    %v5232 = vunpack.c.l.b16 %v3845
    %v5233 = vunpack.c.h.b16 %v3845
    %v5234 = vunpack.c.l.b16 %v3846
    %v5235 = vunpack.c.h.b16 %v3846
    %v5236 = vunpack.c.l.b16 %v3847
    %v5237 = vunpack.c.h.b16 %v3847
    %v5238 = vunpack.c.l.b16 %v3848
    %v5239 = vunpack.c.l.b16 %v3849
    %v5240 = vunpack.c.h.b16 %v3849
    %v5241 = vunpack.c.l.b16 %v3850
    %v5242 = vunpack.c.h.b16 %v3850
    %v5243 = vunpack.c.l.b16 %v3851
    %v5244 = vunpack.c.h.b16 %v3851
    %v5245 = vunpack.c.l.b16 %v3852
    %v5246 = vunpack.c.l.b16 %v3853
    %v5247 = vunpack.c.h.b16 %v3853
    %v5248 = vunpack.c.l.b16 %v3854
    %v5249 = vunpack.c.h.b16 %v3854
    %v5250 = vunpack.c.l.b16 %v3855
    %v5251 = vunpack.c.h.b16 %v3855
    %v5252 = vunpack.c.l.b16 %v3856
    %v5253 = vunpack.c.l.b16 %v3857
    %v5254 = vunpack.c.h.b16 %v3857
    %v5255 = vunpack.c.l.b16 %v3858
    %v5256 = vunpack.c.h.b16 %v3858
    %v5257 = vunpack.c.l.b16 %v3859
    %v5258 = vunpack.c.h.b16 %v3859
    %v5259 = vunpack.c.l.b16 %v3860
    %v5260 = vunpack.c.l.b16 %v3861
    %v5261 = vunpack.c.h.b16 %v3861
    %v5262 = vunpack.c.l.b16 %v3862
    %v5263 = vunpack.c.h.b16 %v3862
    %v5264 = vunpack.c.l.b16 %v3863
    %v5265 = vunpack.c.h.b16 %v3863
    %v5266 = vunpack.c.l.b16 %v3864
    %v5267 = vunpack.c.l.b16 %v3865
    %v5268 = vunpack.c.h.b16 %v3865
    %v5269 = vunpack.c.l.b16 %v3866
    %v5270 = vunpack.c.h.b16 %v3866
    %v5271 = vunpack.c.l.b16 %v3867
    %v5272 = vunpack.c.h.b16 %v3867
    %v5273 = vunpack.c.l.b16 %v3868
    %v5274 = vunpack.c.l.b16 %v3869
    %v5275 = vunpack.c.h.b16 %v3869
    %v5276 = vunpack.c.l.b16 %v3870
    %v5277 = vunpack.c.h.b16 %v3870
    %v5278 = vunpack.c.l.b16 %v3871
    %v5279 = vunpack.c.h.b16 %v3871
    %v5280 = vunpack.c.l.b16 %v3872
    %v5281 = vunpack.c.l.b16 %v3873
    %v5282 = vunpack.c.h.b16 %v3873
    %v5283 = vunpack.c.l.b16 %v3874
    %v5284 = vunpack.c.h.b16 %v3874
    %v5285 = vunpack.c.l.b16 %v3875
    %v5286 = vunpack.c.h.b16 %v3875
    %v5287 = vunpack.c.l.b16 %v3876
    %v5288 = vunpack.c.l.b16 %v3877
    %v5289 = vunpack.c.h.b16 %v3877
    %v5290 = vunpack.c.l.b16 %v3878
    %v5291 = vunpack.c.h.b16 %v3878
    %v5292 = vunpack.c.l.b16 %v3879
    %v5293 = vunpack.c.h.b16 %v3879
    %v5294 = vunpack.c.l.b16 %v3880
    %v5295 = vunpack.c.l.b16 %v3881
    %v5296 = vunpack.c.h.b16 %v3881
    %v5297 = vunpack.c.l.b16 %v3882
    %v5298 = vunpack.c.h.b16 %v3882
    %v5299 = vunpack.c.l.b16 %v3883
    %v5300 = vunpack.c.h.b16 %v3883
    %v5301 = vunpack.c.l.b16 %v3884
    %v5302 = vunpack.c.l.b16 %v3885
    %v5303 = vunpack.c.h.b16 %v3885
    %v5304 = vunpack.c.l.b16 %v3886
    %v5305 = vunpack.c.h.b16 %v3886
    %v5306 = vunpack.c.l.b16 %v3887
    %v5307 = vunpack.c.h.b16 %v3887
    %v5308 = vunpack.c.l.b16 %v3888
    %v5309 = vunpack.c.l.b16 %v3889
    %v5310 = vunpack.c.h.b16 %v3889
    %v5311 = vunpack.c.l.b16 %v3890
    %v5312 = vunpack.c.h.b16 %v3890
    %v5313 = vunpack.c.l.b16 %v3891
    %v5314 = vunpack.c.h.b16 %v3891
    %v5315 = vunpack.c.l.b16 %v3892
    %v5316 = vunpack.c.l.b16 %v3893
    %v5317 = vunpack.c.h.b16 %v3893
    %v5318 = vunpack.c.l.b16 %v3894
    %v5319 = vunpack.c.h.b16 %v3894
    %v5320 = vunpack.c.l.b16 %v3895
    %v5321 = vunpack.c.h.b16 %v3895
    %v5322 = vunpack.c.l.b16 %v3896
    %v5323 = vunpack.c.l.b16 %v3897
    %v5324 = vunpack.c.h.b16 %v3897
    %v5325 = vunpack.c.l.b16 %v3898
    %v5326 = vunpack.c.h.b16 %v3898
    %v5327 = vunpack.c.l.b16 %v3899
    %v5328 = vunpack.c.h.b16 %v3899
    %v5329 = vunpack.c.l.b16 %v3900
    %v5330 = vunpack.c.l.b16 %v3901
    %v5331 = vunpack.c.h.b16 %v3901
    %v5332 = vunpack.c.l.b16 %v3902
    %v5333 = vunpack.c.h.b16 %v3902
    %v5334 = vunpack.c.l.b16 %v3903
    %v5335 = vunpack.c.h.b16 %v3903
    %v5336 = vunpack.c.l.b16 %v3904
    %v5337 = vpack.c.b16 %v4448, %v4441
    %v5338 = vpack.c.b16 %v4449, %v4442
    %v5339 = vpack.c.b16 %v4450, %v4443
    %v5340 = vpack.c.b16 %v4451, %v4444
    %v5341 = vpack.c.b16 %v4452, %v4445
    %v5342 = vpack.c.b16 %v4453, %v4446
    %v5343 = vpack.c.b16 %v4454, %v4447
    %v5344 = vpack.c.b16 %v4462, %v4455
    %v5345 = vpack.c.b16 %v4463, %v4456
    %v5346 = vpack.c.b16 %v4464, %v4457
    %v5347 = vpack.c.b16 %v4465, %v4458
    %v5348 = vpack.c.b16 %v4466, %v4459
    %v5349 = vpack.c.b16 %v4467, %v4460
    %v5350 = vpack.c.b16 %v4468, %v4461
    %v5351 = vpack.c.b16 %v4476, %v4469
    %v5352 = vpack.c.b16 %v4477, %v4470
    %v5353 = vpack.c.b16 %v4478, %v4471
    %v5354 = vpack.c.b16 %v4479, %v4472
    %v5355 = vpack.c.b16 %v4480, %v4473
    %v5356 = vpack.c.b16 %v4481, %v4474
    %v5357 = vpack.c.b16 %v4482, %v4475
    %v5358 = vpack.c.b16 %v4490, %v4483
    %v5359 = vpack.c.b16 %v4491, %v4484
    %v5360 = vpack.c.b16 %v4492, %v4485
    %v5361 = vpack.c.b16 %v4493, %v4486
    %v5362 = vpack.c.b16 %v4494, %v4487
    %v5363 = vpack.c.b16 %v4495, %v4488
    %v5364 = vpack.c.b16 %v4496, %v4489
    %v5365 = vpack.c.b16 %v4504, %v4497
    %v5366 = vpack.c.b16 %v4505, %v4498
    %v5367 = vpack.c.b16 %v4506, %v4499
    %v5368 = vpack.c.b16 %v4507, %v4500
    %v5369 = vpack.c.b16 %v4508, %v4501
    %v5370 = vpack.c.b16 %v4509, %v4502
    %v5371 = vpack.c.b16 %v4510, %v4503
    %v5372 = vpack.c.b16 %v4518, %v4511
    %v5373 = vpack.c.b16 %v4519, %v4512
    %v5374 = vpack.c.b16 %v4520, %v4513
    %v5375 = vpack.c.b16 %v4521, %v4514
    %v5376 = vpack.c.b16 %v4522, %v4515
    %v5377 = vpack.c.b16 %v4523, %v4516
    %v5378 = vpack.c.b16 %v4524, %v4517
    %v5379 = vpack.c.b16 %v4532, %v4525
    %v5380 = vpack.c.b16 %v4533, %v4526
    %v5381 = vpack.c.b16 %v4534, %v4527
    %v5382 = vpack.c.b16 %v4535, %v4528
    %v5383 = vpack.c.b16 %v4536, %v4529
    %v5384 = vpack.c.b16 %v4537, %v4530
    %v5385 = vpack.c.b16 %v4538, %v4531
    %v5386 = vpack.c.b16 %v4546, %v4539
    %v5387 = vpack.c.b16 %v4547, %v4540
    %v5388 = vpack.c.b16 %v4548, %v4541
    %v5389 = vpack.c.b16 %v4549, %v4542
    %v5390 = vpack.c.b16 %v4550, %v4543
    %v5391 = vpack.c.b16 %v4551, %v4544
    %v5392 = vpack.c.b16 %v4552, %v4545
    %v5393 = vpack.c.b16 %v4560, %v4553
    %v5394 = vpack.c.b16 %v4561, %v4554
    %v5395 = vpack.c.b16 %v4562, %v4555
    %v5396 = vpack.c.b16 %v4563, %v4556
    %v5397 = vpack.c.b16 %v4564, %v4557
    %v5398 = vpack.c.b16 %v4565, %v4558
    %v5399 = vpack.c.b16 %v4566, %v4559
    %v5400 = vpack.c.b16 %v4574, %v4567
    %v5401 = vpack.c.b16 %v4575, %v4568
    %v5402 = vpack.c.b16 %v4576, %v4569
    %v5403 = vpack.c.b16 %v4577, %v4570
    %v5404 = vpack.c.b16 %v4578, %v4571
    %v5405 = vpack.c.b16 %v4579, %v4572
    %v5406 = vpack.c.b16 %v4580, %v4573
    %v5407 = vpack.c.b16 %v4588, %v4581
    %v5408 = vpack.c.b16 %v4589, %v4582
    %v5409 = vpack.c.b16 %v4590, %v4583
    %v5410 = vpack.c.b16 %v4591, %v4584
    %v5411 = vpack.c.b16 %v4592, %v4585
    %v5412 = vpack.c.b16 %v4593, %v4586
    %v5413 = vpack.c.b16 %v4594, %v4587
    %v5414 = vpack.c.b16 %v4602, %v4595
    %v5415 = vpack.c.b16 %v4603, %v4596
    %v5416 = vpack.c.b16 %v4604, %v4597
    %v5417 = vpack.c.b16 %v4605, %v4598
    %v5418 = vpack.c.b16 %v4606, %v4599
    %v5419 = vpack.c.b16 %v4607, %v4600
    %v5420 = vpack.c.b16 %v4608, %v4601
    %v5421 = vpack.c.b16 %v4616, %v4609
    %v5422 = vpack.c.b16 %v4617, %v4610
    %v5423 = vpack.c.b16 %v4618, %v4611
    %v5424 = vpack.c.b16 %v4619, %v4612
    %v5425 = vpack.c.b16 %v4620, %v4613
    %v5426 = vpack.c.b16 %v4621, %v4614
    %v5427 = vpack.c.b16 %v4622, %v4615
    %v5428 = vpack.c.b16 %v4630, %v4623
    %v5429 = vpack.c.b16 %v4631, %v4624
    %v5430 = vpack.c.b16 %v4632, %v4625
    %v5431 = vpack.c.b16 %v4633, %v4626
    %v5432 = vpack.c.b16 %v4634, %v4627
    %v5433 = vpack.c.b16 %v4635, %v4628
    %v5434 = vpack.c.b16 %v4636, %v4629
    %v5435 = vpack.c.b16 %v4644, %v4637
    %v5436 = vpack.c.b16 %v4645, %v4638
    %v5437 = vpack.c.b16 %v4646, %v4639
    %v5438 = vpack.c.b16 %v4647, %v4640
    %v5439 = vpack.c.b16 %v4648, %v4641
    %v5440 = vpack.c.b16 %v4649, %v4642
    %v5441 = vpack.c.b16 %v4650, %v4643
    %v5442 = vpack.c.b16 %v4658, %v4651
    %v5443 = vpack.c.b16 %v4659, %v4652
    %v5444 = vpack.c.b16 %v4660, %v4653
    %v5445 = vpack.c.b16 %v4661, %v4654
    %v5446 = vpack.c.b16 %v4662, %v4655
    %v5447 = vpack.c.b16 %v4663, %v4656
    %v5448 = vpack.c.b16 %v4664, %v4657
    %v5449 = vpack.c.b16 %v4672, %v4665
    %v5450 = vpack.c.b16 %v4673, %v4666
    %v5451 = vpack.c.b16 %v4674, %v4667
    %v5452 = vpack.c.b16 %v4675, %v4668
    %v5453 = vpack.c.b16 %v4676, %v4669
    %v5454 = vpack.c.b16 %v4677, %v4670
    %v5455 = vpack.c.b16 %v4678, %v4671
    %v5456 = vpack.c.b16 %v4686, %v4679
    %v5457 = vpack.c.b16 %v4687, %v4680
    %v5458 = vpack.c.b16 %v4688, %v4681
    %v5459 = vpack.c.b16 %v4689, %v4682
    %v5460 = vpack.c.b16 %v4690, %v4683
    %v5461 = vpack.c.b16 %v4691, %v4684
    %v5462 = vpack.c.b16 %v4692, %v4685
    %v5463 = vpack.c.b16 %v4700, %v4693
    %v5464 = vpack.c.b16 %v4701, %v4694
    %v5465 = vpack.c.b16 %v4702, %v4695
    %v5466 = vpack.c.b16 %v4703, %v4696
    %v5467 = vpack.c.b16 %v4704, %v4697
    %v5468 = vpack.c.b16 %v4705, %v4698
    %v5469 = vpack.c.b16 %v4706, %v4699
    %v5470 = vpack.c.b16 %v4714, %v4707
    %v5471 = vpack.c.b16 %v4715, %v4708
    %v5472 = vpack.c.b16 %v4716, %v4709
    %v5473 = vpack.c.b16 %v4717, %v4710
    %v5474 = vpack.c.b16 %v4718, %v4711
    %v5475 = vpack.c.b16 %v4719, %v4712
    %v5476 = vpack.c.b16 %v4720, %v4713
    %v5477 = vpack.c.b16 %v4728, %v4721
    %v5478 = vpack.c.b16 %v4729, %v4722
    %v5479 = vpack.c.b16 %v4730, %v4723
    %v5480 = vpack.c.b16 %v4731, %v4724
    %v5481 = vpack.c.b16 %v4732, %v4725
    %v5482 = vpack.c.b16 %v4733, %v4726
    %v5483 = vpack.c.b16 %v4734, %v4727
    %v5484 = vpack.c.b16 %v4742, %v4735
    %v5485 = vpack.c.b16 %v4743, %v4736
    %v5486 = vpack.c.b16 %v4744, %v4737
    %v5487 = vpack.c.b16 %v4745, %v4738
    %v5488 = vpack.c.b16 %v4746, %v4739
    %v5489 = vpack.c.b16 %v4747, %v4740
    %v5490 = vpack.c.b16 %v4748, %v4741
    %v5491 = vpack.c.b16 %v4756, %v4749
    %v5492 = vpack.c.b16 %v4757, %v4750
    %v5493 = vpack.c.b16 %v4758, %v4751
    %v5494 = vpack.c.b16 %v4759, %v4752
    %v5495 = vpack.c.b16 %v4760, %v4753
    %v5496 = vpack.c.b16 %v4761, %v4754
    %v5497 = vpack.c.b16 %v4762, %v4755
    %v5498 = vpack.c.b16 %v4770, %v4763
    %v5499 = vpack.c.b16 %v4771, %v4764
    %v5500 = vpack.c.b16 %v4772, %v4765
    %v5501 = vpack.c.b16 %v4773, %v4766
    %v5502 = vpack.c.b16 %v4774, %v4767
    %v5503 = vpack.c.b16 %v4775, %v4768
    %v5504 = vpack.c.b16 %v4776, %v4769
    %v5505 = vpack.c.b16 %v4784, %v4777
    %v5506 = vpack.c.b16 %v4785, %v4778
    %v5507 = vpack.c.b16 %v4786, %v4779
    %v5508 = vpack.c.b16 %v4787, %v4780
    %v5509 = vpack.c.b16 %v4788, %v4781
    %v5510 = vpack.c.b16 %v4789, %v4782
    %v5511 = vpack.c.b16 %v4790, %v4783
    %v5512 = vpack.c.b16 %v4798, %v4791
    %v5513 = vpack.c.b16 %v4799, %v4792
    %v5514 = vpack.c.b16 %v4800, %v4793
    %v5515 = vpack.c.b16 %v4801, %v4794
    %v5516 = vpack.c.b16 %v4802, %v4795
    %v5517 = vpack.c.b16 %v4803, %v4796
    %v5518 = vpack.c.b16 %v4804, %v4797
    %v5519 = vpack.c.b16 %v4812, %v4805
    %v5520 = vpack.c.b16 %v4813, %v4806
    %v5521 = vpack.c.b16 %v4814, %v4807
    %v5522 = vpack.c.b16 %v4815, %v4808
    %v5523 = vpack.c.b16 %v4816, %v4809
    %v5524 = vpack.c.b16 %v4817, %v4810
    %v5525 = vpack.c.b16 %v4818, %v4811
    %v5526 = vpack.c.b16 %v4826, %v4819
    %v5527 = vpack.c.b16 %v4827, %v4820
    %v5528 = vpack.c.b16 %v4828, %v4821
    %v5529 = vpack.c.b16 %v4829, %v4822
    %v5530 = vpack.c.b16 %v4830, %v4823
    %v5531 = vpack.c.b16 %v4831, %v4824
    %v5532 = vpack.c.b16 %v4832, %v4825
    %v5533 = vpack.c.b16 %v4840, %v4833
    %v5534 = vpack.c.b16 %v4841, %v4834
    %v5535 = vpack.c.b16 %v4842, %v4835
    %v5536 = vpack.c.b16 %v4843, %v4836
    %v5537 = vpack.c.b16 %v4844, %v4837
    %v5538 = vpack.c.b16 %v4845, %v4838
    %v5539 = vpack.c.b16 %v4846, %v4839
    %v5540 = vpack.c.b16 %v4854, %v4847
    %v5541 = vpack.c.b16 %v4855, %v4848
    %v5542 = vpack.c.b16 %v4856, %v4849
    %v5543 = vpack.c.b16 %v4857, %v4850
    %v5544 = vpack.c.b16 %v4858, %v4851
    %v5545 = vpack.c.b16 %v4859, %v4852
    %v5546 = vpack.c.b16 %v4860, %v4853
    %v5547 = vpack.c.b16 %v4868, %v4861
    %v5548 = vpack.c.b16 %v4869, %v4862
    %v5549 = vpack.c.b16 %v4870, %v4863
    %v5550 = vpack.c.b16 %v4871, %v4864
    %v5551 = vpack.c.b16 %v4872, %v4865
    %v5552 = vpack.c.b16 %v4873, %v4866
    %v5553 = vpack.c.b16 %v4874, %v4867
    %v5554 = vpack.c.b16 %v4882, %v4875
    %v5555 = vpack.c.b16 %v4883, %v4876
    %v5556 = vpack.c.b16 %v4884, %v4877
    %v5557 = vpack.c.b16 %v4885, %v4878
    %v5558 = vpack.c.b16 %v4886, %v4879
    %v5559 = vpack.c.b16 %v4887, %v4880
    %v5560 = vpack.c.b16 %v4888, %v4881
    %v5561 = vpack.c.b16 %v4896, %v4889
    %v5562 = vpack.c.b16 %v4897, %v4890
    %v5563 = vpack.c.b16 %v4898, %v4891
    %v5564 = vpack.c.b16 %v4899, %v4892
    %v5565 = vpack.c.b16 %v4900, %v4893
    %v5566 = vpack.c.b16 %v4901, %v4894
    %v5567 = vpack.c.b16 %v4902, %v4895
    %v5568 = vpack.c.b16 %v4910, %v4903
    %v5569 = vpack.c.b16 %v4911, %v4904
    %v5570 = vpack.c.b16 %v4912, %v4905
    %v5571 = vpack.c.b16 %v4913, %v4906
    %v5572 = vpack.c.b16 %v4914, %v4907
    %v5573 = vpack.c.b16 %v4915, %v4908
    %v5574 = vpack.c.b16 %v4916, %v4909
    %v5575 = vpack.c.b16 %v4924, %v4917
    %v5576 = vpack.c.b16 %v4925, %v4918
    %v5577 = vpack.c.b16 %v4926, %v4919
    %v5578 = vpack.c.b16 %v4927, %v4920
    %v5579 = vpack.c.b16 %v4928, %v4921
    %v5580 = vpack.c.b16 %v4929, %v4922
    %v5581 = vpack.c.b16 %v4930, %v4923
    %v5582 = vpack.c.b16 %v4938, %v4931
    %v5583 = vpack.c.b16 %v4939, %v4932
    %v5584 = vpack.c.b16 %v4940, %v4933
    %v5585 = vpack.c.b16 %v4941, %v4934
    %v5586 = vpack.c.b16 %v4942, %v4935
    %v5587 = vpack.c.b16 %v4943, %v4936
    %v5588 = vpack.c.b16 %v4944, %v4937
    %v5589 = vpack.c.b16 %v4952, %v4945
    %v5590 = vpack.c.b16 %v4953, %v4946
    %v5591 = vpack.c.b16 %v4954, %v4947
    %v5592 = vpack.c.b16 %v4955, %v4948
    %v5593 = vpack.c.b16 %v4956, %v4949
    %v5594 = vpack.c.b16 %v4957, %v4950
    %v5595 = vpack.c.b16 %v4958, %v4951
    %v5596 = vpack.c.b16 %v4966, %v4959
    %v5597 = vpack.c.b16 %v4967, %v4960
    %v5598 = vpack.c.b16 %v4968, %v4961
    %v5599 = vpack.c.b16 %v4969, %v4962
    %v5600 = vpack.c.b16 %v4970, %v4963
    %v5601 = vpack.c.b16 %v4971, %v4964
    %v5602 = vpack.c.b16 %v4972, %v4965
    %v5603 = vpack.c.b16 %v4980, %v4973
    %v5604 = vpack.c.b16 %v4981, %v4974
    %v5605 = vpack.c.b16 %v4982, %v4975
    %v5606 = vpack.c.b16 %v4983, %v4976
    %v5607 = vpack.c.b16 %v4984, %v4977
    %v5608 = vpack.c.b16 %v4985, %v4978
    %v5609 = vpack.c.b16 %v4986, %v4979
    %v5610 = vpack.c.b16 %v4994, %v4987
    %v5611 = vpack.c.b16 %v4995, %v4988
    %v5612 = vpack.c.b16 %v4996, %v4989
    %v5613 = vpack.c.b16 %v4997, %v4990
    %v5614 = vpack.c.b16 %v4998, %v4991
    %v5615 = vpack.c.b16 %v4999, %v4992
    %v5616 = vpack.c.b16 %v5000, %v4993
    %v5617 = vpack.c.b16 %v5008, %v5001
    %v5618 = vpack.c.b16 %v5009, %v5002
    %v5619 = vpack.c.b16 %v5010, %v5003
    %v5620 = vpack.c.b16 %v5011, %v5004
    %v5621 = vpack.c.b16 %v5012, %v5005
    %v5622 = vpack.c.b16 %v5013, %v5006
    %v5623 = vpack.c.b16 %v5014, %v5007
    %v5624 = vpack.c.b16 %v5022, %v5015
    %v5625 = vpack.c.b16 %v5023, %v5016
    %v5626 = vpack.c.b16 %v5024, %v5017
    %v5627 = vpack.c.b16 %v5025, %v5018
    %v5628 = vpack.c.b16 %v5026, %v5019
    %v5629 = vpack.c.b16 %v5027, %v5020
    %v5630 = vpack.c.b16 %v5028, %v5021
    %v5631 = vpack.c.b16 %v5036, %v5029
    %v5632 = vpack.c.b16 %v5037, %v5030
    %v5633 = vpack.c.b16 %v5038, %v5031
    %v5634 = vpack.c.b16 %v5039, %v5032
    %v5635 = vpack.c.b16 %v5040, %v5033
    %v5636 = vpack.c.b16 %v5041, %v5034
    %v5637 = vpack.c.b16 %v5042, %v5035
    %v5638 = vpack.c.b16 %v5050, %v5043
    %v5639 = vpack.c.b16 %v5051, %v5044
    %v5640 = vpack.c.b16 %v5052, %v5045
    %v5641 = vpack.c.b16 %v5053, %v5046
    %v5642 = vpack.c.b16 %v5054, %v5047
    %v5643 = vpack.c.b16 %v5055, %v5048
    %v5644 = vpack.c.b16 %v5056, %v5049
    %v5645 = vpack.c.b16 %v5064, %v5057
    %v5646 = vpack.c.b16 %v5065, %v5058
    %v5647 = vpack.c.b16 %v5066, %v5059
    %v5648 = vpack.c.b16 %v5067, %v5060
    %v5649 = vpack.c.b16 %v5068, %v5061
    %v5650 = vpack.c.b16 %v5069, %v5062
    %v5651 = vpack.c.b16 %v5070, %v5063
    %v5652 = vpack.c.b16 %v5078, %v5071
    %v5653 = vpack.c.b16 %v5079, %v5072
    %v5654 = vpack.c.b16 %v5080, %v5073
    %v5655 = vpack.c.b16 %v5081, %v5074
    %v5656 = vpack.c.b16 %v5082, %v5075
    %v5657 = vpack.c.b16 %v5083, %v5076
    %v5658 = vpack.c.b16 %v5084, %v5077
    %v5659 = vpack.c.b16 %v5092, %v5085
    %v5660 = vpack.c.b16 %v5093, %v5086
    %v5661 = vpack.c.b16 %v5094, %v5087
    %v5662 = vpack.c.b16 %v5095, %v5088
    %v5663 = vpack.c.b16 %v5096, %v5089
    %v5664 = vpack.c.b16 %v5097, %v5090
    %v5665 = vpack.c.b16 %v5098, %v5091
    %v5666 = vpack.c.b16 %v5106, %v5099
    %v5667 = vpack.c.b16 %v5107, %v5100
    %v5668 = vpack.c.b16 %v5108, %v5101
    %v5669 = vpack.c.b16 %v5109, %v5102
    %v5670 = vpack.c.b16 %v5110, %v5103
    %v5671 = vpack.c.b16 %v5111, %v5104
    %v5672 = vpack.c.b16 %v5112, %v5105
    %v5673 = vpack.c.b16 %v5120, %v5113
    %v5674 = vpack.c.b16 %v5121, %v5114
    %v5675 = vpack.c.b16 %v5122, %v5115
    %v5676 = vpack.c.b16 %v5123, %v5116
    %v5677 = vpack.c.b16 %v5124, %v5117
    %v5678 = vpack.c.b16 %v5125, %v5118
    %v5679 = vpack.c.b16 %v5126, %v5119
    %v5680 = vpack.c.b16 %v5134, %v5127
    %v5681 = vpack.c.b16 %v5135, %v5128
    %v5682 = vpack.c.b16 %v5136, %v5129
    %v5683 = vpack.c.b16 %v5137, %v5130
    %v5684 = vpack.c.b16 %v5138, %v5131
    %v5685 = vpack.c.b16 %v5139, %v5132
    %v5686 = vpack.c.b16 %v5140, %v5133
    %v5687 = vpack.c.b16 %v5148, %v5141
    %v5688 = vpack.c.b16 %v5149, %v5142
    %v5689 = vpack.c.b16 %v5150, %v5143
    %v5690 = vpack.c.b16 %v5151, %v5144
    %v5691 = vpack.c.b16 %v5152, %v5145
    %v5692 = vpack.c.b16 %v5153, %v5146
    %v5693 = vpack.c.b16 %v5154, %v5147
    %v5694 = vpack.c.b16 %v5162, %v5155
    %v5695 = vpack.c.b16 %v5163, %v5156
    %v5696 = vpack.c.b16 %v5164, %v5157
    %v5697 = vpack.c.b16 %v5165, %v5158
    %v5698 = vpack.c.b16 %v5166, %v5159
    %v5699 = vpack.c.b16 %v5167, %v5160
    %v5700 = vpack.c.b16 %v5168, %v5161
    %v5701 = vpack.c.b16 %v5176, %v5169
    %v5702 = vpack.c.b16 %v5177, %v5170
    %v5703 = vpack.c.b16 %v5178, %v5171
    %v5704 = vpack.c.b16 %v5179, %v5172
    %v5705 = vpack.c.b16 %v5180, %v5173
    %v5706 = vpack.c.b16 %v5181, %v5174
    %v5707 = vpack.c.b16 %v5182, %v5175
    %v5708 = vpack.c.b16 %v5190, %v5183
    %v5709 = vpack.c.b16 %v5191, %v5184
    %v5710 = vpack.c.b16 %v5192, %v5185
    %v5711 = vpack.c.b16 %v5193, %v5186
    %v5712 = vpack.c.b16 %v5194, %v5187
    %v5713 = vpack.c.b16 %v5195, %v5188
    %v5714 = vpack.c.b16 %v5196, %v5189
    %v5715 = vpack.c.b16 %v5204, %v5197
    %v5716 = vpack.c.b16 %v5205, %v5198
    %v5717 = vpack.c.b16 %v5206, %v5199
    %v5718 = vpack.c.b16 %v5207, %v5200
    %v5719 = vpack.c.b16 %v5208, %v5201
    %v5720 = vpack.c.b16 %v5209, %v5202
    %v5721 = vpack.c.b16 %v5210, %v5203
    %v5722 = vpack.c.b16 %v5218, %v5211
    %v5723 = vpack.c.b16 %v5219, %v5212
    %v5724 = vpack.c.b16 %v5220, %v5213
    %v5725 = vpack.c.b16 %v5221, %v5214
    %v5726 = vpack.c.b16 %v5222, %v5215
    %v5727 = vpack.c.b16 %v5223, %v5216
    %v5728 = vpack.c.b16 %v5224, %v5217
    %v5729 = vpack.c.b16 %v5232, %v5225
    %v5730 = vpack.c.b16 %v5233, %v5226
    %v5731 = vpack.c.b16 %v5234, %v5227
    %v5732 = vpack.c.b16 %v5235, %v5228
    %v5733 = vpack.c.b16 %v5236, %v5229
    %v5734 = vpack.c.b16 %v5237, %v5230
    %v5735 = vpack.c.b16 %v5238, %v5231
    %v5736 = vpack.c.b16 %v5246, %v5239
    %v5737 = vpack.c.b16 %v5247, %v5240
    %v5738 = vpack.c.b16 %v5248, %v5241
    %v5739 = vpack.c.b16 %v5249, %v5242
    %v5740 = vpack.c.b16 %v5250, %v5243
    %v5741 = vpack.c.b16 %v5251, %v5244
    %v5742 = vpack.c.b16 %v5252, %v5245
    %v5743 = vpack.c.b16 %v5260, %v5253
    %v5744 = vpack.c.b16 %v5261, %v5254
    %v5745 = vpack.c.b16 %v5262, %v5255
    %v5746 = vpack.c.b16 %v5263, %v5256
    %v5747 = vpack.c.b16 %v5264, %v5257
    %v5748 = vpack.c.b16 %v5265, %v5258
    %v5749 = vpack.c.b16 %v5266, %v5259
    %v5750 = vpack.c.b16 %v5274, %v5267
    %v5751 = vpack.c.b16 %v5275, %v5268
    %v5752 = vpack.c.b16 %v5276, %v5269
    %v5753 = vpack.c.b16 %v5277, %v5270
    %v5754 = vpack.c.b16 %v5278, %v5271
    %v5755 = vpack.c.b16 %v5279, %v5272
    %v5756 = vpack.c.b16 %v5280, %v5273
    %v5757 = vpack.c.b16 %v5288, %v5281
    %v5758 = vpack.c.b16 %v5289, %v5282
    %v5759 = vpack.c.b16 %v5290, %v5283
    %v5760 = vpack.c.b16 %v5291, %v5284
    %v5761 = vpack.c.b16 %v5292, %v5285
    %v5762 = vpack.c.b16 %v5293, %v5286
    %v5763 = vpack.c.b16 %v5294, %v5287
    %v5764 = vpack.c.b16 %v5302, %v5295
    %v5765 = vpack.c.b16 %v5303, %v5296
    %v5766 = vpack.c.b16 %v5304, %v5297
    %v5767 = vpack.c.b16 %v5305, %v5298
    %v5768 = vpack.c.b16 %v5306, %v5299
    %v5769 = vpack.c.b16 %v5307, %v5300
    %v5770 = vpack.c.b16 %v5308, %v5301
    %v5771 = vpack.c.b16 %v5316, %v5309
    %v5772 = vpack.c.b16 %v5317, %v5310
    %v5773 = vpack.c.b16 %v5318, %v5311
    %v5774 = vpack.c.b16 %v5319, %v5312
    %v5775 = vpack.c.b16 %v5320, %v5313
    %v5776 = vpack.c.b16 %v5321, %v5314
    %v5777 = vpack.c.b16 %v5322, %v5315
    %v5778 = vpack.c.b16 %v5330, %v5323
    %v5779 = vpack.c.b16 %v5331, %v5324
    %v5780 = vpack.c.b16 %v5332, %v5325
    %v5781 = vpack.c.b16 %v5333, %v5326
    %v5782 = vpack.c.b16 %v5334, %v5327
    %v5783 = vpack.c.b16 %v5335, %v5328
    %v5784 = vpack.c.b16 %v5336, %v5329
    %6233 = vmatpush.bf16.msra.mxu0 %v5386
    %6234 = vmatpush.bf16.msra.mxu0 %v5379
    %6235 = vmatpush.bf16.msra.mxu0 %v5372
    %6236 = vmatpush.bf16.msra.mxu0 %v5365
    %6237 = vmatpush.bf16.msra.mxu0 %v5358
    %6238 = vmatpush.bf16.msra.mxu0 %v5351
    %6239 = vmatpush.bf16.msra.mxu0 %v5344
    %6240 = vmatpush.bf16.msra.mxu0 %v5337
    %6241 = vmatmul.bf16.gmra.mxu0 %v3905
    %v6242 = vpop.f32.mrf.mxu0
    %v6243 = vadd.f32 %v3915, %v6242
    %v6244 = vpop.f32.mrf.mxu0
    %6245 = vdwg.mxu0
    %6246 = vmatpush.bf16.msra.mxu0 %v5442
    %6247 = vmatpush.bf16.msra.mxu0 %v5435
    %6248 = vmatpush.bf16.msra.mxu0 %v5428
    %6249 = vmatpush.bf16.msra.mxu0 %v5421
    %6250 = vmatpush.bf16.msra.mxu0 %v5414
    %6251 = vmatpush.bf16.msra.mxu0 %v5407
    %6252 = vmatpush.bf16.msra.mxu0 %v5400
    %6253 = vmatpush.bf16.msra.mxu0 %v5393
    %6254 = vmatmul.bf16.gmra.mxu0 %v3906
    %v6255 = vpop.f32.mrf.mxu0
    %v6256 = vadd.f32 %v6243, %v6255
    %v6257 = vpop.f32.mrf.mxu0
    %6258 = vdwg.mxu0
    %6259 = vmatpush.bf16.msra.mxu0 %v5498
    %6260 = vmatpush.bf16.msra.mxu0 %v5491
    %6261 = vmatpush.bf16.msra.mxu0 %v5484
    %6262 = vmatpush.bf16.msra.mxu0 %v5477
    %6263 = vmatpush.bf16.msra.mxu0 %v5470
    %6264 = vmatpush.bf16.msra.mxu0 %v5463
    %6265 = vmatpush.bf16.msra.mxu0 %v5456
    %6266 = vmatpush.bf16.msra.mxu0 %v5449
    %6267 = vmatmul.bf16.gmra.mxu0 %v3907
    %v6268 = vpop.f32.mrf.mxu0
    %v6269 = vadd.f32 %v6256, %v6268
    %v6270 = vpop.f32.mrf.mxu0
    %6271 = vdwg.mxu0
    %6272 = vmatpush.bf16.msra.mxu0 %v5554
    %6273 = vmatpush.bf16.msra.mxu0 %v5547
    %6274 = vmatpush.bf16.msra.mxu0 %v5540
    %6275 = vmatpush.bf16.msra.mxu0 %v5533
    %6276 = vmatpush.bf16.msra.mxu0 %v5526
    %6277 = vmatpush.bf16.msra.mxu0 %v5519
    %6278 = vmatpush.bf16.msra.mxu0 %v5512
    %6279 = vmatpush.bf16.msra.mxu0 %v5505
    %6280 = vmatmul.bf16.gmra.mxu0 %v3908
    %v6281 = vpop.f32.mrf.mxu0
    %v6282 = vadd.f32 %v6269, %v6281
    %v6283 = vpop.f32.mrf.mxu0
    %6284 = vdwg.mxu0
    %6285 = vmatpush.bf16.msra.mxu0 %v5610
    %6286 = vmatpush.bf16.msra.mxu0 %v5603
    %6287 = vmatpush.bf16.msra.mxu0 %v5596
    %6288 = vmatpush.bf16.msra.mxu0 %v5589
    %6289 = vmatpush.bf16.msra.mxu0 %v5582
    %6290 = vmatpush.bf16.msra.mxu0 %v5575
    %6291 = vmatpush.bf16.msra.mxu0 %v5568
    %6292 = vmatpush.bf16.msra.mxu0 %v5561
    %6293 = vmatmul.bf16.gmra.mxu0 %v3909
    %v6294 = vpop.f32.mrf.mxu0
    %v6295 = vadd.f32 %v6282, %v6294
    %v6296 = vpop.f32.mrf.mxu0
    %6297 = vdwg.mxu0
    %6298 = vmatpush.bf16.msra.mxu0 %v5666
    %6299 = vmatpush.bf16.msra.mxu0 %v5659
    %6300 = vmatpush.bf16.msra.mxu0 %v5652
    %6301 = vmatpush.bf16.msra.mxu0 %v5645
    %6302 = vmatpush.bf16.msra.mxu0 %v5638
    %6303 = vmatpush.bf16.msra.mxu0 %v5631
    %6304 = vmatpush.bf16.msra.mxu0 %v5624
    %6305 = vmatpush.bf16.msra.mxu0 %v5617
    %6306 = vmatmul.bf16.gmra.mxu0 %v3910
    %v6307 = vpop.f32.mrf.mxu0
    %v6308 = vadd.f32 %v6295, %v6307
    %v6309 = vpop.f32.mrf.mxu0
    %6310 = vdwg.mxu0
    %6311 = vmatpush.bf16.msra.mxu0 %v5722
    %6312 = vmatpush.bf16.msra.mxu0 %v5715
    %6313 = vmatpush.bf16.msra.mxu0 %v5708
    %6314 = vmatpush.bf16.msra.mxu0 %v5701
    %6315 = vmatpush.bf16.msra.mxu0 %v5694
    %6316 = vmatpush.bf16.msra.mxu0 %v5687
    %6317 = vmatpush.bf16.msra.mxu0 %v5680
    %6318 = vmatpush.bf16.msra.mxu0 %v5673
    %6319 = vmatmul.bf16.gmra.mxu0 %v3911
    %v6320 = vpop.f32.mrf.mxu0
    %v6321 = vadd.f32 %v6308, %v6320
    %v6322 = vpop.f32.mrf.mxu0
    %6323 = vdwg.mxu0
    %6324 = vmatpush.bf16.msra.mxu0 %v5778
    %6325 = vmatpush.bf16.msra.mxu0 %v5771
    %6326 = vmatpush.bf16.msra.mxu0 %v5764
    %6327 = vmatpush.bf16.msra.mxu0 %v5757
    %6328 = vmatpush.bf16.msra.mxu0 %v5750
    %6329 = vmatpush.bf16.msra.mxu0 %v5743
    %6330 = vmatpush.bf16.msra.mxu0 %v5736
    %6331 = vmatpush.bf16.msra.mxu0 %v5729
    %6332 = vmatmul.bf16.gmra.mxu0 %v3912
    %v6333 = vpop.f32.mrf.mxu0
    %v6334 = vadd.f32 %v6321, %v6333
    %v6335 = vpop.f32.mrf.mxu0
    %6336 = vdwg.mxu0
    %6337 = vmatpush.bf16.msra.mxu0 %v5387
    %6338 = vmatpush.bf16.msra.mxu0 %v5380
    %6339 = vmatpush.bf16.msra.mxu0 %v5373
    %6340 = vmatpush.bf16.msra.mxu0 %v5366
    %6341 = vmatpush.bf16.msra.mxu0 %v5359
    %6342 = vmatpush.bf16.msra.mxu0 %v5352
    %6343 = vmatpush.bf16.msra.mxu0 %v5345
    %6344 = vmatpush.bf16.msra.mxu0 %v5338
    %6345 = vmatmul.bf16.gmra.mxu0 %v3905
    %v6346 = vpop.f32.mrf.mxu0
    %v6347 = vadd.f32 %v3916, %v6346
    %v6348 = vpop.f32.mrf.mxu0
    %6349 = vdwg.mxu0
    %6350 = vmatpush.bf16.msra.mxu0 %v5443
    %6351 = vmatpush.bf16.msra.mxu0 %v5436
    %6352 = vmatpush.bf16.msra.mxu0 %v5429
    %6353 = vmatpush.bf16.msra.mxu0 %v5422
    %6354 = vmatpush.bf16.msra.mxu0 %v5415
    %6355 = vmatpush.bf16.msra.mxu0 %v5408
    %6356 = vmatpush.bf16.msra.mxu0 %v5401
    %6357 = vmatpush.bf16.msra.mxu0 %v5394
    %6358 = vmatmul.bf16.gmra.mxu0 %v3906
    %v6359 = vpop.f32.mrf.mxu0
    %v6360 = vadd.f32 %v6347, %v6359
    %v6361 = vpop.f32.mrf.mxu0
    %6362 = vdwg.mxu0
    %6363 = vmatpush.bf16.msra.mxu0 %v5499
    %6364 = vmatpush.bf16.msra.mxu0 %v5492
    %6365 = vmatpush.bf16.msra.mxu0 %v5485
    %6366 = vmatpush.bf16.msra.mxu0 %v5478
    %6367 = vmatpush.bf16.msra.mxu0 %v5471
    %6368 = vmatpush.bf16.msra.mxu0 %v5464
    %6369 = vmatpush.bf16.msra.mxu0 %v5457
    %6370 = vmatpush.bf16.msra.mxu0 %v5450
    %6371 = vmatmul.bf16.gmra.mxu0 %v3907
    %v6372 = vpop.f32.mrf.mxu0
    %v6373 = vadd.f32 %v6360, %v6372
    %v6374 = vpop.f32.mrf.mxu0
    %6375 = vdwg.mxu0
    %6376 = vmatpush.bf16.msra.mxu0 %v5555
    %6377 = vmatpush.bf16.msra.mxu0 %v5548
    %6378 = vmatpush.bf16.msra.mxu0 %v5541
    %6379 = vmatpush.bf16.msra.mxu0 %v5534
    %6380 = vmatpush.bf16.msra.mxu0 %v5527
    %6381 = vmatpush.bf16.msra.mxu0 %v5520
    %6382 = vmatpush.bf16.msra.mxu0 %v5513
    %6383 = vmatpush.bf16.msra.mxu0 %v5506
    %6384 = vmatmul.bf16.gmra.mxu0 %v3908
    %v6385 = vpop.f32.mrf.mxu0
    %v6386 = vadd.f32 %v6373, %v6385
    %v6387 = vpop.f32.mrf.mxu0
    %6388 = vdwg.mxu0
    %6389 = vmatpush.bf16.msra.mxu0 %v5611
    %6390 = vmatpush.bf16.msra.mxu0 %v5604
    %6391 = vmatpush.bf16.msra.mxu0 %v5597
    %6392 = vmatpush.bf16.msra.mxu0 %v5590
    %6393 = vmatpush.bf16.msra.mxu0 %v5583
    %6394 = vmatpush.bf16.msra.mxu0 %v5576
    %6395 = vmatpush.bf16.msra.mxu0 %v5569
    %6396 = vmatpush.bf16.msra.mxu0 %v5562
    %6397 = vmatmul.bf16.gmra.mxu0 %v3909
    %v6398 = vpop.f32.mrf.mxu0
    %v6399 = vadd.f32 %v6386, %v6398
    %v6400 = vpop.f32.mrf.mxu0
    %6401 = vdwg.mxu0
    %6402 = vmatpush.bf16.msra.mxu0 %v5667
    %6403 = vmatpush.bf16.msra.mxu0 %v5660
    %6404 = vmatpush.bf16.msra.mxu0 %v5653
    %6405 = vmatpush.bf16.msra.mxu0 %v5646
    %6406 = vmatpush.bf16.msra.mxu0 %v5639
    %6407 = vmatpush.bf16.msra.mxu0 %v5632
    %6408 = vmatpush.bf16.msra.mxu0 %v5625
    %6409 = vmatpush.bf16.msra.mxu0 %v5618
    %6410 = vmatmul.bf16.gmra.mxu0 %v3910
    %v6411 = vpop.f32.mrf.mxu0
    %v6412 = vadd.f32 %v6399, %v6411
    %v6413 = vpop.f32.mrf.mxu0
    %6414 = vdwg.mxu0
    %6415 = vmatpush.bf16.msra.mxu0 %v5723
    %6416 = vmatpush.bf16.msra.mxu0 %v5716
    %6417 = vmatpush.bf16.msra.mxu0 %v5709
    %6418 = vmatpush.bf16.msra.mxu0 %v5702
    %6419 = vmatpush.bf16.msra.mxu0 %v5695
    %6420 = vmatpush.bf16.msra.mxu0 %v5688
    %6421 = vmatpush.bf16.msra.mxu0 %v5681
    %6422 = vmatpush.bf16.msra.mxu0 %v5674
    %6423 = vmatmul.bf16.gmra.mxu0 %v3911
    %v6424 = vpop.f32.mrf.mxu0
    %v6425 = vadd.f32 %v6412, %v6424
    %v6426 = vpop.f32.mrf.mxu0
    %6427 = vdwg.mxu0
    %6428 = vmatpush.bf16.msra.mxu0 %v5779
    %6429 = vmatpush.bf16.msra.mxu0 %v5772
    %6430 = vmatpush.bf16.msra.mxu0 %v5765
    %6431 = vmatpush.bf16.msra.mxu0 %v5758
    %6432 = vmatpush.bf16.msra.mxu0 %v5751
    %6433 = vmatpush.bf16.msra.mxu0 %v5744
    %6434 = vmatpush.bf16.msra.mxu0 %v5737
    %6435 = vmatpush.bf16.msra.mxu0 %v5730
    %6436 = vmatmul.bf16.gmra.mxu0 %v3912
    %v6437 = vpop.f32.mrf.mxu0
    %v6438 = vadd.f32 %v6425, %v6437
    %v6439 = vpop.f32.mrf.mxu0
    %6440 = vdwg.mxu0
    %6441 = vmatpush.bf16.msra.mxu0 %v5388
    %6442 = vmatpush.bf16.msra.mxu0 %v5381
    %6443 = vmatpush.bf16.msra.mxu0 %v5374
    %6444 = vmatpush.bf16.msra.mxu0 %v5367
    %6445 = vmatpush.bf16.msra.mxu0 %v5360
    %6446 = vmatpush.bf16.msra.mxu0 %v5353
    %6447 = vmatpush.bf16.msra.mxu0 %v5346
    %6448 = vmatpush.bf16.msra.mxu0 %v5339
    %6449 = vmatmul.bf16.gmra.mxu0 %v3905
    %v6450 = vpop.f32.mrf.mxu0
    %v6451 = vadd.f32 %v3917, %v6450
    %v6452 = vpop.f32.mrf.mxu0
    %6453 = vdwg.mxu0
    %6454 = vmatpush.bf16.msra.mxu0 %v5444
    %6455 = vmatpush.bf16.msra.mxu0 %v5437
    %6456 = vmatpush.bf16.msra.mxu0 %v5430
    %6457 = vmatpush.bf16.msra.mxu0 %v5423
    %6458 = vmatpush.bf16.msra.mxu0 %v5416
    %6459 = vmatpush.bf16.msra.mxu0 %v5409
    %6460 = vmatpush.bf16.msra.mxu0 %v5402
    %6461 = vmatpush.bf16.msra.mxu0 %v5395
    %6462 = vmatmul.bf16.gmra.mxu0 %v3906
    %v6463 = vpop.f32.mrf.mxu0
    %v6464 = vadd.f32 %v6451, %v6463
    %v6465 = vpop.f32.mrf.mxu0
    %6466 = vdwg.mxu0
    %6467 = vmatpush.bf16.msra.mxu0 %v5500
    %6468 = vmatpush.bf16.msra.mxu0 %v5493
    %6469 = vmatpush.bf16.msra.mxu0 %v5486
    %6470 = vmatpush.bf16.msra.mxu0 %v5479
    %6471 = vmatpush.bf16.msra.mxu0 %v5472
    %6472 = vmatpush.bf16.msra.mxu0 %v5465
    %6473 = vmatpush.bf16.msra.mxu0 %v5458
    %6474 = vmatpush.bf16.msra.mxu0 %v5451
    %6475 = vmatmul.bf16.gmra.mxu0 %v3907
    %v6476 = vpop.f32.mrf.mxu0
    %v6477 = vadd.f32 %v6464, %v6476
    %v6478 = vpop.f32.mrf.mxu0
    %6479 = vdwg.mxu0
    %6480 = vmatpush.bf16.msra.mxu0 %v5556
    %6481 = vmatpush.bf16.msra.mxu0 %v5549
    %6482 = vmatpush.bf16.msra.mxu0 %v5542
    %6483 = vmatpush.bf16.msra.mxu0 %v5535
    %6484 = vmatpush.bf16.msra.mxu0 %v5528
    %6485 = vmatpush.bf16.msra.mxu0 %v5521
    %6486 = vmatpush.bf16.msra.mxu0 %v5514
    %6487 = vmatpush.bf16.msra.mxu0 %v5507
    %6488 = vmatmul.bf16.gmra.mxu0 %v3908
    %v6489 = vpop.f32.mrf.mxu0
    %v6490 = vadd.f32 %v6477, %v6489
    %v6491 = vpop.f32.mrf.mxu0
    %6492 = vdwg.mxu0
    %6493 = vmatpush.bf16.msra.mxu0 %v5612
    %6494 = vmatpush.bf16.msra.mxu0 %v5605
    %6495 = vmatpush.bf16.msra.mxu0 %v5598
    %6496 = vmatpush.bf16.msra.mxu0 %v5591
    %6497 = vmatpush.bf16.msra.mxu0 %v5584
    %6498 = vmatpush.bf16.msra.mxu0 %v5577
    %6499 = vmatpush.bf16.msra.mxu0 %v5570
    %6500 = vmatpush.bf16.msra.mxu0 %v5563
    %6501 = vmatmul.bf16.gmra.mxu0 %v3909
    %v6502 = vpop.f32.mrf.mxu0
    %v6503 = vadd.f32 %v6490, %v6502
    %v6504 = vpop.f32.mrf.mxu0
    %6505 = vdwg.mxu0
    %6506 = vmatpush.bf16.msra.mxu0 %v5668
    %6507 = vmatpush.bf16.msra.mxu0 %v5661
    %6508 = vmatpush.bf16.msra.mxu0 %v5654
    %6509 = vmatpush.bf16.msra.mxu0 %v5647
    %6510 = vmatpush.bf16.msra.mxu0 %v5640
    %6511 = vmatpush.bf16.msra.mxu0 %v5633
    %6512 = vmatpush.bf16.msra.mxu0 %v5626
    %6513 = vmatpush.bf16.msra.mxu0 %v5619
    %6514 = vmatmul.bf16.gmra.mxu0 %v3910
    %v6515 = vpop.f32.mrf.mxu0
    %v6516 = vadd.f32 %v6503, %v6515
    %v6517 = vpop.f32.mrf.mxu0
    %6518 = vdwg.mxu0
    %6519 = vmatpush.bf16.msra.mxu0 %v5724
    %6520 = vmatpush.bf16.msra.mxu0 %v5717
    %6521 = vmatpush.bf16.msra.mxu0 %v5710
    %6522 = vmatpush.bf16.msra.mxu0 %v5703
    %6523 = vmatpush.bf16.msra.mxu0 %v5696
    %6524 = vmatpush.bf16.msra.mxu0 %v5689
    %6525 = vmatpush.bf16.msra.mxu0 %v5682
    %6526 = vmatpush.bf16.msra.mxu0 %v5675
    %6527 = vmatmul.bf16.gmra.mxu0 %v3911
    %v6528 = vpop.f32.mrf.mxu0
    %v6529 = vadd.f32 %v6516, %v6528
    %v6530 = vpop.f32.mrf.mxu0
    %6531 = vdwg.mxu0
    %6532 = vmatpush.bf16.msra.mxu0 %v5780
    %6533 = vmatpush.bf16.msra.mxu0 %v5773
    %6534 = vmatpush.bf16.msra.mxu0 %v5766
    %6535 = vmatpush.bf16.msra.mxu0 %v5759
    %6536 = vmatpush.bf16.msra.mxu0 %v5752
    %6537 = vmatpush.bf16.msra.mxu0 %v5745
    %6538 = vmatpush.bf16.msra.mxu0 %v5738
    %6539 = vmatpush.bf16.msra.mxu0 %v5731
    %6540 = vmatmul.bf16.gmra.mxu0 %v3912
    %v6541 = vpop.f32.mrf.mxu0
    %v6542 = vadd.f32 %v6529, %v6541
    %v6543 = vpop.f32.mrf.mxu0
    %6544 = vdwg.mxu0
    %6545 = vmatpush.bf16.msra.mxu0 %v5389
    %6546 = vmatpush.bf16.msra.mxu0 %v5382
    %6547 = vmatpush.bf16.msra.mxu0 %v5375
    %6548 = vmatpush.bf16.msra.mxu0 %v5368
    %6549 = vmatpush.bf16.msra.mxu0 %v5361
    %6550 = vmatpush.bf16.msra.mxu0 %v5354
    %6551 = vmatpush.bf16.msra.mxu0 %v5347
    %6552 = vmatpush.bf16.msra.mxu0 %v5340
    %6553 = vmatmul.bf16.gmra.mxu0 %v3905
    %v6554 = vpop.f32.mrf.mxu0
    %v6555 = vadd.f32 %v3918, %v6554
    %v6556 = vpop.f32.mrf.mxu0
    %6557 = vdwg.mxu0
    %6558 = vmatpush.bf16.msra.mxu0 %v5445
    %6559 = vmatpush.bf16.msra.mxu0 %v5438
    %6560 = vmatpush.bf16.msra.mxu0 %v5431
    %6561 = vmatpush.bf16.msra.mxu0 %v5424
    %6562 = vmatpush.bf16.msra.mxu0 %v5417
    %6563 = vmatpush.bf16.msra.mxu0 %v5410
    %6564 = vmatpush.bf16.msra.mxu0 %v5403
    %6565 = vmatpush.bf16.msra.mxu0 %v5396
    %6566 = vmatmul.bf16.gmra.mxu0 %v3906
    %v6567 = vpop.f32.mrf.mxu0
    %v6568 = vadd.f32 %v6555, %v6567
    %v6569 = vpop.f32.mrf.mxu0
    %6570 = vdwg.mxu0
    %6571 = vmatpush.bf16.msra.mxu0 %v5501
    %6572 = vmatpush.bf16.msra.mxu0 %v5494
    %6573 = vmatpush.bf16.msra.mxu0 %v5487
    %6574 = vmatpush.bf16.msra.mxu0 %v5480
    %6575 = vmatpush.bf16.msra.mxu0 %v5473
    %6576 = vmatpush.bf16.msra.mxu0 %v5466
    %6577 = vmatpush.bf16.msra.mxu0 %v5459
    %6578 = vmatpush.bf16.msra.mxu0 %v5452
    %6579 = vmatmul.bf16.gmra.mxu0 %v3907
    %v6580 = vpop.f32.mrf.mxu0
    %v6581 = vadd.f32 %v6568, %v6580
    %v6582 = vpop.f32.mrf.mxu0
    %6583 = vdwg.mxu0
    %6584 = vmatpush.bf16.msra.mxu0 %v5557
    %6585 = vmatpush.bf16.msra.mxu0 %v5550
    %6586 = vmatpush.bf16.msra.mxu0 %v5543
    %6587 = vmatpush.bf16.msra.mxu0 %v5536
    %6588 = vmatpush.bf16.msra.mxu0 %v5529
    %6589 = vmatpush.bf16.msra.mxu0 %v5522
    %6590 = vmatpush.bf16.msra.mxu0 %v5515
    %6591 = vmatpush.bf16.msra.mxu0 %v5508
    %6592 = vmatmul.bf16.gmra.mxu0 %v3908
    %v6593 = vpop.f32.mrf.mxu0
    %v6594 = vadd.f32 %v6581, %v6593
    %v6595 = vpop.f32.mrf.mxu0
    %6596 = vdwg.mxu0
    %6597 = vmatpush.bf16.msra.mxu0 %v5613
    %6598 = vmatpush.bf16.msra.mxu0 %v5606
    %6599 = vmatpush.bf16.msra.mxu0 %v5599
    %6600 = vmatpush.bf16.msra.mxu0 %v5592
    %6601 = vmatpush.bf16.msra.mxu0 %v5585
    %6602 = vmatpush.bf16.msra.mxu0 %v5578
    %6603 = vmatpush.bf16.msra.mxu0 %v5571
    %6604 = vmatpush.bf16.msra.mxu0 %v5564
    %6605 = vmatmul.bf16.gmra.mxu0 %v3909
    %v6606 = vpop.f32.mrf.mxu0
    %v6607 = vadd.f32 %v6594, %v6606
    %v6608 = vpop.f32.mrf.mxu0
    %6609 = vdwg.mxu0
    %6610 = vmatpush.bf16.msra.mxu0 %v5669
    %6611 = vmatpush.bf16.msra.mxu0 %v5662
    %6612 = vmatpush.bf16.msra.mxu0 %v5655
    %6613 = vmatpush.bf16.msra.mxu0 %v5648
    %6614 = vmatpush.bf16.msra.mxu0 %v5641
    %6615 = vmatpush.bf16.msra.mxu0 %v5634
    %6616 = vmatpush.bf16.msra.mxu0 %v5627
    %6617 = vmatpush.bf16.msra.mxu0 %v5620
    %6618 = vmatmul.bf16.gmra.mxu0 %v3910
    %v6619 = vpop.f32.mrf.mxu0
    %v6620 = vadd.f32 %v6607, %v6619
    %v6621 = vpop.f32.mrf.mxu0
    %6622 = vdwg.mxu0
    %6623 = vmatpush.bf16.msra.mxu0 %v5725
    %6624 = vmatpush.bf16.msra.mxu0 %v5718
    %6625 = vmatpush.bf16.msra.mxu0 %v5711
    %6626 = vmatpush.bf16.msra.mxu0 %v5704
    %6627 = vmatpush.bf16.msra.mxu0 %v5697
    %6628 = vmatpush.bf16.msra.mxu0 %v5690
    %6629 = vmatpush.bf16.msra.mxu0 %v5683
    %6630 = vmatpush.bf16.msra.mxu0 %v5676
    %6631 = vmatmul.bf16.gmra.mxu0 %v3911
    %v6632 = vpop.f32.mrf.mxu0
    %v6633 = vadd.f32 %v6620, %v6632
    %v6634 = vpop.f32.mrf.mxu0
    %6635 = vdwg.mxu0
    %6636 = vmatpush.bf16.msra.mxu0 %v5781
    %6637 = vmatpush.bf16.msra.mxu0 %v5774
    %6638 = vmatpush.bf16.msra.mxu0 %v5767
    %6639 = vmatpush.bf16.msra.mxu0 %v5760
    %6640 = vmatpush.bf16.msra.mxu0 %v5753
    %6641 = vmatpush.bf16.msra.mxu0 %v5746
    %6642 = vmatpush.bf16.msra.mxu0 %v5739
    %6643 = vmatpush.bf16.msra.mxu0 %v5732
    %6644 = vmatmul.bf16.gmra.mxu0 %v3912
    %v6645 = vpop.f32.mrf.mxu0
    %v6646 = vadd.f32 %v6633, %v6645
    %v6647 = vpop.f32.mrf.mxu0
    %6648 = vdwg.mxu0
    %6649 = vmatpush.bf16.msra.mxu0 %v5390
    %6650 = vmatpush.bf16.msra.mxu0 %v5383
    %6651 = vmatpush.bf16.msra.mxu0 %v5376
    %6652 = vmatpush.bf16.msra.mxu0 %v5369
    %6653 = vmatpush.bf16.msra.mxu0 %v5362
    %6654 = vmatpush.bf16.msra.mxu0 %v5355
    %6655 = vmatpush.bf16.msra.mxu0 %v5348
    %6656 = vmatpush.bf16.msra.mxu0 %v5341
    %6657 = vmatmul.bf16.gmra.mxu0 %v3905
    %v6658 = vpop.f32.mrf.mxu0
    %v6659 = vadd.f32 %v3919, %v6658
    %v6660 = vpop.f32.mrf.mxu0
    %6661 = vdwg.mxu0
    %6662 = vmatpush.bf16.msra.mxu0 %v5446
    %6663 = vmatpush.bf16.msra.mxu0 %v5439
    %6664 = vmatpush.bf16.msra.mxu0 %v5432
    %6665 = vmatpush.bf16.msra.mxu0 %v5425
    %6666 = vmatpush.bf16.msra.mxu0 %v5418
    %6667 = vmatpush.bf16.msra.mxu0 %v5411
    %6668 = vmatpush.bf16.msra.mxu0 %v5404
    %6669 = vmatpush.bf16.msra.mxu0 %v5397
    %6670 = vmatmul.bf16.gmra.mxu0 %v3906
    %v6671 = vpop.f32.mrf.mxu0
    %v6672 = vadd.f32 %v6659, %v6671
    %v6673 = vpop.f32.mrf.mxu0
    %6674 = vdwg.mxu0
    %6675 = vmatpush.bf16.msra.mxu0 %v5502
    %6676 = vmatpush.bf16.msra.mxu0 %v5495
    %6677 = vmatpush.bf16.msra.mxu0 %v5488
    %6678 = vmatpush.bf16.msra.mxu0 %v5481
    %6679 = vmatpush.bf16.msra.mxu0 %v5474
    %6680 = vmatpush.bf16.msra.mxu0 %v5467
    %6681 = vmatpush.bf16.msra.mxu0 %v5460
    %6682 = vmatpush.bf16.msra.mxu0 %v5453
    %6683 = vmatmul.bf16.gmra.mxu0 %v3907
    %v6684 = vpop.f32.mrf.mxu0
    %v6685 = vadd.f32 %v6672, %v6684
    %v6686 = vpop.f32.mrf.mxu0
    %6687 = vdwg.mxu0
    %6688 = vmatpush.bf16.msra.mxu0 %v5558
    %6689 = vmatpush.bf16.msra.mxu0 %v5551
    %6690 = vmatpush.bf16.msra.mxu0 %v5544
    %6691 = vmatpush.bf16.msra.mxu0 %v5537
    %6692 = vmatpush.bf16.msra.mxu0 %v5530
    %6693 = vmatpush.bf16.msra.mxu0 %v5523
    %6694 = vmatpush.bf16.msra.mxu0 %v5516
    %6695 = vmatpush.bf16.msra.mxu0 %v5509
    %6696 = vmatmul.bf16.gmra.mxu0 %v3908
    %v6697 = vpop.f32.mrf.mxu0
    %v6698 = vadd.f32 %v6685, %v6697
    %v6699 = vpop.f32.mrf.mxu0
    %6700 = vdwg.mxu0
    %6701 = vmatpush.bf16.msra.mxu0 %v5614
    %6702 = vmatpush.bf16.msra.mxu0 %v5607
    %6703 = vmatpush.bf16.msra.mxu0 %v5600
    %6704 = vmatpush.bf16.msra.mxu0 %v5593
    %6705 = vmatpush.bf16.msra.mxu0 %v5586
    %6706 = vmatpush.bf16.msra.mxu0 %v5579
    %6707 = vmatpush.bf16.msra.mxu0 %v5572
    %6708 = vmatpush.bf16.msra.mxu0 %v5565
    %6709 = vmatmul.bf16.gmra.mxu0 %v3909
    %v6710 = vpop.f32.mrf.mxu0
    %v6711 = vadd.f32 %v6698, %v6710
    %v6712 = vpop.f32.mrf.mxu0
    %6713 = vdwg.mxu0
    %6714 = vmatpush.bf16.msra.mxu0 %v5670
    %6715 = vmatpush.bf16.msra.mxu0 %v5663
    %6716 = vmatpush.bf16.msra.mxu0 %v5656
    %6717 = vmatpush.bf16.msra.mxu0 %v5649
    %6718 = vmatpush.bf16.msra.mxu0 %v5642
    %6719 = vmatpush.bf16.msra.mxu0 %v5635
    %6720 = vmatpush.bf16.msra.mxu0 %v5628
    %6721 = vmatpush.bf16.msra.mxu0 %v5621
    %6722 = vmatmul.bf16.gmra.mxu0 %v3910
    %v6723 = vpop.f32.mrf.mxu0
    %v6724 = vadd.f32 %v6711, %v6723
    %v6725 = vpop.f32.mrf.mxu0
    %6726 = vdwg.mxu0
    %6727 = vmatpush.bf16.msra.mxu0 %v5726
    %6728 = vmatpush.bf16.msra.mxu0 %v5719
    %6729 = vmatpush.bf16.msra.mxu0 %v5712
    %6730 = vmatpush.bf16.msra.mxu0 %v5705
    %6731 = vmatpush.bf16.msra.mxu0 %v5698
    %6732 = vmatpush.bf16.msra.mxu0 %v5691
    %6733 = vmatpush.bf16.msra.mxu0 %v5684
    %6734 = vmatpush.bf16.msra.mxu0 %v5677
    %6735 = vmatmul.bf16.gmra.mxu0 %v3911
    %v6736 = vpop.f32.mrf.mxu0
    %v6737 = vadd.f32 %v6724, %v6736
    %v6738 = vpop.f32.mrf.mxu0
    %6739 = vdwg.mxu0
    %6740 = vmatpush.bf16.msra.mxu0 %v5782
    %6741 = vmatpush.bf16.msra.mxu0 %v5775
    %6742 = vmatpush.bf16.msra.mxu0 %v5768
    %6743 = vmatpush.bf16.msra.mxu0 %v5761
    %6744 = vmatpush.bf16.msra.mxu0 %v5754
    %6745 = vmatpush.bf16.msra.mxu0 %v5747
    %6746 = vmatpush.bf16.msra.mxu0 %v5740
    %6747 = vmatpush.bf16.msra.mxu0 %v5733
    %6748 = vmatmul.bf16.gmra.mxu0 %v3912
    %v6749 = vpop.f32.mrf.mxu0
    %v6750 = vadd.f32 %v6737, %v6749
    %v6751 = vpop.f32.mrf.mxu0
    %6752 = vdwg.mxu0
    %6753 = vmatpush.bf16.msra.mxu0 %v5391
    %6754 = vmatpush.bf16.msra.mxu0 %v5384
    %6755 = vmatpush.bf16.msra.mxu0 %v5377
    %6756 = vmatpush.bf16.msra.mxu0 %v5370
    %6757 = vmatpush.bf16.msra.mxu0 %v5363
    %6758 = vmatpush.bf16.msra.mxu0 %v5356
    %6759 = vmatpush.bf16.msra.mxu0 %v5349
    %6760 = vmatpush.bf16.msra.mxu0 %v5342
    %6761 = vmatmul.bf16.gmra.mxu0 %v3905
    %v6762 = vpop.f32.mrf.mxu0
    %v6763 = vadd.f32 %v3920, %v6762
    %v6764 = vpop.f32.mrf.mxu0
    %6765 = vdwg.mxu0
    %6766 = vmatpush.bf16.msra.mxu0 %v5447
    %6767 = vmatpush.bf16.msra.mxu0 %v5440
    %6768 = vmatpush.bf16.msra.mxu0 %v5433
    %6769 = vmatpush.bf16.msra.mxu0 %v5426
    %6770 = vmatpush.bf16.msra.mxu0 %v5419
    %6771 = vmatpush.bf16.msra.mxu0 %v5412
    %6772 = vmatpush.bf16.msra.mxu0 %v5405
    %6773 = vmatpush.bf16.msra.mxu0 %v5398
    %6774 = vmatmul.bf16.gmra.mxu0 %v3906
    %v6775 = vpop.f32.mrf.mxu0
    %v6776 = vadd.f32 %v6763, %v6775
    %v6777 = vpop.f32.mrf.mxu0
    %6778 = vdwg.mxu0
    %6779 = vmatpush.bf16.msra.mxu0 %v5503
    %6780 = vmatpush.bf16.msra.mxu0 %v5496
    %6781 = vmatpush.bf16.msra.mxu0 %v5489
    %6782 = vmatpush.bf16.msra.mxu0 %v5482
    %6783 = vmatpush.bf16.msra.mxu0 %v5475
    %6784 = vmatpush.bf16.msra.mxu0 %v5468
    %6785 = vmatpush.bf16.msra.mxu0 %v5461
    %6786 = vmatpush.bf16.msra.mxu0 %v5454
    %6787 = vmatmul.bf16.gmra.mxu0 %v3907
    %v6788 = vpop.f32.mrf.mxu0
    %v6789 = vadd.f32 %v6776, %v6788
    %v6790 = vpop.f32.mrf.mxu0
    %6791 = vdwg.mxu0
    %6792 = vmatpush.bf16.msra.mxu0 %v5559
    %6793 = vmatpush.bf16.msra.mxu0 %v5552
    %6794 = vmatpush.bf16.msra.mxu0 %v5545
    %6795 = vmatpush.bf16.msra.mxu0 %v5538
    %6796 = vmatpush.bf16.msra.mxu0 %v5531
    %6797 = vmatpush.bf16.msra.mxu0 %v5524
    %6798 = vmatpush.bf16.msra.mxu0 %v5517
    %6799 = vmatpush.bf16.msra.mxu0 %v5510
    %6800 = vmatmul.bf16.gmra.mxu0 %v3908
    %v6801 = vpop.f32.mrf.mxu0
    %v6802 = vadd.f32 %v6789, %v6801
    %v6803 = vpop.f32.mrf.mxu0
    %6804 = vdwg.mxu0
    %6805 = vmatpush.bf16.msra.mxu0 %v5615
    %6806 = vmatpush.bf16.msra.mxu0 %v5608
    %6807 = vmatpush.bf16.msra.mxu0 %v5601
    %6808 = vmatpush.bf16.msra.mxu0 %v5594
    %6809 = vmatpush.bf16.msra.mxu0 %v5587
    %6810 = vmatpush.bf16.msra.mxu0 %v5580
    %6811 = vmatpush.bf16.msra.mxu0 %v5573
    %6812 = vmatpush.bf16.msra.mxu0 %v5566
    %6813 = vmatmul.bf16.gmra.mxu0 %v3909
    %v6814 = vpop.f32.mrf.mxu0
    %v6815 = vadd.f32 %v6802, %v6814
    %v6816 = vpop.f32.mrf.mxu0
    %6817 = vdwg.mxu0
    %6818 = vmatpush.bf16.msra.mxu0 %v5671
    %6819 = vmatpush.bf16.msra.mxu0 %v5664
    %6820 = vmatpush.bf16.msra.mxu0 %v5657
    %6821 = vmatpush.bf16.msra.mxu0 %v5650
    %6822 = vmatpush.bf16.msra.mxu0 %v5643
    %6823 = vmatpush.bf16.msra.mxu0 %v5636
    %6824 = vmatpush.bf16.msra.mxu0 %v5629
    %6825 = vmatpush.bf16.msra.mxu0 %v5622
    %6826 = vmatmul.bf16.gmra.mxu0 %v3910
    %v6827 = vpop.f32.mrf.mxu0
    %v6828 = vadd.f32 %v6815, %v6827
    %v6829 = vpop.f32.mrf.mxu0
    %6830 = vdwg.mxu0
    %6831 = vmatpush.bf16.msra.mxu0 %v5727
    %6832 = vmatpush.bf16.msra.mxu0 %v5720
    %6833 = vmatpush.bf16.msra.mxu0 %v5713
    %6834 = vmatpush.bf16.msra.mxu0 %v5706
    %6835 = vmatpush.bf16.msra.mxu0 %v5699
    %6836 = vmatpush.bf16.msra.mxu0 %v5692
    %6837 = vmatpush.bf16.msra.mxu0 %v5685
    %6838 = vmatpush.bf16.msra.mxu0 %v5678
    %6839 = vmatmul.bf16.gmra.mxu0 %v3911
    %v6840 = vpop.f32.mrf.mxu0
    %v6841 = vadd.f32 %v6828, %v6840
    %v6842 = vpop.f32.mrf.mxu0
    %6843 = vdwg.mxu0
    %6844 = vmatpush.bf16.msra.mxu0 %v5783
    %6845 = vmatpush.bf16.msra.mxu0 %v5776
    %6846 = vmatpush.bf16.msra.mxu0 %v5769
    %6847 = vmatpush.bf16.msra.mxu0 %v5762
    %6848 = vmatpush.bf16.msra.mxu0 %v5755
    %6849 = vmatpush.bf16.msra.mxu0 %v5748
    %6850 = vmatpush.bf16.msra.mxu0 %v5741
    %6851 = vmatpush.bf16.msra.mxu0 %v5734
    %6852 = vmatmul.bf16.gmra.mxu0 %v3912
    %v6853 = vpop.f32.mrf.mxu0
    %v6854 = vadd.f32 %v6841, %v6853
    %v6855 = vpop.f32.mrf.mxu0
    %6856 = vdwg.mxu0
    %6857 = vmatpush.bf16.msra.mxu0 %v5392
    %6858 = vmatpush.bf16.msra.mxu0 %v5385
    %6859 = vmatpush.bf16.msra.mxu0 %v5378
    %6860 = vmatpush.bf16.msra.mxu0 %v5371
    %6861 = vmatpush.bf16.msra.mxu0 %v5364
    %6862 = vmatpush.bf16.msra.mxu0 %v5357
    %6863 = vmatpush.bf16.msra.mxu0 %v5350
    %6864 = vmatpush.bf16.msra.mxu0 %v5343
    %6865 = vmatmul.bf16.gmra.mxu0 %v3905
    %v6866 = vpop.f32.mrf.mxu0
    %v6867 = vadd.f32 %v3921, %v6866
    %v6868 = vpop.f32.mrf.mxu0
    %6869 = vdwg.mxu0
    %6870 = vmatpush.bf16.msra.mxu0 %v5448
    %6871 = vmatpush.bf16.msra.mxu0 %v5441
    %6872 = vmatpush.bf16.msra.mxu0 %v5434
    %6873 = vmatpush.bf16.msra.mxu0 %v5427
    %6874 = vmatpush.bf16.msra.mxu0 %v5420
    %6875 = vmatpush.bf16.msra.mxu0 %v5413
    %6876 = vmatpush.bf16.msra.mxu0 %v5406
    %6877 = vmatpush.bf16.msra.mxu0 %v5399
    %6878 = vmatmul.bf16.gmra.mxu0 %v3906
    %v6879 = vpop.f32.mrf.mxu0
    %v6880 = vadd.f32 %v6867, %v6879
    %v6881 = vpop.f32.mrf.mxu0
    %6882 = vdwg.mxu0
    %6883 = vmatpush.bf16.msra.mxu0 %v5504
    %6884 = vmatpush.bf16.msra.mxu0 %v5497
    %6885 = vmatpush.bf16.msra.mxu0 %v5490
    %6886 = vmatpush.bf16.msra.mxu0 %v5483
    %6887 = vmatpush.bf16.msra.mxu0 %v5476
    %6888 = vmatpush.bf16.msra.mxu0 %v5469
    %6889 = vmatpush.bf16.msra.mxu0 %v5462
    %6890 = vmatpush.bf16.msra.mxu0 %v5455
    %6891 = vmatmul.bf16.gmra.mxu0 %v3907
    %v6892 = vpop.f32.mrf.mxu0
    %v6893 = vadd.f32 %v6880, %v6892
    %v6894 = vpop.f32.mrf.mxu0
    %6895 = vdwg.mxu0
    %6896 = vmatpush.bf16.msra.mxu0 %v5560
    %6897 = vmatpush.bf16.msra.mxu0 %v5553
    %6898 = vmatpush.bf16.msra.mxu0 %v5546
    %6899 = vmatpush.bf16.msra.mxu0 %v5539
    %6900 = vmatpush.bf16.msra.mxu0 %v5532
    %6901 = vmatpush.bf16.msra.mxu0 %v5525
    %6902 = vmatpush.bf16.msra.mxu0 %v5518
    %6903 = vmatpush.bf16.msra.mxu0 %v5511
    %6904 = vmatmul.bf16.gmra.mxu0 %v3908
    %v6905 = vpop.f32.mrf.mxu0
    %v6906 = vadd.f32 %v6893, %v6905
    %v6907 = vpop.f32.mrf.mxu0
    %6908 = vdwg.mxu0
    %6909 = vmatpush.bf16.msra.mxu0 %v5616
    %6910 = vmatpush.bf16.msra.mxu0 %v5609
    %6911 = vmatpush.bf16.msra.mxu0 %v5602
    %6912 = vmatpush.bf16.msra.mxu0 %v5595
    %6913 = vmatpush.bf16.msra.mxu0 %v5588
    %6914 = vmatpush.bf16.msra.mxu0 %v5581
    %6915 = vmatpush.bf16.msra.mxu0 %v5574
    %6916 = vmatpush.bf16.msra.mxu0 %v5567
    %6917 = vmatmul.bf16.gmra.mxu0 %v3909
    %v6918 = vpop.f32.mrf.mxu0
    %v6919 = vadd.f32 %v6906, %v6918
    %v6920 = vpop.f32.mrf.mxu0
    %6921 = vdwg.mxu0
    %6922 = vmatpush.bf16.msra.mxu0 %v5672
    %6923 = vmatpush.bf16.msra.mxu0 %v5665
    %6924 = vmatpush.bf16.msra.mxu0 %v5658
    %6925 = vmatpush.bf16.msra.mxu0 %v5651
    %6926 = vmatpush.bf16.msra.mxu0 %v5644
    %6927 = vmatpush.bf16.msra.mxu0 %v5637
    %6928 = vmatpush.bf16.msra.mxu0 %v5630
    %6929 = vmatpush.bf16.msra.mxu0 %v5623
    %6930 = vmatmul.bf16.gmra.mxu0 %v3910
    %v6931 = vpop.f32.mrf.mxu0
    %v6932 = vadd.f32 %v6919, %v6931
    %v6933 = vpop.f32.mrf.mxu0
    %6934 = vdwg.mxu0
    %6935 = vmatpush.bf16.msra.mxu0 %v5728
    %6936 = vmatpush.bf16.msra.mxu0 %v5721
    %6937 = vmatpush.bf16.msra.mxu0 %v5714
    %6938 = vmatpush.bf16.msra.mxu0 %v5707
    %6939 = vmatpush.bf16.msra.mxu0 %v5700
    %6940 = vmatpush.bf16.msra.mxu0 %v5693
    %6941 = vmatpush.bf16.msra.mxu0 %v5686
    %6942 = vmatpush.bf16.msra.mxu0 %v5679
    %6943 = vmatmul.bf16.gmra.mxu0 %v3911
    %v6944 = vpop.f32.mrf.mxu0
    %v6945 = vadd.f32 %v6932, %v6944
    %v6946 = vpop.f32.mrf.mxu0
    %6947 = vdwg.mxu0
    %6948 = vmatpush.bf16.msra.mxu0 %v5784
    %6949 = vmatpush.bf16.msra.mxu0 %v5777
    %6950 = vmatpush.bf16.msra.mxu0 %v5770
    %6951 = vmatpush.bf16.msra.mxu0 %v5763
    %6952 = vmatpush.bf16.msra.mxu0 %v5756
    %6953 = vmatpush.bf16.msra.mxu0 %v5749
    %6954 = vmatpush.bf16.msra.mxu0 %v5742
    %6955 = vmatpush.bf16.msra.mxu0 %v5735
    %6956 = vmatmul.bf16.gmra.mxu0 %v3912
    %v6957 = vpop.f32.mrf.mxu0
    %v6958 = vadd.f32 %v6945, %v6957
    %v6959 = vpop.f32.mrf.mxu0
    %6960 = vdwg.mxu0
    %v6961 = vtanh.pop %v6334
    %v6962 = vtanh.pop %v6438
    %v6963 = vtanh.pop %v6542
    %v6964 = vtanh.pop %v6646
    %v6965 = vtanh.pop %v6750
    %v6966 = vtanh.pop %v6854
    %v6967 = vtanh.pop %v6958
    %6968 = vst [vmem:[%s7] sm:$0xff] %v6961
    %6969 = vst [vmem:[%s7 + $0x8] sm:$0xff] %v6962
    %6970 = vst [vmem:[%s7 + $0x10] sm:$0xff] %v6963
    %6971 = vst [vmem:[%s7 + $0x18] sm:$0xff] %v6964
    %6972 = vst [vmem:[%s7 + $0x20] sm:$0xff] %v6965
    %6973 = vst [vmem:[%s7 + $0x28] sm:$0xff] %v6966
    %6974 = vst [vmem:[%s7 + $0x30] sm:$0xff] %v6967
    // Predicated region
    $region46: #{generator_forward.1} parent=1 // pred_check
      _
    $region47: #{generator_forward.1} parent=1 // pred_check_branch
      %6976 = sbr.rel (0) target = $region49
    $region48: #{generator_forward.1} parent=1 // pred_region
      _
    $region49: #{generator_forward.1} parent=1 // pred_fallthru
      _
    // Predicated region
    $region50: #{generator_forward.1} parent=1 // pred_check
      _
    $region51: #{generator_forward.1} parent=1 // pred_check_branch
      %6978 = sbr.rel (0) target = $region53
    $region52: #{generator_forward.1} parent=1 // pred_region
      _
    $region53: #{generator_forward.1} parent=1 // pred_fallthru
      _
    %6979 = vsyncpa [#allocation6], 1
    %6980 = vsyncpa [#allocation8], 1
    %6981 = vsyncpa [#allocation11], 1
  %6982 = vsyncmov [#allocation4]
  %s6983 = vpop.sfrf %6982
  %p6984 = scmp.eq.s32.totalorder %s6983, 0
  %p6985 = pneg %p6984
  %6987 = shalt.err (%p6985)
  %s6988 = scalar_lea.sflag [#allocation4], 1
  %6989 = vsyncmov %s6988
  %s6990 = vpop.sfrf %6989
  %p6991 = scmp.eq.s32.totalorder %s6990, 0
  %p6992 = pneg %p6991
  %6994 = shalt.err (%p6992)

</llo_original>
